<compile_context>
chip_gen: v6e
topology: v6e:2x2x1
jax: 0.10.0
libtpu: 0.0.40
codegen_flags: <defaults>
</compile_context>

<pallas_src>
import functools

import jax
import jax.numpy as jnp
from jax.experimental import pallas as pl
from jax.experimental.pallas import tpu as pltpu

# ---- small, module-consistent hyper-params -------------------------------
EMBED_SIZE = 32          # embed_size
HEADS = 4                # heads
HEAD_DIM = EMBED_SIZE // HEADS
FORWARD_EXPANSION = 4
FF_DIM = FORWARD_EXPANSION * EMBED_SIZE
NUM_LAYERS = 3           # num_layers
SRC_VOCAB = 50           # src_vocab_size (small synthetic)
MAX_LENGTH = 16          # max_length
LN_EPS = 1e-5            # nn.LayerNorm default


def _layernorm(v, w, b):
    # single-pass: var = E[x^2] - mu^2 (halves the cross-lane reduces)
    mu = jnp.mean(v, axis=-1, keepdims=True)
    ms = jnp.mean(v * v, axis=-1, keepdims=True)
    var = jnp.maximum(ms - mu * mu, 0.0)
    return (v - mu) * jax.lax.rsqrt(var + LN_EPS) * w + b


# --------------------------------------------------------------------------
# Fused encoder kernel: all layers, whole batch, one grid step.
# --------------------------------------------------------------------------
def encoder_kernel(x_ref, mask_ref,
                   wqkv_ref, wfc_ref, wff1_ref, wff2_ref,
                   vec_ref, ff1b_ref,
                   o_ref, *, num_layers, heads, head_dim, seq_len):
    f32 = jnp.float32
    bf16 = jnp.bfloat16

    x = x_ref[...]                              # (NL, E) f32 activations
    NL, E = x.shape

    # ---- additive attention bias, built ONCE in-kernel (never hits HBM) ----
    # -1e20 where the key is masked OR the query/key rows belong to different
    # batch elements; 0 otherwise.  (float-floor batch ids avoid int division)
    rid = jax.lax.broadcasted_iota(jnp.int32, (NL, NL), 0).astype(f32)
    cid = jax.lax.broadcasted_iota(jnp.int32, (NL, NL), 1).astype(f32)
    inv_l = 1.0 / float(seq_len)
    same_batch = jnp.floor((rid + 0.5) * inv_l) == jnp.floor((cid + 0.5) * inv_l)
    key_ok = mask_ref[...] > 0.0                # (1, NL) broadcasts over queries
    bias = jnp.where(same_batch & key_ok, 0.0, -1e20).astype(f32)   # (NL, NL)
    bias3 = bias[None, :, :]                    # broadcast over heads

    for l in range(num_layers):                 # static unroll over layers
        wqkv = wqkv_ref[l]                      # (H, E, 3*Dh) bf16, scale folded in Q
        wfc = wfc_ref[l]                        # (H, Dh, E)  bf16
        vecs = vec_ref[l]                       # (6, E) f32
        fc_b = vecs[0:1, :]
        ln1_w = vecs[1:2, :]
        ln1_b = vecs[2:3, :]
        ln2_w = vecs[3:4, :]
        ln2_b = vecs[4:5, :]
        ff2_b = vecs[5:6, :]
        ff1_b = ff1b_ref[l]                     # (1, FF) f32

        # --- MultiHeadAttention: all heads batched on the leading axis -------
        xh = jnp.broadcast_to(x.astype(bf16)[None], (heads, NL, E))
        qkv = jnp.einsum('hne,hek->hnk', xh, wqkv,
                         preferred_element_type=f32)          # (H, NL, 3*Dh)
        q = qkv[..., 0:head_dim].astype(bf16)
        k = qkv[..., head_dim:2 * head_dim].astype(bf16)
        v = qkv[..., 2 * head_dim:3 * head_dim].astype(bf16)

        energy = jnp.einsum('hqd,hkd->hqk', q, k,
                            preferred_element_type=f32)       # (H, NL, NL)
        logits = energy + bias3                                # scale already in wq
        m = jnp.max(logits, axis=-1, keepdims=True)
        p = jnp.exp(logits - m)
        denom = jnp.sum(p, axis=-1, keepdims=True)
        attn = (p * pl.reciprocal(denom, approx=True)).astype(bf16)

        o_h = jnp.einsum('hqk,hkd->hqd', attn, v,
                         preferred_element_type=f32).astype(bf16)   # (H, NL, Dh)
        # concat(o_0..o_{H-1}) @ Wfc == sum_h o_h @ Wfc[h*Dh:(h+1)*Dh]
        contrib = jnp.einsum('hnd,hde->hne', o_h, wfc,
                             preferred_element_type=f32)            # (H, NL, E)
        attn_out = jnp.sum(contrib, axis=0) + fc_b                  # (NL, E)

        # --- residual + norm1 (dropout = identity at inference) -------------
        x1 = _layernorm(attn_out + x, ln1_w, ln1_b)

        # --- feed forward ----------------------------------------------------
        h1 = jnp.dot(x1.astype(bf16), wff1_ref[l],
                     preferred_element_type=f32) + ff1_b
        h1 = jnp.maximum(h1, 0.0)
        ff = jnp.dot(h1.astype(bf16), wff2_ref[l],
                     preferred_element_type=f32) + ff2_b

        # --- residual + norm2 ------------------------------------------------
        x = _layernorm(ff + x1, ln2_w, ln2_b)

    o_ref[...] = x


def encoder_pallas(x2d, key_mask_row, prepped, *, seq_len):
    """x2d: (N*L, E) f32, key_mask_row: (1, N*L) f32, prepped: stacked weights."""
    NL, E = x2d.shape
    arrays = [x2d, key_mask_row] + list(prepped)

    def full_spec(a):
        n = a.ndim
        return pl.BlockSpec(a.shape, lambda i, n=n: (0,) * n)

    kernel = functools.partial(encoder_kernel,
                               num_layers=NUM_LAYERS, heads=HEADS,
                               head_dim=HEAD_DIM, seq_len=seq_len)

    return pl.pallas_call(
        kernel,
        out_shape=jax.ShapeDtypeStruct((NL, E), jnp.float32),
        grid=(1,),
        in_specs=[full_spec(a) for a in arrays],
        out_specs=pl.BlockSpec((NL, E), lambda i: (0, 0)),
        compiler_params=pltpu.CompilerParams(dimension_semantics=("arbitrary",)),
    )(*arrays)


# --------------------------------------------------------------------------
# Host-side parameter handling
# --------------------------------------------------------------------------
def init_params(key):
    """Deterministic synthetic parameters matching the PyTorch module shapes."""
    keys = jax.random.split(key, 2 + NUM_LAYERS)
    word_emb = 0.02 * jax.random.normal(keys[0], (SRC_VOCAB, EMBED_SIZE), jnp.float32)
    pos_emb = 0.02 * jax.random.normal(keys[1], (MAX_LENGTH, EMBED_SIZE), jnp.float32)

    layers = []
    for i in range(NUM_LAYERS):
        ks = jax.random.split(keys[2 + i], 6)
        layers.append(dict(
            wq=0.1 * jax.random.normal(ks[0], (HEAD_DIM, HEAD_DIM), jnp.float32),
            wk=0.1 * jax.random.normal(ks[1], (HEAD_DIM, HEAD_DIM), jnp.float32),
            wv=0.1 * jax.random.normal(ks[2], (HEAD_DIM, HEAD_DIM), jnp.float32),
            fc_w=0.1 * jax.random.normal(ks[3], (EMBED_SIZE, EMBED_SIZE), jnp.float32),
            fc_b=jnp.zeros((1, EMBED_SIZE), jnp.float32),
            ln1_w=jnp.ones((1, EMBED_SIZE), jnp.float32),
            ln1_b=jnp.zeros((1, EMBED_SIZE), jnp.float32),
            ln2_w=jnp.ones((1, EMBED_SIZE), jnp.float32),
            ln2_b=jnp.zeros((1, EMBED_SIZE), jnp.float32),
            ff1_w=0.1 * jax.random.normal(ks[4], (FF_DIM, EMBED_SIZE), jnp.float32),
            ff1_b=jnp.zeros((1, FF_DIM), jnp.float32),
            ff2_w=0.1 * jax.random.normal(ks[5], (EMBED_SIZE, FF_DIM), jnp.float32),
            ff2_b=jnp.zeros((1, EMBED_SIZE), jnp.float32),
        ))
    return word_emb, pos_emb, layers


def prepare_encoder_params(layers):
    """Stack per-layer PyTorch-layout weights into kernel layout:
       fused per-head QKV (H, E, 3*Dh) with the 1/sqrt(E) scale folded into Q,
       per-head fc_out slices (H, Dh, E), pre-transposed FFN weights, packed
       bias/LN vectors. Matmul weights are stored bf16 (f32 accumulation)."""
    scale = 1.0 / (float(EMBED_SIZE) ** 0.5)
    wqkv_l, wfc_l, wff1_l, wff2_l, vec_l, ff1b_l = [], [], [], [], [], []
    for p in layers:
        wqkv = jnp.zeros((HEADS, EMBED_SIZE, 3 * HEAD_DIM), jnp.float32)
        wfc = jnp.zeros((HEADS, HEAD_DIM, EMBED_SIZE), jnp.float32)
        fcT = p["fc_w"].T                                   # (in=E, out=E)
        for h in range(HEADS):
            sl = slice(h * HEAD_DIM, (h + 1) * HEAD_DIM)
            wqkv = wqkv.at[h, sl, 0:HEAD_DIM].set(p["wq"].T * scale)
            wqkv = wqkv.at[h, sl, HEAD_DIM:2 * HEAD_DIM].set(p["wk"].T)
            wqkv = wqkv.at[h, sl, 2 * HEAD_DIM:3 * HEAD_DIM].set(p["wv"].T)
            wfc = wfc.at[h].set(fcT[sl, :])
        wqkv_l.append(wqkv)
        wfc_l.append(wfc)
        wff1_l.append(p["ff1_w"].T)                         # (E, FF)
        wff2_l.append(p["ff2_w"].T)                         # (FF, E)
        vec_l.append(jnp.concatenate(
            [p["fc_b"], p["ln1_w"], p["ln1_b"], p["ln2_w"], p["ln2_b"], p["ff2_b"]],
            axis=0))                                        # (6, E)
        ff1b_l.append(p["ff1_b"])                           # (1, FF)

    wqkv_s = jnp.stack(wqkv_l).astype(jnp.bfloat16)         # (Ly, H, E, 3Dh)
    wfc_s = jnp.stack(wfc_l).astype(jnp.bfloat16)           # (Ly, H, Dh, E)
    wff1_s = jnp.stack(wff1_l).astype(jnp.bfloat16)         # (Ly, E, FF)
    wff2_s = jnp.stack(wff2_l).astype(jnp.bfloat16)         # (Ly, FF, E)
    vec_s = jnp.stack(vec_l)                                # (Ly, 6, E) f32
    ff1b_s = jnp.stack(ff1b_l)                              # (Ly, 1, FF) f32
    return (wqkv_s, wfc_s, wff1_s, wff2_s, vec_s, ff1b_s)


def encoder_forward(tokens, mask, word_emb, pos_emb, prepped):
    """Encoder.forward: embedding lookup (glue JAX) + one fused Pallas call."""
    # TODO(synk): embedding gather (nn.Embedding) stays in JAX glue — a
    # data-dependent gather; not worth a hand-rolled Pallas DMA gather here.
    N, L = tokens.shape
    E = word_emb.shape[1]
    positions = jnp.arange(L)
    x = word_emb[tokens] + pos_emb[positions][None, :, :]   # dropout = identity (eval)
    x2d = x.reshape(N * L, E).astype(jnp.float32)
    key_mask_row = mask.reshape(1, N * L).astype(jnp.float32)   # 0 = masked key

    out2d = encoder_pallas(x2d, key_mask_row, prepped, seq_len=L)
    return out2d.reshape(N, L, E)


# --------------------------------------------------------------------------
# Pure-JAX reference (mirrors the PyTorch module) for a numeric check.
# --------------------------------------------------------------------------
def encoder_reference(tokens, mask, word_emb, pos_emb, layers):
    N, L = tokens.shape
    x = word_emb[tokens] + pos_emb[jnp.arange(L)][None, :, :]
    key_mask = mask.reshape(N, 1, 1, L)
    for p in layers:
        xs = x.reshape(N, L, HEADS, HEAD_DIM)
        q = xs @ p["wq"].T
        k = xs @ p["wk"].T
        v = xs @ p["wv"].T
        energy = jnp.einsum('nqhd,nkhd->nhqk', q, k)
        energy = jnp.where(key_mask == 0, jnp.float32(-1e20), energy)
        attn = jax.nn.softmax(energy / jnp.sqrt(jnp.float32(EMBED_SIZE)), axis=-1)
        out = jnp.einsum('nhqk,nkhd->nqhd', attn, v).reshape(N, L, EMBED_SIZE)
        out = out @ p["fc_w"].T + p["fc_b"]
        x1 = _layernorm(out + x, p["ln1_w"], p["ln1_b"])
        h1 = jnp.maximum(x1 @ p["ff1_w"].T + p["ff1_b"], 0.0)
        ff = h1 @ p["ff2_w"].T + p["ff2_b"]
        x = _layernorm(ff + x1, p["ln2_w"], p["ln2_b"])
    return x


if __name__ == "__main__":
    key = jax.random.PRNGKey(0)
    k_tok, k_param = jax.random.split(key)

    N, L = 2, 8
    tokens = jax.random.randint(k_tok, (N, L), 0, SRC_VOCAB, dtype=jnp.int32)
    # key mask: batch 0 fully visible, batch 1 has last two key positions masked
    mask = jnp.ones((N, 1, L), jnp.float32)
    mask = mask.at[1, 0, L - 2:].set(0.0)

    word_emb, pos_emb, layer_params = init_params(k_param)
    prepped = prepare_encoder_params(layer_params)

    out = encoder_forward(tokens, mask, word_emb, pos_emb, prepped)
    out = jax.block_until_ready(out)

    assert out.shape == (N, L, EMBED_SIZE) and out.dtype == jnp.float32
    assert bool(jnp.all(jnp.isfinite(out)))

    ref = encoder_reference(tokens, mask, word_emb, pos_emb, layer_params)
    max_err = float(jnp.max(jnp.abs(out - ref)))
    # bf16 MXU operands (f32 accumulation) across 3 layers -> allow ~3e-2 abs.
    assert max_err < 3e-2, f"mismatch vs reference: {max_err}"

    print("KERNEL_OK")
</pallas_src>

<mosaic_0001>
module attributes {stable_mosaic.version = 11 : i64} {
  func.func @encoder_kernel(%arg0: i32, %arg1: memref<16x32xf32, #tpu.memory_space<vmem>>, %arg2: memref<1x16xf32, #tpu.memory_space<vmem>>, %arg3: memref<3x4x32x24xbf16, #tpu.memory_space<vmem>>, %arg4: memref<3x4x8x32xbf16, #tpu.memory_space<vmem>>, %arg5: memref<3x32x128xbf16, #tpu.memory_space<vmem>>, %arg6: memref<3x128x32xbf16, #tpu.memory_space<vmem>>, %arg7: memref<3x6x32xf32, #tpu.memory_space<vmem>>, %arg8: memref<3x1x128xf32, #tpu.memory_space<vmem>>, %arg9: memref<16x32xf32, #tpu.memory_space<vmem>>) attributes {dimension_semantics = [#tpu.dimension_semantics<arbitrary>], iteration_bounds = array<i64: 1>, scalar_prefetch = 0 : i64, scratch_operands = 0 : i64, tpu.core_type = #tpu.core_type<tc>, window_params = [{pipeline_mode = #tpu.pipeline_mode<synchronous>, transform_indices = @transform_0, window_bounds = array<i64: 16, 32>}, {pipeline_mode = #tpu.pipeline_mode<synchronous>, transform_indices = @transform_1, window_bounds = array<i64: 1, 16>}, {pipeline_mode = #tpu.pipeline_mode<synchronous>, transform_indices = @transform_2, window_bounds = array<i64: 3, 4, 32, 24>}, {pipeline_mode = #tpu.pipeline_mode<synchronous>, transform_indices = @transform_3, window_bounds = array<i64: 3, 4, 8, 32>}, {pipeline_mode = #tpu.pipeline_mode<synchronous>, transform_indices = @transform_4, window_bounds = array<i64: 3, 32, 128>}, {pipeline_mode = #tpu.pipeline_mode<synchronous>, transform_indices = @transform_5, window_bounds = array<i64: 3, 128, 32>}, {pipeline_mode = #tpu.pipeline_mode<synchronous>, transform_indices = @transform_6, window_bounds = array<i64: 3, 6, 32>}, {pipeline_mode = #tpu.pipeline_mode<synchronous>, transform_indices = @transform_7, window_bounds = array<i64: 3, 1, 128>}, {pipeline_mode = #tpu.pipeline_mode<synchronous>, transform_indices = @transform_8, window_bounds = array<i64: 16, 32>}]} {
    %c0 = arith.constant 0 : index
    %c0_0 = arith.constant 0 : index
    %0 = vector.load %arg1[%c0, %c0_0] : memref<16x32xf32, #tpu.memory_space<vmem>>, vector<16x32xf32>
    %1 = tpu.iota {dimensions = array<i32: 0>} : vector<16x16xi32>
    %2 = arith.sitofp %1 : vector<16x16xi32> to vector<16x16xf32>
    %3 = tpu.iota {dimensions = array<i32: 1>} : vector<16x16xi32>
    %4 = arith.sitofp %3 : vector<16x16xi32> to vector<16x16xf32>
    %cst = arith.constant 5.000000e-01 : f32
    %5 = vector.broadcast %cst : f32 to vector<16x16xf32>
    %6 = arith.addf %2, %5 : vector<16x16xf32>
    %cst_1 = arith.constant 1.250000e-01 : f32
    %7 = vector.broadcast %cst_1 : f32 to vector<16x16xf32>
    %8 = arith.mulf %6, %7 : vector<16x16xf32>
    %9 = math.floor %8 : vector<16x16xf32>
    %cst_2 = arith.constant 5.000000e-01 : f32
    %10 = vector.broadcast %cst_2 : f32 to vector<16x16xf32>
    %11 = arith.addf %4, %10 : vector<16x16xf32>
    %cst_3 = arith.constant 1.250000e-01 : f32
    %12 = vector.broadcast %cst_3 : f32 to vector<16x16xf32>
    %13 = arith.mulf %11, %12 : vector<16x16xf32>
    %14 = math.floor %13 : vector<16x16xf32>
    %15 = arith.cmpf oeq, %9, %14 : vector<16x16xf32>
    %c0_4 = arith.constant 0 : index
    %c0_5 = arith.constant 0 : index
    %16 = vector.load %arg2[%c0_4, %c0_5] : memref<1x16xf32, #tpu.memory_space<vmem>>, vector<1x16xf32>
    %cst_6 = arith.constant 0.000000e+00 : f32
    %17 = vector.broadcast %cst_6 : f32 to vector<1x16xf32>
    %18 = arith.cmpf ogt, %16, %17 : vector<1x16xf32>
    %19 = vector.broadcast %18 : vector<1x16xi1> to vector<16x16xi1>
    %20 = arith.andi %15, %19 : vector<16x16xi1>
    %cst_7 = arith.constant 0.000000e+00 : f32
    %cst_8 = arith.constant -1.000000e+20 : f32
    %21 = vector.broadcast %cst_7 : f32 to vector<16x16xf32>
    %22 = vector.broadcast %cst_8 : f32 to vector<16x16xf32>
    %23 = arith.select %20, %21, %22 : vector<16x16xi1>, vector<16x16xf32>
    %24 = vector.shape_cast %23 : vector<16x16xf32> to vector<1x16x16xf32>
    %c0_9 = arith.constant 0 : index
    %c0_10 = arith.constant 0 : index
    %c0_11 = arith.constant 0 : index
    %c0_12 = arith.constant 0 : index
    %25 = vector.load %arg3[%c0_9, %c0_10, %c0_11, %c0_12] : memref<3x4x32x24xbf16, #tpu.memory_space<vmem>>, vector<1x4x32x24xbf16>
    %26 = vector.shape_cast %25 : vector<1x4x32x24xbf16> to vector<4x32x24xbf16>
    %c0_13 = arith.constant 0 : index
    %c0_14 = arith.constant 0 : index
    %c0_15 = arith.constant 0 : index
    %c0_16 = arith.constant 0 : index
    %27 = vector.load %arg4[%c0_13, %c0_14, %c0_15, %c0_16] : memref<3x4x8x32xbf16, #tpu.memory_space<vmem>>, vector<1x4x8x32xbf16>
    %28 = vector.shape_cast %27 : vector<1x4x8x32xbf16> to vector<4x8x32xbf16>
    %c0_17 = arith.constant 0 : index
    %c0_18 = arith.constant 0 : index
    %c0_19 = arith.constant 0 : index
    %29 = vector.load %arg7[%c0_17, %c0_18, %c0_19] : memref<3x6x32xf32, #tpu.memory_space<vmem>>, vector<1x6x32xf32>
    %30 = vector.shape_cast %29 : vector<1x6x32xf32> to vector<6x32xf32>
    %31 = vector.extract_strided_slice %30 {offsets = [0, 0], sizes = [1, 32], strides = [1, 1]} : vector<6x32xf32> to vector<1x32xf32>
    %32 = vector.extract_strided_slice %30 {offsets = [1, 0], sizes = [1, 32], strides = [1, 1]} : vector<6x32xf32> to vector<1x32xf32>
    %33 = vector.extract_strided_slice %30 {offsets = [2, 0], sizes = [1, 32], strides = [1, 1]} : vector<6x32xf32> to vector<1x32xf32>
    %34 = vector.extract_strided_slice %30 {offsets = [3, 0], sizes = [1, 32], strides = [1, 1]} : vector<6x32xf32> to vector<1x32xf32>
    %35 = vector.extract_strided_slice %30 {offsets = [4, 0], sizes = [1, 32], strides = [1, 1]} : vector<6x32xf32> to vector<1x32xf32>
    %36 = vector.extract_strided_slice %30 {offsets = [5, 0], sizes = [1, 32], strides = [1, 1]} : vector<6x32xf32> to vector<1x32xf32>
    %c0_20 = arith.constant 0 : index
    %c0_21 = arith.constant 0 : index
    %c0_22 = arith.constant 0 : index
    %37 = vector.load %arg8[%c0_20, %c0_21, %c0_22] : memref<3x1x128xf32, #tpu.memory_space<vmem>>, vector<1x1x128xf32>
    %38 = vector.shape_cast %37 : vector<1x1x128xf32> to vector<1x128xf32>
    %39 = arith.truncf %0 : vector<16x32xf32> to vector<16x32xbf16>
    %40 = vector.shape_cast %39 : vector<16x32xbf16> to vector<1x16x32xbf16>
    %41 = vector.shape_cast %40 : vector<1x16x32xbf16> to vector<1x16x32xbf16>
    %42 = vector.broadcast %41 : vector<1x16x32xbf16> to vector<4x16x32xbf16>
    "tpu.trace_start"() <{level = 10 : i32, message = "hne,hek->hnk"}> : () -> ()
    %cst_23 = arith.constant dense<0.000000e+00> : vector<4x16x24xf32>
    %43 = tpu.matmul %42, %26, %cst_23 {dimension_numbers = #tpu.dot_dimension_numbers<[2], [1], [1], [2], [0, 0, 0, 1, 1, 2], [0], [0]>} : vector<4x16x32xbf16>, vector<4x32x24xbf16>, vector<4x16x24xf32> -> vector<4x16x24xf32>
    "tpu.trace_stop"() : () -> ()
    %44 = vector.extract_strided_slice %43 {offsets = [0, 0, 0], sizes = [4, 16, 8], strides = [1, 1, 1]} : vector<4x16x24xf32> to vector<4x16x8xf32>
    %45 = arith.truncf %44 : vector<4x16x8xf32> to vector<4x16x8xbf16>
    %46 = vector.extract_strided_slice %43 {offsets = [0, 0, 8], sizes = [4, 16, 8], strides = [1, 1, 1]} : vector<4x16x24xf32> to vector<4x16x8xf32>
    %47 = arith.truncf %46 : vector<4x16x8xf32> to vector<4x16x8xbf16>
    %48 = vector.extract_strided_slice %43 {offsets = [0, 0, 16], sizes = [4, 16, 8], strides = [1, 1, 1]} : vector<4x16x24xf32> to vector<4x16x8xf32>
    %49 = arith.truncf %48 : vector<4x16x8xf32> to vector<4x16x8xbf16>
    "tpu.trace_start"() <{level = 10 : i32, message = "hqd,hkd->hqk"}> : () -> ()
    %cst_24 = arith.constant dense<0.000000e+00> : vector<4x16x16xf32>
    %50 = tpu.matmul %45, %47, %cst_24 {dimension_numbers = #tpu.dot_dimension_numbers<[2], [2], [1], [1], [0, 0, 0, 1, 1, 1], [0], [0]>} : vector<4x16x8xbf16>, vector<4x16x8xbf16>, vector<4x16x16xf32> -> vector<4x16x16xf32>
    "tpu.trace_stop"() : () -> ()
    %51 = vector.broadcast %24 : vector<1x16x16xf32> to vector<4x16x16xf32>
    %52 = arith.addf %50, %51 : vector<4x16x16xf32>
    %cst_25 = arith.constant dense<0xFF800000> : vector<4x16xf32>
    %53 = vector.multi_reduction <maximumf>, %52, %cst_25 [2] : vector<4x16x16xf32> to vector<4x16xf32>
    %54 = vector.shape_cast %53 : vector<4x16xf32> to vector<4x16x1xf32>
    %55 = vector.broadcast %54 : vector<4x16x1xf32> to vector<4x16x16xf32>
    %56 = arith.subf %52, %55 : vector<4x16x16xf32>
    %57 = math.exp %56 : vector<4x16x16xf32>
    %cst_26 = arith.constant dense<0.000000e+00> : vector<4x16xf32>
    %58 = vector.multi_reduction <add>, %57, %cst_26 [2] : vector<4x16x16xf32> to vector<4x16xf32>
    %59 = vector.shape_cast %58 : vector<4x16xf32> to vector<4x16x1xf32>
    %60 = tpu.reciprocal %59 {approx = true} : vector<4x16x1xf32> -> vector<4x16x1xf32>
    %61 = vector.broadcast %60 : vector<4x16x1xf32> to vector<4x16x16xf32>
    %62 = arith.mulf %57, %61 : vector<4x16x16xf32>
    %63 = arith.truncf %62 : vector<4x16x16xf32> to vector<4x16x16xbf16>
    "tpu.trace_start"() <{level = 10 : i32, message = "hqk,hkd->hqd"}> : () -> ()
    %cst_27 = arith.constant dense<0.000000e+00> : vector<4x16x8xf32>
    %64 = tpu.matmul %63, %49, %cst_27 {dimension_numbers = #tpu.dot_dimension_numbers<[2], [1], [1], [2], [0, 0, 0, 1, 1, 2], [0], [0]>} : vector<4x16x16xbf16>, vector<4x16x8xbf16>, vector<4x16x8xf32> -> vector<4x16x8xf32>
    "tpu.trace_stop"() : () -> ()
    %65 = arith.truncf %64 : vector<4x16x8xf32> to vector<4x16x8xbf16>
    "tpu.trace_start"() <{level = 10 : i32, message = "hnd,hde->hne"}> : () -> ()
    %cst_28 = arith.constant dense<0.000000e+00> : vector<4x16x32xf32>
    %66 = tpu.matmul %65, %28, %cst_28 {dimension_numbers = #tpu.dot_dimension_numbers<[2], [1], [1], [2], [0, 0, 0, 1, 1, 2], [0], [0]>} : vector<4x16x8xbf16>, vector<4x8x32xbf16>, vector<4x16x32xf32> -> vector<4x16x32xf32>
    "tpu.trace_stop"() : () -> ()
    %cst_29 = arith.constant dense<0.000000e+00> : vector<16x32xf32>
    %67 = vector.multi_reduction <add>, %66, %cst_29 [0] : vector<4x16x32xf32> to vector<16x32xf32>
    %68 = vector.broadcast %31 : vector<1x32xf32> to vector<16x32xf32>
    %69 = arith.addf %67, %68 : vector<16x32xf32>
    %70 = arith.addf %69, %0 : vector<16x32xf32>
    %cst_30 = arith.constant dense<0.000000e+00> : vector<16xf32>
    %71 = vector.multi_reduction <add>, %70, %cst_30 [1] : vector<16x32xf32> to vector<16xf32>
    %72 = vector.shape_cast %71 : vector<16xf32> to vector<16x1xf32>
    %cst_31 = arith.constant 3.200000e+01 : f32
    %73 = vector.broadcast %cst_31 : f32 to vector<16x1xf32>
    %74 = arith.divf %72, %73 : vector<16x1xf32>
    %75 = arith.mulf %70, %70 : vector<16x32xf32>
    %cst_32 = arith.constant dense<0.000000e+00> : vector<16xf32>
    %76 = vector.multi_reduction <add>, %75, %cst_32 [1] : vector<16x32xf32> to vector<16xf32>
    %77 = vector.shape_cast %76 : vector<16xf32> to vector<16x1xf32>
    %cst_33 = arith.constant 3.200000e+01 : f32
    %78 = vector.broadcast %cst_33 : f32 to vector<16x1xf32>
    %79 = arith.divf %77, %78 : vector<16x1xf32>
    %80 = arith.mulf %74, %74 : vector<16x1xf32>
    %81 = arith.subf %79, %80 : vector<16x1xf32>
    %cst_34 = arith.constant 0.000000e+00 : f32
    %82 = vector.broadcast %cst_34 : f32 to vector<16x1xf32>
    %83 = arith.maximumf %81, %82 : vector<16x1xf32>
    %84 = vector.broadcast %74 : vector<16x1xf32> to vector<16x32xf32>
    %85 = arith.subf %70, %84 : vector<16x32xf32>
    %cst_35 = arith.constant 9.99999974E-6 : f32
    %86 = vector.broadcast %cst_35 : f32 to vector<16x1xf32>
    %87 = arith.addf %83, %86 : vector<16x1xf32>
    %88 = math.rsqrt %87 : vector<16x1xf32>
    %89 = vector.broadcast %88 : vector<16x1xf32> to vector<16x32xf32>
    %90 = arith.mulf %85, %89 : vector<16x32xf32>
    %91 = vector.broadcast %32 : vector<1x32xf32> to vector<16x32xf32>
    %92 = arith.mulf %90, %91 : vector<16x32xf32>
    %93 = vector.broadcast %33 : vector<1x32xf32> to vector<16x32xf32>
    %94 = arith.addf %92, %93 : vector<16x32xf32>
    %95 = arith.truncf %94 : vector<16x32xf32> to vector<16x32xbf16>
    %c0_36 = arith.constant 0 : index
    %c0_37 = arith.constant 0 : index
    %c0_38 = arith.constant 0 : index
    %96 = vector.load %arg5[%c0_36, %c0_37, %c0_38] : memref<3x32x128xbf16, #tpu.memory_space<vmem>>, vector<1x32x128xbf16>
    %97 = vector.shape_cast %96 : vector<1x32x128xbf16> to vector<32x128xbf16>
    %cst_39 = arith.constant dense<0.000000e+00> : vector<16x128xf32>
    %98 = tpu.matmul %95, %97, %cst_39 {dimension_numbers = #tpu.dot_dimension_numbers<[1], [0], [0], [1], [0, 0, 1, 1], [], []>} : vector<16x32xbf16>, vector<32x128xbf16>, vector<16x128xf32> -> vector<16x128xf32>
    %99 = vector.broadcast %38 : vector<1x128xf32> to vector<16x128xf32>
    %100 = arith.addf %98, %99 : vector<16x128xf32>
    %cst_40 = arith.constant 0.000000e+00 : f32
    %101 = vector.broadcast %cst_40 : f32 to vector<16x128xf32>
    %102 = arith.maximumf %100, %101 : vector<16x128xf32>
    %103 = arith.truncf %102 : vector<16x128xf32> to vector<16x128xbf16>
    %c0_41 = arith.constant 0 : index
    %c0_42 = arith.constant 0 : index
    %c0_43 = arith.constant 0 : index
    %104 = vector.load %arg6[%c0_41, %c0_42, %c0_43] : memref<3x128x32xbf16, #tpu.memory_space<vmem>>, vector<1x128x32xbf16>
    %105 = vector.shape_cast %104 : vector<1x128x32xbf16> to vector<128x32xbf16>
    %cst_44 = arith.constant dense<0.000000e+00> : vector<16x32xf32>
    %106 = tpu.matmul %103, %105, %cst_44 {dimension_numbers = #tpu.dot_dimension_numbers<[1], [0], [0], [1], [0, 0, 1, 1], [], []>} : vector<16x128xbf16>, vector<128x32xbf16>, vector<16x32xf32> -> vector<16x32xf32>
    %107 = vector.broadcast %36 : vector<1x32xf32> to vector<16x32xf32>
    %108 = arith.addf %106, %107 : vector<16x32xf32>
    %109 = arith.addf %108, %94 : vector<16x32xf32>
    %cst_45 = arith.constant dense<0.000000e+00> : vector<16xf32>
    %110 = vector.multi_reduction <add>, %109, %cst_45 [1] : vector<16x32xf32> to vector<16xf32>
    %111 = vector.shape_cast %110 : vector<16xf32> to vector<16x1xf32>
    %cst_46 = arith.constant 3.200000e+01 : f32
    %112 = vector.broadcast %cst_46 : f32 to vector<16x1xf32>
    %113 = arith.divf %111, %112 : vector<16x1xf32>
    %114 = arith.mulf %109, %109 : vector<16x32xf32>
    %cst_47 = arith.constant dense<0.000000e+00> : vector<16xf32>
    %115 = vector.multi_reduction <add>, %114, %cst_47 [1] : vector<16x32xf32> to vector<16xf32>
    %116 = vector.shape_cast %115 : vector<16xf32> to vector<16x1xf32>
    %cst_48 = arith.constant 3.200000e+01 : f32
    %117 = vector.broadcast %cst_48 : f32 to vector<16x1xf32>
    %118 = arith.divf %116, %117 : vector<16x1xf32>
    %119 = arith.mulf %113, %113 : vector<16x1xf32>
    %120 = arith.subf %118, %119 : vector<16x1xf32>
    %cst_49 = arith.constant 0.000000e+00 : f32
    %121 = vector.broadcast %cst_49 : f32 to vector<16x1xf32>
    %122 = arith.maximumf %120, %121 : vector<16x1xf32>
    %123 = vector.broadcast %113 : vector<16x1xf32> to vector<16x32xf32>
    %124 = arith.subf %109, %123 : vector<16x32xf32>
    %cst_50 = arith.constant 9.99999974E-6 : f32
    %125 = vector.broadcast %cst_50 : f32 to vector<16x1xf32>
    %126 = arith.addf %122, %125 : vector<16x1xf32>
    %127 = math.rsqrt %126 : vector<16x1xf32>
    %128 = vector.broadcast %127 : vector<16x1xf32> to vector<16x32xf32>
    %129 = arith.mulf %124, %128 : vector<16x32xf32>
    %130 = vector.broadcast %34 : vector<1x32xf32> to vector<16x32xf32>
    %131 = arith.mulf %129, %130 : vector<16x32xf32>
    %132 = vector.broadcast %35 : vector<1x32xf32> to vector<16x32xf32>
    %133 = arith.addf %131, %132 : vector<16x32xf32>
    %c1 = arith.constant 1 : index
    %c0_51 = arith.constant 0 : index
    %c0_52 = arith.constant 0 : index
    %c0_53 = arith.constant 0 : index
    %134 = vector.load %arg3[%c1, %c0_51, %c0_52, %c0_53] : memref<3x4x32x24xbf16, #tpu.memory_space<vmem>>, vector<1x4x32x24xbf16>
    %135 = vector.shape_cast %134 : vector<1x4x32x24xbf16> to vector<4x32x24xbf16>
    %c1_54 = arith.constant 1 : index
    %c0_55 = arith.constant 0 : index
    %c0_56 = arith.constant 0 : index
    %c0_57 = arith.constant 0 : index
    %136 = vector.load %arg4[%c1_54, %c0_55, %c0_56, %c0_57] : memref<3x4x8x32xbf16, #tpu.memory_space<vmem>>, vector<1x4x8x32xbf16>
    %137 = vector.shape_cast %136 : vector<1x4x8x32xbf16> to vector<4x8x32xbf16>
    %c1_58 = arith.constant 1 : index
    %c0_59 = arith.constant 0 : index
    %c0_60 = arith.constant 0 : index
    %138 = vector.load %arg7[%c1_58, %c0_59, %c0_60] : memref<3x6x32xf32, #tpu.memory_space<vmem>>, vector<1x6x32xf32>
    %139 = vector.shape_cast %138 : vector<1x6x32xf32> to vector<6x32xf32>
    %140 = vector.extract_strided_slice %139 {offsets = [0, 0], sizes = [1, 32], strides = [1, 1]} : vector<6x32xf32> to vector<1x32xf32>
    %141 = vector.extract_strided_slice %139 {offsets = [1, 0], sizes = [1, 32], strides = [1, 1]} : vector<6x32xf32> to vector<1x32xf32>
    %142 = vector.extract_strided_slice %139 {offsets = [2, 0], sizes = [1, 32], strides = [1, 1]} : vector<6x32xf32> to vector<1x32xf32>
    %143 = vector.extract_strided_slice %139 {offsets = [3, 0], sizes = [1, 32], strides = [1, 1]} : vector<6x32xf32> to vector<1x32xf32>
    %144 = vector.extract_strided_slice %139 {offsets = [4, 0], sizes = [1, 32], strides = [1, 1]} : vector<6x32xf32> to vector<1x32xf32>
    %145 = vector.extract_strided_slice %139 {offsets = [5, 0], sizes = [1, 32], strides = [1, 1]} : vector<6x32xf32> to vector<1x32xf32>
    %c1_61 = arith.constant 1 : index
    %c0_62 = arith.constant 0 : index
    %c0_63 = arith.constant 0 : index
    %146 = vector.load %arg8[%c1_61, %c0_62, %c0_63] : memref<3x1x128xf32, #tpu.memory_space<vmem>>, vector<1x1x128xf32>
    %147 = vector.shape_cast %146 : vector<1x1x128xf32> to vector<1x128xf32>
    %148 = arith.truncf %133 : vector<16x32xf32> to vector<16x32xbf16>
    %149 = vector.shape_cast %148 : vector<16x32xbf16> to vector<1x16x32xbf16>
    %150 = vector.shape_cast %149 : vector<1x16x32xbf16> to vector<1x16x32xbf16>
    %151 = vector.broadcast %150 : vector<1x16x32xbf16> to vector<4x16x32xbf16>
    "tpu.trace_start"() <{level = 10 : i32, message = "hne,hek->hnk"}> : () -> ()
    %cst_64 = arith.constant dense<0.000000e+00> : vector<4x16x24xf32>
    %152 = tpu.matmul %151, %135, %cst_64 {dimension_numbers = #tpu.dot_dimension_numbers<[2], [1], [1], [2], [0, 0, 0, 1, 1, 2], [0], [0]>} : vector<4x16x32xbf16>, vector<4x32x24xbf16>, vector<4x16x24xf32> -> vector<4x16x24xf32>
    "tpu.trace_stop"() : () -> ()
    %153 = vector.extract_strided_slice %152 {offsets = [0, 0, 0], sizes = [4, 16, 8], strides = [1, 1, 1]} : vector<4x16x24xf32> to vector<4x16x8xf32>
    %154 = arith.truncf %153 : vector<4x16x8xf32> to vector<4x16x8xbf16>
    %155 = vector.extract_strided_slice %152 {offsets = [0, 0, 8], sizes = [4, 16, 8], strides = [1, 1, 1]} : vector<4x16x24xf32> to vector<4x16x8xf32>
    %156 = arith.truncf %155 : vector<4x16x8xf32> to vector<4x16x8xbf16>
    %157 = vector.extract_strided_slice %152 {offsets = [0, 0, 16], sizes = [4, 16, 8], strides = [1, 1, 1]} : vector<4x16x24xf32> to vector<4x16x8xf32>
    %158 = arith.truncf %157 : vector<4x16x8xf32> to vector<4x16x8xbf16>
    "tpu.trace_start"() <{level = 10 : i32, message = "hqd,hkd->hqk"}> : () -> ()
    %cst_65 = arith.constant dense<0.000000e+00> : vector<4x16x16xf32>
    %159 = tpu.matmul %154, %156, %cst_65 {dimension_numbers = #tpu.dot_dimension_numbers<[2], [2], [1], [1], [0, 0, 0, 1, 1, 1], [0], [0]>} : vector<4x16x8xbf16>, vector<4x16x8xbf16>, vector<4x16x16xf32> -> vector<4x16x16xf32>
    "tpu.trace_stop"() : () -> ()
    %160 = vector.broadcast %24 : vector<1x16x16xf32> to vector<4x16x16xf32>
    %161 = arith.addf %159, %160 : vector<4x16x16xf32>
    %cst_66 = arith.constant dense<0xFF800000> : vector<4x16xf32>
    %162 = vector.multi_reduction <maximumf>, %161, %cst_66 [2] : vector<4x16x16xf32> to vector<4x16xf32>
    %163 = vector.shape_cast %162 : vector<4x16xf32> to vector<4x16x1xf32>
    %164 = vector.broadcast %163 : vector<4x16x1xf32> to vector<4x16x16xf32>
    %165 = arith.subf %161, %164 : vector<4x16x16xf32>
    %166 = math.exp %165 : vector<4x16x16xf32>
    %cst_67 = arith.constant dense<0.000000e+00> : vector<4x16xf32>
    %167 = vector.multi_reduction <add>, %166, %cst_67 [2] : vector<4x16x16xf32> to vector<4x16xf32>
    %168 = vector.shape_cast %167 : vector<4x16xf32> to vector<4x16x1xf32>
    %169 = tpu.reciprocal %168 {approx = true} : vector<4x16x1xf32> -> vector<4x16x1xf32>
    %170 = vector.broadcast %169 : vector<4x16x1xf32> to vector<4x16x16xf32>
    %171 = arith.mulf %166, %170 : vector<4x16x16xf32>
    %172 = arith.truncf %171 : vector<4x16x16xf32> to vector<4x16x16xbf16>
    "tpu.trace_start"() <{level = 10 : i32, message = "hqk,hkd->hqd"}> : () -> ()
    %cst_68 = arith.constant dense<0.000000e+00> : vector<4x16x8xf32>
    %173 = tpu.matmul %172, %158, %cst_68 {dimension_numbers = #tpu.dot_dimension_numbers<[2], [1], [1], [2], [0, 0, 0, 1, 1, 2], [0], [0]>} : vector<4x16x16xbf16>, vector<4x16x8xbf16>, vector<4x16x8xf32> -> vector<4x16x8xf32>
    "tpu.trace_stop"() : () -> ()
    %174 = arith.truncf %173 : vector<4x16x8xf32> to vector<4x16x8xbf16>
    "tpu.trace_start"() <{level = 10 : i32, message = "hnd,hde->hne"}> : () -> ()
    %cst_69 = arith.constant dense<0.000000e+00> : vector<4x16x32xf32>
    %175 = tpu.matmul %174, %137, %cst_69 {dimension_numbers = #tpu.dot_dimension_numbers<[2], [1], [1], [2], [0, 0, 0, 1, 1, 2], [0], [0]>} : vector<4x16x8xbf16>, vector<4x8x32xbf16>, vector<4x16x32xf32> -> vector<4x16x32xf32>
    "tpu.trace_stop"() : () -> ()
    %cst_70 = arith.constant dense<0.000000e+00> : vector<16x32xf32>
    %176 = vector.multi_reduction <add>, %175, %cst_70 [0] : vector<4x16x32xf32> to vector<16x32xf32>
    %177 = vector.broadcast %140 : vector<1x32xf32> to vector<16x32xf32>
    %178 = arith.addf %176, %177 : vector<16x32xf32>
    %179 = arith.addf %178, %133 : vector<16x32xf32>
    %cst_71 = arith.constant dense<0.000000e+00> : vector<16xf32>
    %180 = vector.multi_reduction <add>, %179, %cst_71 [1] : vector<16x32xf32> to vector<16xf32>
    %181 = vector.shape_cast %180 : vector<16xf32> to vector<16x1xf32>
    %cst_72 = arith.constant 3.200000e+01 : f32
    %182 = vector.broadcast %cst_72 : f32 to vector<16x1xf32>
    %183 = arith.divf %181, %182 : vector<16x1xf32>
    %184 = arith.mulf %179, %179 : vector<16x32xf32>
    %cst_73 = arith.constant dense<0.000000e+00> : vector<16xf32>
    %185 = vector.multi_reduction <add>, %184, %cst_73 [1] : vector<16x32xf32> to vector<16xf32>
    %186 = vector.shape_cast %185 : vector<16xf32> to vector<16x1xf32>
    %cst_74 = arith.constant 3.200000e+01 : f32
    %187 = vector.broadcast %cst_74 : f32 to vector<16x1xf32>
    %188 = arith.divf %186, %187 : vector<16x1xf32>
    %189 = arith.mulf %183, %183 : vector<16x1xf32>
    %190 = arith.subf %188, %189 : vector<16x1xf32>
    %cst_75 = arith.constant 0.000000e+00 : f32
    %191 = vector.broadcast %cst_75 : f32 to vector<16x1xf32>
    %192 = arith.maximumf %190, %191 : vector<16x1xf32>
    %193 = vector.broadcast %183 : vector<16x1xf32> to vector<16x32xf32>
    %194 = arith.subf %179, %193 : vector<16x32xf32>
    %cst_76 = arith.constant 9.99999974E-6 : f32
    %195 = vector.broadcast %cst_76 : f32 to vector<16x1xf32>
    %196 = arith.addf %192, %195 : vector<16x1xf32>
    %197 = math.rsqrt %196 : vector<16x1xf32>
    %198 = vector.broadcast %197 : vector<16x1xf32> to vector<16x32xf32>
    %199 = arith.mulf %194, %198 : vector<16x32xf32>
    %200 = vector.broadcast %141 : vector<1x32xf32> to vector<16x32xf32>
    %201 = arith.mulf %199, %200 : vector<16x32xf32>
    %202 = vector.broadcast %142 : vector<1x32xf32> to vector<16x32xf32>
    %203 = arith.addf %201, %202 : vector<16x32xf32>
    %204 = arith.truncf %203 : vector<16x32xf32> to vector<16x32xbf16>
    %c1_77 = arith.constant 1 : index
    %c0_78 = arith.constant 0 : index
    %c0_79 = arith.constant 0 : index
    %205 = vector.load %arg5[%c1_77, %c0_78, %c0_79] : memref<3x32x128xbf16, #tpu.memory_space<vmem>>, vector<1x32x128xbf16>
    %206 = vector.shape_cast %205 : vector<1x32x128xbf16> to vector<32x128xbf16>
    %cst_80 = arith.constant dense<0.000000e+00> : vector<16x128xf32>
    %207 = tpu.matmul %204, %206, %cst_80 {dimension_numbers = #tpu.dot_dimension_numbers<[1], [0], [0], [1], [0, 0, 1, 1], [], []>} : vector<16x32xbf16>, vector<32x128xbf16>, vector<16x128xf32> -> vector<16x128xf32>
    %208 = vector.broadcast %147 : vector<1x128xf32> to vector<16x128xf32>
    %209 = arith.addf %207, %208 : vector<16x128xf32>
    %cst_81 = arith.constant 0.000000e+00 : f32
    %210 = vector.broadcast %cst_81 : f32 to vector<16x128xf32>
    %211 = arith.maximumf %209, %210 : vector<16x128xf32>
    %212 = arith.truncf %211 : vector<16x128xf32> to vector<16x128xbf16>
    %c1_82 = arith.constant 1 : index
    %c0_83 = arith.constant 0 : index
    %c0_84 = arith.constant 0 : index
    %213 = vector.load %arg6[%c1_82, %c0_83, %c0_84] : memref<3x128x32xbf16, #tpu.memory_space<vmem>>, vector<1x128x32xbf16>
    %214 = vector.shape_cast %213 : vector<1x128x32xbf16> to vector<128x32xbf16>
    %cst_85 = arith.constant dense<0.000000e+00> : vector<16x32xf32>
    %215 = tpu.matmul %212, %214, %cst_85 {dimension_numbers = #tpu.dot_dimension_numbers<[1], [0], [0], [1], [0, 0, 1, 1], [], []>} : vector<16x128xbf16>, vector<128x32xbf16>, vector<16x32xf32> -> vector<16x32xf32>
    %216 = vector.broadcast %145 : vector<1x32xf32> to vector<16x32xf32>
    %217 = arith.addf %215, %216 : vector<16x32xf32>
    %218 = arith.addf %217, %203 : vector<16x32xf32>
    %cst_86 = arith.constant dense<0.000000e+00> : vector<16xf32>
    %219 = vector.multi_reduction <add>, %218, %cst_86 [1] : vector<16x32xf32> to vector<16xf32>
    %220 = vector.shape_cast %219 : vector<16xf32> to vector<16x1xf32>
    %cst_87 = arith.constant 3.200000e+01 : f32
    %221 = vector.broadcast %cst_87 : f32 to vector<16x1xf32>
    %222 = arith.divf %220, %221 : vector<16x1xf32>
    %223 = arith.mulf %218, %218 : vector<16x32xf32>
    %cst_88 = arith.constant dense<0.000000e+00> : vector<16xf32>
    %224 = vector.multi_reduction <add>, %223, %cst_88 [1] : vector<16x32xf32> to vector<16xf32>
    %225 = vector.shape_cast %224 : vector<16xf32> to vector<16x1xf32>
    %cst_89 = arith.constant 3.200000e+01 : f32
    %226 = vector.broadcast %cst_89 : f32 to vector<16x1xf32>
    %227 = arith.divf %225, %226 : vector<16x1xf32>
    %228 = arith.mulf %222, %222 : vector<16x1xf32>
    %229 = arith.subf %227, %228 : vector<16x1xf32>
    %cst_90 = arith.constant 0.000000e+00 : f32
    %230 = vector.broadcast %cst_90 : f32 to vector<16x1xf32>
    %231 = arith.maximumf %229, %230 : vector<16x1xf32>
    %232 = vector.broadcast %222 : vector<16x1xf32> to vector<16x32xf32>
    %233 = arith.subf %218, %232 : vector<16x32xf32>
    %cst_91 = arith.constant 9.99999974E-6 : f32
    %234 = vector.broadcast %cst_91 : f32 to vector<16x1xf32>
    %235 = arith.addf %231, %234 : vector<16x1xf32>
    %236 = math.rsqrt %235 : vector<16x1xf32>
    %237 = vector.broadcast %236 : vector<16x1xf32> to vector<16x32xf32>
    %238 = arith.mulf %233, %237 : vector<16x32xf32>
    %239 = vector.broadcast %143 : vector<1x32xf32> to vector<16x32xf32>
    %240 = arith.mulf %238, %239 : vector<16x32xf32>
    %241 = vector.broadcast %144 : vector<1x32xf32> to vector<16x32xf32>
    %242 = arith.addf %240, %241 : vector<16x32xf32>
    %c2 = arith.constant 2 : index
    %c0_92 = arith.constant 0 : index
    %c0_93 = arith.constant 0 : index
    %c0_94 = arith.constant 0 : index
    %243 = vector.load %arg3[%c2, %c0_92, %c0_93, %c0_94] : memref<3x4x32x24xbf16, #tpu.memory_space<vmem>>, vector<1x4x32x24xbf16>
    %244 = vector.shape_cast %243 : vector<1x4x32x24xbf16> to vector<4x32x24xbf16>
    %c2_95 = arith.constant 2 : index
    %c0_96 = arith.constant 0 : index
    %c0_97 = arith.constant 0 : index
    %c0_98 = arith.constant 0 : index
    %245 = vector.load %arg4[%c2_95, %c0_96, %c0_97, %c0_98] : memref<3x4x8x32xbf16, #tpu.memory_space<vmem>>, vector<1x4x8x32xbf16>
    %246 = vector.shape_cast %245 : vector<1x4x8x32xbf16> to vector<4x8x32xbf16>
    %c2_99 = arith.constant 2 : index
    %c0_100 = arith.constant 0 : index
    %c0_101 = arith.constant 0 : index
    %247 = vector.load %arg7[%c2_99, %c0_100, %c0_101] : memref<3x6x32xf32, #tpu.memory_space<vmem>>, vector<1x6x32xf32>
    %248 = vector.shape_cast %247 : vector<1x6x32xf32> to vector<6x32xf32>
    %249 = vector.extract_strided_slice %248 {offsets = [0, 0], sizes = [1, 32], strides = [1, 1]} : vector<6x32xf32> to vector<1x32xf32>
    %250 = vector.extract_strided_slice %248 {offsets = [1, 0], sizes = [1, 32], strides = [1, 1]} : vector<6x32xf32> to vector<1x32xf32>
    %251 = vector.extract_strided_slice %248 {offsets = [2, 0], sizes = [1, 32], strides = [1, 1]} : vector<6x32xf32> to vector<1x32xf32>
    %252 = vector.extract_strided_slice %248 {offsets = [3, 0], sizes = [1, 32], strides = [1, 1]} : vector<6x32xf32> to vector<1x32xf32>
    %253 = vector.extract_strided_slice %248 {offsets = [4, 0], sizes = [1, 32], strides = [1, 1]} : vector<6x32xf32> to vector<1x32xf32>
    %254 = vector.extract_strided_slice %248 {offsets = [5, 0], sizes = [1, 32], strides = [1, 1]} : vector<6x32xf32> to vector<1x32xf32>
    %c2_102 = arith.constant 2 : index
    %c0_103 = arith.constant 0 : index
    %c0_104 = arith.constant 0 : index
    %255 = vector.load %arg8[%c2_102, %c0_103, %c0_104] : memref<3x1x128xf32, #tpu.memory_space<vmem>>, vector<1x1x128xf32>
    %256 = vector.shape_cast %255 : vector<1x1x128xf32> to vector<1x128xf32>
    %257 = arith.truncf %242 : vector<16x32xf32> to vector<16x32xbf16>
    %258 = vector.shape_cast %257 : vector<16x32xbf16> to vector<1x16x32xbf16>
    %259 = vector.shape_cast %258 : vector<1x16x32xbf16> to vector<1x16x32xbf16>
    %260 = vector.broadcast %259 : vector<1x16x32xbf16> to vector<4x16x32xbf16>
    "tpu.trace_start"() <{level = 10 : i32, message = "hne,hek->hnk"}> : () -> ()
    %cst_105 = arith.constant dense<0.000000e+00> : vector<4x16x24xf32>
    %261 = tpu.matmul %260, %244, %cst_105 {dimension_numbers = #tpu.dot_dimension_numbers<[2], [1], [1], [2], [0, 0, 0, 1, 1, 2], [0], [0]>} : vector<4x16x32xbf16>, vector<4x32x24xbf16>, vector<4x16x24xf32> -> vector<4x16x24xf32>
    "tpu.trace_stop"() : () -> ()
    %262 = vector.extract_strided_slice %261 {offsets = [0, 0, 0], sizes = [4, 16, 8], strides = [1, 1, 1]} : vector<4x16x24xf32> to vector<4x16x8xf32>
    %263 = arith.truncf %262 : vector<4x16x8xf32> to vector<4x16x8xbf16>
    %264 = vector.extract_strided_slice %261 {offsets = [0, 0, 8], sizes = [4, 16, 8], strides = [1, 1, 1]} : vector<4x16x24xf32> to vector<4x16x8xf32>
    %265 = arith.truncf %264 : vector<4x16x8xf32> to vector<4x16x8xbf16>
    %266 = vector.extract_strided_slice %261 {offsets = [0, 0, 16], sizes = [4, 16, 8], strides = [1, 1, 1]} : vector<4x16x24xf32> to vector<4x16x8xf32>
    %267 = arith.truncf %266 : vector<4x16x8xf32> to vector<4x16x8xbf16>
    "tpu.trace_start"() <{level = 10 : i32, message = "hqd,hkd->hqk"}> : () -> ()
    %cst_106 = arith.constant dense<0.000000e+00> : vector<4x16x16xf32>
    %268 = tpu.matmul %263, %265, %cst_106 {dimension_numbers = #tpu.dot_dimension_numbers<[2], [2], [1], [1], [0, 0, 0, 1, 1, 1], [0], [0]>} : vector<4x16x8xbf16>, vector<4x16x8xbf16>, vector<4x16x16xf32> -> vector<4x16x16xf32>
    "tpu.trace_stop"() : () -> ()
    %269 = vector.broadcast %24 : vector<1x16x16xf32> to vector<4x16x16xf32>
    %270 = arith.addf %268, %269 : vector<4x16x16xf32>
    %cst_107 = arith.constant dense<0xFF800000> : vector<4x16xf32>
    %271 = vector.multi_reduction <maximumf>, %270, %cst_107 [2] : vector<4x16x16xf32> to vector<4x16xf32>
    %272 = vector.shape_cast %271 : vector<4x16xf32> to vector<4x16x1xf32>
    %273 = vector.broadcast %272 : vector<4x16x1xf32> to vector<4x16x16xf32>
    %274 = arith.subf %270, %273 : vector<4x16x16xf32>
    %275 = math.exp %274 : vector<4x16x16xf32>
    %cst_108 = arith.constant dense<0.000000e+00> : vector<4x16xf32>
    %276 = vector.multi_reduction <add>, %275, %cst_108 [2] : vector<4x16x16xf32> to vector<4x16xf32>
    %277 = vector.shape_cast %276 : vector<4x16xf32> to vector<4x16x1xf32>
    %278 = tpu.reciprocal %277 {approx = true} : vector<4x16x1xf32> -> vector<4x16x1xf32>
    %279 = vector.broadcast %278 : vector<4x16x1xf32> to vector<4x16x16xf32>
    %280 = arith.mulf %275, %279 : vector<4x16x16xf32>
    %281 = arith.truncf %280 : vector<4x16x16xf32> to vector<4x16x16xbf16>
    "tpu.trace_start"() <{level = 10 : i32, message = "hqk,hkd->hqd"}> : () -> ()
    %cst_109 = arith.constant dense<0.000000e+00> : vector<4x16x8xf32>
    %282 = tpu.matmul %281, %267, %cst_109 {dimension_numbers = #tpu.dot_dimension_numbers<[2], [1], [1], [2], [0, 0, 0, 1, 1, 2], [0], [0]>} : vector<4x16x16xbf16>, vector<4x16x8xbf16>, vector<4x16x8xf32> -> vector<4x16x8xf32>
    "tpu.trace_stop"() : () -> ()
    %283 = arith.truncf %282 : vector<4x16x8xf32> to vector<4x16x8xbf16>
    "tpu.trace_start"() <{level = 10 : i32, message = "hnd,hde->hne"}> : () -> ()
    %cst_110 = arith.constant dense<0.000000e+00> : vector<4x16x32xf32>
    %284 = tpu.matmul %283, %246, %cst_110 {dimension_numbers = #tpu.dot_dimension_numbers<[2], [1], [1], [2], [0, 0, 0, 1, 1, 2], [0], [0]>} : vector<4x16x8xbf16>, vector<4x8x32xbf16>, vector<4x16x32xf32> -> vector<4x16x32xf32>
    "tpu.trace_stop"() : () -> ()
    %cst_111 = arith.constant dense<0.000000e+00> : vector<16x32xf32>
    %285 = vector.multi_reduction <add>, %284, %cst_111 [0] : vector<4x16x32xf32> to vector<16x32xf32>
    %286 = vector.broadcast %249 : vector<1x32xf32> to vector<16x32xf32>
    %287 = arith.addf %285, %286 : vector<16x32xf32>
    %288 = arith.addf %287, %242 : vector<16x32xf32>
    %cst_112 = arith.constant dense<0.000000e+00> : vector<16xf32>
    %289 = vector.multi_reduction <add>, %288, %cst_112 [1] : vector<16x32xf32> to vector<16xf32>
    %290 = vector.shape_cast %289 : vector<16xf32> to vector<16x1xf32>
    %cst_113 = arith.constant 3.200000e+01 : f32
    %291 = vector.broadcast %cst_113 : f32 to vector<16x1xf32>
    %292 = arith.divf %290, %291 : vector<16x1xf32>
    %293 = arith.mulf %288, %288 : vector<16x32xf32>
    %cst_114 = arith.constant dense<0.000000e+00> : vector<16xf32>
    %294 = vector.multi_reduction <add>, %293, %cst_114 [1] : vector<16x32xf32> to vector<16xf32>
    %295 = vector.shape_cast %294 : vector<16xf32> to vector<16x1xf32>
    %cst_115 = arith.constant 3.200000e+01 : f32
    %296 = vector.broadcast %cst_115 : f32 to vector<16x1xf32>
    %297 = arith.divf %295, %296 : vector<16x1xf32>
    %298 = arith.mulf %292, %292 : vector<16x1xf32>
    %299 = arith.subf %297, %298 : vector<16x1xf32>
    %cst_116 = arith.constant 0.000000e+00 : f32
    %300 = vector.broadcast %cst_116 : f32 to vector<16x1xf32>
    %301 = arith.maximumf %299, %300 : vector<16x1xf32>
    %302 = vector.broadcast %292 : vector<16x1xf32> to vector<16x32xf32>
    %303 = arith.subf %288, %302 : vector<16x32xf32>
    %cst_117 = arith.constant 9.99999974E-6 : f32
    %304 = vector.broadcast %cst_117 : f32 to vector<16x1xf32>
    %305 = arith.addf %301, %304 : vector<16x1xf32>
    %306 = math.rsqrt %305 : vector<16x1xf32>
    %307 = vector.broadcast %306 : vector<16x1xf32> to vector<16x32xf32>
    %308 = arith.mulf %303, %307 : vector<16x32xf32>
    %309 = vector.broadcast %250 : vector<1x32xf32> to vector<16x32xf32>
    %310 = arith.mulf %308, %309 : vector<16x32xf32>
    %311 = vector.broadcast %251 : vector<1x32xf32> to vector<16x32xf32>
    %312 = arith.addf %310, %311 : vector<16x32xf32>
    %313 = arith.truncf %312 : vector<16x32xf32> to vector<16x32xbf16>
    %c2_118 = arith.constant 2 : index
    %c0_119 = arith.constant 0 : index
    %c0_120 = arith.constant 0 : index
    %314 = vector.load %arg5[%c2_118, %c0_119, %c0_120] : memref<3x32x128xbf16, #tpu.memory_space<vmem>>, vector<1x32x128xbf16>
    %315 = vector.shape_cast %314 : vector<1x32x128xbf16> to vector<32x128xbf16>
    %cst_121 = arith.constant dense<0.000000e+00> : vector<16x128xf32>
    %316 = tpu.matmul %313, %315, %cst_121 {dimension_numbers = #tpu.dot_dimension_numbers<[1], [0], [0], [1], [0, 0, 1, 1], [], []>} : vector<16x32xbf16>, vector<32x128xbf16>, vector<16x128xf32> -> vector<16x128xf32>
    %317 = vector.broadcast %256 : vector<1x128xf32> to vector<16x128xf32>
    %318 = arith.addf %316, %317 : vector<16x128xf32>
    %cst_122 = arith.constant 0.000000e+00 : f32
    %319 = vector.broadcast %cst_122 : f32 to vector<16x128xf32>
    %320 = arith.maximumf %318, %319 : vector<16x128xf32>
    %321 = arith.truncf %320 : vector<16x128xf32> to vector<16x128xbf16>
    %c2_123 = arith.constant 2 : index
    %c0_124 = arith.constant 0 : index
    %c0_125 = arith.constant 0 : index
    %322 = vector.load %arg6[%c2_123, %c0_124, %c0_125] : memref<3x128x32xbf16, #tpu.memory_space<vmem>>, vector<1x128x32xbf16>
    %323 = vector.shape_cast %322 : vector<1x128x32xbf16> to vector<128x32xbf16>
    %cst_126 = arith.constant dense<0.000000e+00> : vector<16x32xf32>
    %324 = tpu.matmul %321, %323, %cst_126 {dimension_numbers = #tpu.dot_dimension_numbers<[1], [0], [0], [1], [0, 0, 1, 1], [], []>} : vector<16x128xbf16>, vector<128x32xbf16>, vector<16x32xf32> -> vector<16x32xf32>
    %325 = vector.broadcast %254 : vector<1x32xf32> to vector<16x32xf32>
    %326 = arith.addf %324, %325 : vector<16x32xf32>
    %327 = arith.addf %326, %312 : vector<16x32xf32>
    %cst_127 = arith.constant dense<0.000000e+00> : vector<16xf32>
    %328 = vector.multi_reduction <add>, %327, %cst_127 [1] : vector<16x32xf32> to vector<16xf32>
    %329 = vector.shape_cast %328 : vector<16xf32> to vector<16x1xf32>
    %cst_128 = arith.constant 3.200000e+01 : f32
    %330 = vector.broadcast %cst_128 : f32 to vector<16x1xf32>
    %331 = arith.divf %329, %330 : vector<16x1xf32>
    %332 = arith.mulf %327, %327 : vector<16x32xf32>
    %cst_129 = arith.constant dense<0.000000e+00> : vector<16xf32>
    %333 = vector.multi_reduction <add>, %332, %cst_129 [1] : vector<16x32xf32> to vector<16xf32>
    %334 = vector.shape_cast %333 : vector<16xf32> to vector<16x1xf32>
    %cst_130 = arith.constant 3.200000e+01 : f32
    %335 = vector.broadcast %cst_130 : f32 to vector<16x1xf32>
    %336 = arith.divf %334, %335 : vector<16x1xf32>
    %337 = arith.mulf %331, %331 : vector<16x1xf32>
    %338 = arith.subf %336, %337 : vector<16x1xf32>
    %cst_131 = arith.constant 0.000000e+00 : f32
    %339 = vector.broadcast %cst_131 : f32 to vector<16x1xf32>
    %340 = arith.maximumf %338, %339 : vector<16x1xf32>
    %341 = vector.broadcast %331 : vector<16x1xf32> to vector<16x32xf32>
    %342 = arith.subf %327, %341 : vector<16x32xf32>
    %cst_132 = arith.constant 9.99999974E-6 : f32
    %343 = vector.broadcast %cst_132 : f32 to vector<16x1xf32>
    %344 = arith.addf %340, %343 : vector<16x1xf32>
    %345 = math.rsqrt %344 : vector<16x1xf32>
    %346 = vector.broadcast %345 : vector<16x1xf32> to vector<16x32xf32>
    %347 = arith.mulf %342, %346 : vector<16x32xf32>
    %348 = vector.broadcast %252 : vector<1x32xf32> to vector<16x32xf32>
    %349 = arith.mulf %347, %348 : vector<16x32xf32>
    %350 = vector.broadcast %253 : vector<1x32xf32> to vector<16x32xf32>
    %351 = arith.addf %349, %350 : vector<16x32xf32>
    %c0_133 = arith.constant 0 : index
    %c0_134 = arith.constant 0 : index
    %352 = vector.load %arg9[%c0_133, %c0_134] : memref<16x32xf32, #tpu.memory_space<vmem>>, vector<16x32xf32>
    tpu.vector_store %arg9[%c0_133, %c0_134], %351 {strides = array<i32>} : memref<16x32xf32, #tpu.memory_space<vmem>>, vector<16x32xf32>,
    return
  }
  func.func @transform_0(%arg0: i32) -> (i32, i32) {
    %c0_i32 = arith.constant 0 : i32
    %c0_i32_0 = arith.constant 0 : i32
    %c0_i32_1 = arith.constant 0 : i32
    return %c0_i32, %c0_i32_0 : i32, i32
  }
  func.func @transform_1(%arg0: i32) -> (i32, i32) {
    %c0_i32 = arith.constant 0 : i32
    %c0_i32_0 = arith.constant 0 : i32
    %c0_i32_1 = arith.constant 0 : i32
    return %c0_i32, %c0_i32_0 : i32, i32
  }
  func.func @transform_2(%arg0: i32) -> (i32, i32, i32, i32) {
    %c0_i32 = arith.constant 0 : i32
    %c0_i32_0 = arith.constant 0 : i32
    %c0_i32_1 = arith.constant 0 : i32
    %c0_i32_2 = arith.constant 0 : i32
    %c0_i32_3 = arith.constant 0 : i32
    return %c0_i32, %c0_i32_0, %c0_i32_1, %c0_i32_2 : i32, i32, i32, i32
  }
  func.func @transform_3(%arg0: i32) -> (i32, i32, i32, i32) {
    %c0_i32 = arith.constant 0 : i32
    %c0_i32_0 = arith.constant 0 : i32
    %c0_i32_1 = arith.constant 0 : i32
    %c0_i32_2 = arith.constant 0 : i32
    %c0_i32_3 = arith.constant 0 : i32
    return %c0_i32, %c0_i32_0, %c0_i32_1, %c0_i32_2 : i32, i32, i32, i32
  }
  func.func @transform_4(%arg0: i32) -> (i32, i32, i32) {
    %c0_i32 = arith.constant 0 : i32
    %c0_i32_0 = arith.constant 0 : i32
    %c0_i32_1 = arith.constant 0 : i32
    %c0_i32_2 = arith.constant 0 : i32
    return %c0_i32, %c0_i32_0, %c0_i32_1 : i32, i32, i32
  }
  func.func @transform_5(%arg0: i32) -> (i32, i32, i32) {
    %c0_i32 = arith.constant 0 : i32
    %c0_i32_0 = arith.constant 0 : i32
    %c0_i32_1 = arith.constant 0 : i32
    %c0_i32_2 = arith.constant 0 : i32
    return %c0_i32, %c0_i32_0, %c0_i32_1 : i32, i32, i32
  }
  func.func @transform_6(%arg0: i32) -> (i32, i32, i32) {
    %c0_i32 = arith.constant 0 : i32
    %c0_i32_0 = arith.constant 0 : i32
    %c0_i32_1 = arith.constant 0 : i32
    %c0_i32_2 = arith.constant 0 : i32
    return %c0_i32, %c0_i32_0, %c0_i32_1 : i32, i32, i32
  }
  func.func @transform_7(%arg0: i32) -> (i32, i32, i32) {
    %c0_i32 = arith.constant 0 : i32
    %c0_i32_0 = arith.constant 0 : i32
    %c0_i32_1 = arith.constant 0 : i32
    %c0_i32_2 = arith.constant 0 : i32
    return %c0_i32, %c0_i32_0, %c0_i32_1 : i32, i32, i32
  }
  func.func @transform_8(%arg0: i32) -> (i32, i32) {
    %c0_i32 = arith.constant 0 : i32
    %c0_i32_0 = arith.constant 0 : i32
    %c0_i32_1 = arith.constant 0 : i32
    return %c0_i32, %c0_i32_0 : i32, i32
  }
}

</mosaic_0001>

<llo_original>
// kernel: tpu_custom_call.1
$region0: #{tpu_custom_call.1}
  #allocation0 [shape = 'u32[]', space=smem, size = 0x4, offset = 0x4, fixed_abs, tag = 'smem constant byte address 0x4 - core index']
  #allocation1 [shape = 'u32[144,128]{1,0:T(1,128)}', space=vmem, size = 0x12000, scoped, tag = 'internal scratch']
  %s0 = inlined_call_operand.vmem [shape: f32[16,32], index: 0, kind: input, shape index: {}]
  %s1 = inlined_call_operand.vmem [shape: f32[1,16], index: 1, kind: input, shape index: {}]
  %s2 = inlined_call_operand.vmem [shape: bf16[3,4,32,24], index: 2, kind: input, shape index: {}]
  %s3 = inlined_call_operand.vmem [shape: bf16[3,4,8,32], index: 3, kind: input, shape index: {}]
  %s4 = inlined_call_operand.vmem [shape: bf16[3,32,128], index: 4, kind: input, shape index: {}]
  %s5 = inlined_call_operand.vmem [shape: bf16[3,128,32], index: 5, kind: input, shape index: {}]
  %s6 = inlined_call_operand.vmem [shape: f32[3,6,32], index: 6, kind: input, shape index: {}]
  %s7 = inlined_call_operand.vmem [shape: f32[3,1,128], index: 7, kind: input, shape index: {}]
  %s8 = inlined_call_operand.hbm [shape: f32[16,32], index: 8, kind: output, shape index: {}]
  %s9 = sld [smem:[#allocation0]]
  $region42: #{tpu_custom_call.1} parent=0
    _
  %s11 = ssub.s32 1, %s9
  %s12 = scalar_select 0, %s11, %s9
  $region1: #{tpu_custom_call.1} parent=0
    #allocation2 [shape = 'u8[8192]{0}', space=vmem, size = 0x2000, scoped, tag = 'output window, operand 0, single buffered']
    #allocation3 [shape = 's32[1]{0}', space=sflag, size = 0x4, scoped, tag = 'scoped memory for tpu_custom_call.1']
    %13 = vsyncpa [#allocation3], 0
    // Predicated region
    $region2: #{tpu_custom_call.1} parent=1 // pred_check
      _
    $region3: #{tpu_custom_call.1} parent=1 // pred_check_branch
      %15 = sbr.rel (0) target = $region5
    $region4: #{tpu_custom_call.1} parent=1 // pred_region
      _
    $region5: #{tpu_custom_call.1} parent=1 // pred_fallthru
      _
    // Predicated region
    $region6: #{tpu_custom_call.1} parent=1 // pred_check
      _
    $region7: #{tpu_custom_call.1} parent=1 // pred_check_branch
      %17 = sbr.rel (0) target = $region9
    $region8: #{tpu_custom_call.1} parent=1 // pred_region
      _
    $region9: #{tpu_custom_call.1} parent=1 // pred_fallthru
      _
    // Predicated region
    $region10: #{tpu_custom_call.1} parent=1 // pred_check
      _
    $region11: #{tpu_custom_call.1} parent=1 // pred_check_branch
      %19 = sbr.rel (0) target = $region13
    $region12: #{tpu_custom_call.1} parent=1 // pred_region
      _
    $region13: #{tpu_custom_call.1} parent=1 // pred_fallthru
      _
    // Predicated region
    $region14: #{tpu_custom_call.1} parent=1 // pred_check
      _
    $region15: #{tpu_custom_call.1} parent=1 // pred_check_branch
      %21 = sbr.rel (0) target = $region17
    $region16: #{tpu_custom_call.1} parent=1 // pred_region
      _
    $region17: #{tpu_custom_call.1} parent=1 // pred_fallthru
      _
    // Predicated region
    $region18: #{tpu_custom_call.1} parent=1 // pred_check
      _
    $region19: #{tpu_custom_call.1} parent=1 // pred_check_branch
      %23 = sbr.rel (0) target = $region21
    $region20: #{tpu_custom_call.1} parent=1 // pred_region
      _
    $region21: #{tpu_custom_call.1} parent=1 // pred_fallthru
      _
    // Predicated region
    $region22: #{tpu_custom_call.1} parent=1 // pred_check
      _
    $region23: #{tpu_custom_call.1} parent=1 // pred_check_branch
      %25 = sbr.rel (0) target = $region25
    $region24: #{tpu_custom_call.1} parent=1 // pred_region
      _
    $region25: #{tpu_custom_call.1} parent=1 // pred_fallthru
      _
    // Predicated region
    $region26: #{tpu_custom_call.1} parent=1 // pred_check
      _
    $region27: #{tpu_custom_call.1} parent=1 // pred_check_branch
      %27 = sbr.rel (0) target = $region29
    $region28: #{tpu_custom_call.1} parent=1 // pred_region
      _
    $region29: #{tpu_custom_call.1} parent=1 // pred_fallthru
      _
    // Predicated region
    $region30: #{tpu_custom_call.1} parent=1 // pred_check
      _
    $region31: #{tpu_custom_call.1} parent=1 // pred_check_branch
      %29 = sbr.rel (0) target = $region33
    $region32: #{tpu_custom_call.1} parent=1 // pred_region
      _
    $region33: #{tpu_custom_call.1} parent=1 // pred_fallthru
      _
    %v31 = vld [vmem:[%s0] sm:$0xff]
    %v32 = vld [vmem:[%s0 + $0x8] sm:$0xff]
    %v33 = vlaneseq
    %v34 = vshrl.u32 %v33, 7
    %v35 = vadd.s32 %v34, 8
    %v36 = vcvt.s32.f32 %v34
    %v37 = vcvt.s32.f32 %v35
    %v38 = vlaneseq
    %v39 = vand.u32 %v38, 127
    %v40 = vcvt.s32.f32 %v39
    %v41 = vadd.f32 %v36, 0.5
    %v42 = vadd.f32 %v37, 0.5
    %v43 = vmul.f32 %v41, 0.125
    %v44 = vmul.f32 %v42, 0.125
    %v45 = vfloor.f32 %v43
    %v46 = vfloor.f32 %v44
    %v47 = vadd.f32 %v40, 0.5
    %v48 = vmul.f32 %v47, 0.125
    %v49 = vfloor.f32 %v48
    %vm50 = vcmp.eq.f32.partialorder %v45, %v49
    %vm51 = vcmp.eq.f32.partialorder %v46, %v49
    %v52 = vld [vmem:[%s1] sm:$0x1]
    %vm53 = vcmp.gt.f32.partialorder %v52, 0.0
    %v54 = vsel %vm53, 1, 0
    %v55 = vlaneseq
    %v56 = vshrl.u32 %v55, 7
    %v57 = vsub.s32 0, %v56
    %v58 = vrot.slane %v54, %v57
    %vm59 = vcmp.eq.s32.totalorder %v58, 1
    %vm60 = vmand %vm50, %vm59
    %vm61 = vmand %vm51, %vm59
    %v62 = vsel %vm60, 0.0, -1e+20
    %v63 = vsel %vm61, 0.0, -1e+20
    %v64 = vld [vmem:[%s2] sm:$0xf]
    %v65 = vld [vmem:[%s2 + $0x4] sm:$0xf]
    %v66 = vld [vmem:[%s2 + $0x8] sm:$0xf]
    %v67 = vld [vmem:[%s2 + $0xc] sm:$0xf]
    %v68 = vld [vmem:[%s2 + $0x10] sm:$0xf]
    %v69 = vld [vmem:[%s2 + $0x14] sm:$0xf]
    %v70 = vld [vmem:[%s2 + $0x18] sm:$0xf]
    %v71 = vld [vmem:[%s2 + $0x1c] sm:$0xf]
    %v72 = vld [vmem:[%s2 + $0x20] sm:$0xf]
    %v73 = vld [vmem:[%s2 + $0x24] sm:$0xf]
    %v74 = vld [vmem:[%s2 + $0x28] sm:$0xf]
    %v75 = vld [vmem:[%s2 + $0x2c] sm:$0xf]
    %v76 = vld [vmem:[%s2 + $0x30] sm:$0xf]
    %v77 = vld [vmem:[%s2 + $0x34] sm:$0xf]
    %v78 = vld [vmem:[%s2 + $0x38] sm:$0xf]
    %v79 = vld [vmem:[%s2 + $0x3c] sm:$0xf]
    %v80 = vld [vmem:[%s3] sm:$0xf]
    %v81 = vld [vmem:[%s3 + $0x4] sm:$0xf]
    %v82 = vld [vmem:[%s3 + $0x8] sm:$0xf]
    %v83 = vld [vmem:[%s3 + $0xc] sm:$0xf]
    %v84 = vld [vmem:[%s6] sm:$0x3f]
    %v85 = vld [vmem:[%s7] sm:$0x1]
    %v86 = vpack.c.bf16 %v32, %v31
    %v91 = vunpack.c.l.b16 %v64
    %v92 = vunpack.c.l.b16 %v65
    %v93 = vunpack.c.l.b16 %v66
    %v94 = vunpack.c.l.b16 %v67
    %v95 = vpack.c.b16 %v92, %v91
    %v96 = vpack.c.b16 %v94, %v93
    %vm99 = vcmask 261120
    %v101 = vsel %vm99, %v86, 0
    %103 = vmatprep.subr.bf16.mxu0 0
    %104 = vmatpush1.bf16.msra.mxu0 0
    %105 = vmatprep.subr.bf16.mxu0 0
    %106 = vmatpush1.bf16.msra.mxu0 0
    %107 = vmatprep.subr.bf16.mxu0 0
    %108 = vmatpush1.bf16.msra.mxu0 0
    %109 = vmatprep.subr.bf16.mxu0 0
    %110 = vmatpush1.bf16.msra.mxu0 0
    %111 = vmatprep.subr.bf16.mxu0 0
    %112 = vmatpush1.bf16.msra.mxu0 0
    %113 = vmatprep.subr.bf16.mxu0 0
    %114 = vmatpush1.bf16.msra.mxu0 0
    %115 = vmatprep.subr.bf16.mxu0 0
    %116 = vmatpush1.bf16.msra.mxu0 %v96
    %117 = vmatprep.subr.bf16.mxu0 0
    %118 = vmatpush1.bf16.msra.mxu0 %v95
    %119 = vmatprep.subr.bf16.mxu0 0
    %120 = vmatpush2.bf16.msra.mxu0 0
    %121 = vmatprep.subr.bf16.mxu0 0
    %122 = vmatpush2.bf16.msra.mxu0 0
    %123 = vmatprep.subr.bf16.mxu0 0
    %124 = vmatpush2.bf16.msra.mxu0 0
    %125 = vmatprep.subr.bf16.mxu0 0
    %126 = vmatpush2.bf16.msra.mxu0 0
    %127 = vmatprep.subr.bf16.mxu0 0
    %128 = vmatpush2.bf16.msra.mxu0 0
    %129 = vmatprep.subr.bf16.mxu0 0
    %130 = vmatpush2.bf16.msra.mxu0 0
    %131 = vmatprep.subr.bf16.mxu0 0
    %132 = vmatpush2.bf16.msra.mxu0 0
    %133 = vmatprep.subr.bf16.mxu0 0
    %134 = vmatpush2.bf16.msra.mxu0 0
    %135 = vmatprep.mubr.bf16.mxu0 0
    %136 = vmatmul.mubr.bf16.gmra.mxu0 %v101
    %v137 = vpop.f32.mrf.mxu0
    %v138 = vadd.f32 0.0, %v137
    %v139 = vpop.f32.mrf.mxu0
    %v140 = vpop.f32.mrf.mxu0
    %v141 = vadd.f32 0.0, %v140
    %v142 = vpop.f32.mrf.mxu0
    %143 = vdwg.mxu0
    %v148 = vunpack.c.l.b16 %v68
    %v149 = vunpack.c.l.b16 %v69
    %v150 = vunpack.c.l.b16 %v70
    %v151 = vunpack.c.l.b16 %v71
    %v152 = vpack.c.b16 %v149, %v148
    %v153 = vpack.c.b16 %v151, %v150
    %156 = vmatprep.subr.bf16.mxu0 0
    %157 = vmatpush1.bf16.msra.mxu0 0
    %158 = vmatprep.subr.bf16.mxu0 0
    %159 = vmatpush1.bf16.msra.mxu0 0
    %160 = vmatprep.subr.bf16.mxu0 0
    %161 = vmatpush1.bf16.msra.mxu0 0
    %162 = vmatprep.subr.bf16.mxu0 0
    %163 = vmatpush1.bf16.msra.mxu0 0
    %164 = vmatprep.subr.bf16.mxu0 0
    %165 = vmatpush1.bf16.msra.mxu0 0
    %166 = vmatprep.subr.bf16.mxu0 0
    %167 = vmatpush1.bf16.msra.mxu0 0
    %168 = vmatprep.subr.bf16.mxu0 0
    %169 = vmatpush1.bf16.msra.mxu0 %v153
    %170 = vmatprep.subr.bf16.mxu0 0
    %171 = vmatpush1.bf16.msra.mxu0 %v152
    %172 = vmatprep.subr.bf16.mxu0 0
    %173 = vmatpush2.bf16.msra.mxu0 0
    %174 = vmatprep.subr.bf16.mxu0 0
    %175 = vmatpush2.bf16.msra.mxu0 0
    %176 = vmatprep.subr.bf16.mxu0 0
    %177 = vmatpush2.bf16.msra.mxu0 0
    %178 = vmatprep.subr.bf16.mxu0 0
    %179 = vmatpush2.bf16.msra.mxu0 0
    %180 = vmatprep.subr.bf16.mxu0 0
    %181 = vmatpush2.bf16.msra.mxu0 0
    %182 = vmatprep.subr.bf16.mxu0 0
    %183 = vmatpush2.bf16.msra.mxu0 0
    %184 = vmatprep.subr.bf16.mxu0 0
    %185 = vmatpush2.bf16.msra.mxu0 0
    %186 = vmatprep.subr.bf16.mxu0 0
    %187 = vmatpush2.bf16.msra.mxu0 0
    %188 = vmatprep.mubr.bf16.mxu0 0
    %189 = vmatmul.mubr.bf16.gmra.mxu0 %v101
    %v190 = vpop.f32.mrf.mxu0
    %v191 = vadd.f32 0.0, %v190
    %v192 = vpop.f32.mrf.mxu0
    %v193 = vpop.f32.mrf.mxu0
    %v194 = vadd.f32 0.0, %v193
    %v195 = vpop.f32.mrf.mxu0
    %196 = vdwg.mxu0
    %v201 = vunpack.c.l.b16 %v72
    %v202 = vunpack.c.l.b16 %v73
    %v203 = vunpack.c.l.b16 %v74
    %v204 = vunpack.c.l.b16 %v75
    %v205 = vpack.c.b16 %v202, %v201
    %v206 = vpack.c.b16 %v204, %v203
    %209 = vmatprep.subr.bf16.mxu0 0
    %210 = vmatpush1.bf16.msra.mxu0 0
    %211 = vmatprep.subr.bf16.mxu0 0
    %212 = vmatpush1.bf16.msra.mxu0 0
    %213 = vmatprep.subr.bf16.mxu0 0
    %214 = vmatpush1.bf16.msra.mxu0 0
    %215 = vmatprep.subr.bf16.mxu0 0
    %216 = vmatpush1.bf16.msra.mxu0 0
    %217 = vmatprep.subr.bf16.mxu0 0
    %218 = vmatpush1.bf16.msra.mxu0 0
    %219 = vmatprep.subr.bf16.mxu0 0
    %220 = vmatpush1.bf16.msra.mxu0 0
    %221 = vmatprep.subr.bf16.mxu0 0
    %222 = vmatpush1.bf16.msra.mxu0 %v206
    %223 = vmatprep.subr.bf16.mxu0 0
    %224 = vmatpush1.bf16.msra.mxu0 %v205
    %225 = vmatprep.subr.bf16.mxu0 0
    %226 = vmatpush2.bf16.msra.mxu0 0
    %227 = vmatprep.subr.bf16.mxu0 0
    %228 = vmatpush2.bf16.msra.mxu0 0
    %229 = vmatprep.subr.bf16.mxu0 0
    %230 = vmatpush2.bf16.msra.mxu0 0
    %231 = vmatprep.subr.bf16.mxu0 0
    %232 = vmatpush2.bf16.msra.mxu0 0
    %233 = vmatprep.subr.bf16.mxu0 0
    %234 = vmatpush2.bf16.msra.mxu0 0
    %235 = vmatprep.subr.bf16.mxu0 0
    %236 = vmatpush2.bf16.msra.mxu0 0
    %237 = vmatprep.subr.bf16.mxu0 0
    %238 = vmatpush2.bf16.msra.mxu0 0
    %239 = vmatprep.subr.bf16.mxu0 0
    %240 = vmatpush2.bf16.msra.mxu0 0
    %241 = vmatprep.mubr.bf16.mxu0 0
    %242 = vmatmul.mubr.bf16.gmra.mxu0 %v101
    %v243 = vpop.f32.mrf.mxu0
    %v244 = vadd.f32 0.0, %v243
    %v245 = vpop.f32.mrf.mxu0
    %v246 = vpop.f32.mrf.mxu0
    %v247 = vadd.f32 0.0, %v246
    %v248 = vpop.f32.mrf.mxu0
    %249 = vdwg.mxu0
    %v254 = vunpack.c.l.b16 %v76
    %v255 = vunpack.c.l.b16 %v77
    %v256 = vunpack.c.l.b16 %v78
    %v257 = vunpack.c.l.b16 %v79
    %v258 = vpack.c.b16 %v255, %v254
    %v259 = vpack.c.b16 %v257, %v256
    %262 = vmatprep.subr.bf16.mxu0 0
    %263 = vmatpush1.bf16.msra.mxu0 0
    %264 = vmatprep.subr.bf16.mxu0 0
    %265 = vmatpush1.bf16.msra.mxu0 0
    %266 = vmatprep.subr.bf16.mxu0 0
    %267 = vmatpush1.bf16.msra.mxu0 0
    %268 = vmatprep.subr.bf16.mxu0 0
    %269 = vmatpush1.bf16.msra.mxu0 0
    %270 = vmatprep.subr.bf16.mxu0 0
    %271 = vmatpush1.bf16.msra.mxu0 0
    %272 = vmatprep.subr.bf16.mxu0 0
    %273 = vmatpush1.bf16.msra.mxu0 0
    %274 = vmatprep.subr.bf16.mxu0 0
    %275 = vmatpush1.bf16.msra.mxu0 %v259
    %276 = vmatprep.subr.bf16.mxu0 0
    %277 = vmatpush1.bf16.msra.mxu0 %v258
    %278 = vmatprep.subr.bf16.mxu0 0
    %279 = vmatpush2.bf16.msra.mxu0 0
    %280 = vmatprep.subr.bf16.mxu0 0
    %281 = vmatpush2.bf16.msra.mxu0 0
    %282 = vmatprep.subr.bf16.mxu0 0
    %283 = vmatpush2.bf16.msra.mxu0 0
    %284 = vmatprep.subr.bf16.mxu0 0
    %285 = vmatpush2.bf16.msra.mxu0 0
    %286 = vmatprep.subr.bf16.mxu0 0
    %287 = vmatpush2.bf16.msra.mxu0 0
    %288 = vmatprep.subr.bf16.mxu0 0
    %289 = vmatpush2.bf16.msra.mxu0 0
    %290 = vmatprep.subr.bf16.mxu0 0
    %291 = vmatpush2.bf16.msra.mxu0 0
    %292 = vmatprep.subr.bf16.mxu0 0
    %293 = vmatpush2.bf16.msra.mxu0 0
    %294 = vmatprep.mubr.bf16.mxu0 0
    %295 = vmatmul.mubr.bf16.gmra.mxu0 %v101
    %v296 = vpop.f32.mrf.mxu0
    %v297 = vadd.f32 0.0, %v296
    %v298 = vpop.f32.mrf.mxu0
    %v299 = vpop.f32.mrf.mxu0
    %v300 = vadd.f32 0.0, %v299
    %v301 = vpop.f32.mrf.mxu0
    %302 = vdwg.mxu0
    %v303 = vpack.c.bf16 %v141, %v138
    %v304 = vpack.c.bf16 %v194, %v191
    %v305 = vpack.c.bf16 %v247, %v244
    %v306 = vpack.c.bf16 %v300, %v297
    %308 = vrot.lane.b32.xlu0 %v303, 120
    %v309 = vpop.permute.xlu0 %308
    %vm310 = vcmask 64512
    %v312 = vsel %vm310, %v303, 0
    %v315 = vsel %vm310, %v309, 0
    %317 = vmatprep.subr.bf16.mxu0 0
    %318 = vmatpush1.bf16.xpose.msra.mxu0 0
    %319 = vmatprep.subr.bf16.mxu0 0
    %320 = vmatpush1.bf16.xpose.msra.mxu0 0
    %321 = vmatprep.subr.bf16.mxu0 0
    %322 = vmatpush1.bf16.xpose.msra.mxu0 0
    %323 = vmatprep.subr.bf16.mxu0 0
    %324 = vmatpush1.bf16.xpose.msra.mxu0 0
    %325 = vmatprep.subr.bf16.mxu0 0
    %326 = vmatpush1.bf16.xpose.msra.mxu0 0
    %327 = vmatprep.subr.bf16.mxu0 0
    %328 = vmatpush1.bf16.xpose.msra.mxu0 0
    %329 = vmatprep.subr.bf16.mxu0 0
    %330 = vmatpush1.bf16.xpose.msra.mxu0 0
    %331 = vmatprep.subr.bf16.mxu0 0
    %332 = vmatpush1.bf16.xpose.msra.mxu0 %v315
    %333 = vmatprep.subr.bf16.mxu0 0
    %334 = vmatpush2.bf16.xpose.msra.mxu0 0
    %335 = vmatprep.subr.bf16.mxu0 0
    %336 = vmatpush2.bf16.xpose.msra.mxu0 0
    %337 = vmatprep.subr.bf16.mxu0 0
    %338 = vmatpush2.bf16.xpose.msra.mxu0 0
    %339 = vmatprep.subr.bf16.mxu0 0
    %340 = vmatpush2.bf16.xpose.msra.mxu0 0
    %341 = vmatprep.subr.bf16.mxu0 0
    %342 = vmatpush2.bf16.xpose.msra.mxu0 0
    %343 = vmatprep.subr.bf16.mxu0 0
    %344 = vmatpush2.bf16.xpose.msra.mxu0 0
    %345 = vmatprep.subr.bf16.mxu0 0
    %346 = vmatpush2.bf16.xpose.msra.mxu0 0
    %347 = vmatprep.subr.bf16.mxu0 0
    %348 = vmatpush2.bf16.xpose.msra.mxu0 0
    %349 = vmatprep.mubr.bf16.mxu0 0
    %350 = vmatmul.mubr.bf16.gmra.mxu0 %v312
    %v351 = vpop.f32.mrf.mxu0
    %v352 = vadd.f32 %v62, %v351
    %v353 = vpop.f32.mrf.mxu0
    %v354 = vpop.f32.mrf.mxu0
    %v355 = vadd.f32 %v63, %v354
    %v356 = vpop.f32.mrf.mxu0
    %357 = vdwg.mxu0
    %359 = vrot.lane.b32.xlu0 %v304, 120
    %v360 = vpop.permute.xlu0 %359
    %v362 = vsel %vm310, %v304, 0
    %v365 = vsel %vm310, %v360, 0
    %367 = vmatprep.subr.bf16.mxu0 0
    %368 = vmatpush1.bf16.xpose.msra.mxu0 0
    %369 = vmatprep.subr.bf16.mxu0 0
    %370 = vmatpush1.bf16.xpose.msra.mxu0 0
    %371 = vmatprep.subr.bf16.mxu0 0
    %372 = vmatpush1.bf16.xpose.msra.mxu0 0
    %373 = vmatprep.subr.bf16.mxu0 0
    %374 = vmatpush1.bf16.xpose.msra.mxu0 0
    %375 = vmatprep.subr.bf16.mxu0 0
    %376 = vmatpush1.bf16.xpose.msra.mxu0 0
    %377 = vmatprep.subr.bf16.mxu0 0
    %378 = vmatpush1.bf16.xpose.msra.mxu0 0
    %379 = vmatprep.subr.bf16.mxu0 0
    %380 = vmatpush1.bf16.xpose.msra.mxu0 0
    %381 = vmatprep.subr.bf16.mxu0 0
    %382 = vmatpush1.bf16.xpose.msra.mxu0 %v365
    %383 = vmatprep.subr.bf16.mxu0 0
    %384 = vmatpush2.bf16.xpose.msra.mxu0 0
    %385 = vmatprep.subr.bf16.mxu0 0
    %386 = vmatpush2.bf16.xpose.msra.mxu0 0
    %387 = vmatprep.subr.bf16.mxu0 0
    %388 = vmatpush2.bf16.xpose.msra.mxu0 0
    %389 = vmatprep.subr.bf16.mxu0 0
    %390 = vmatpush2.bf16.xpose.msra.mxu0 0
    %391 = vmatprep.subr.bf16.mxu0 0
    %392 = vmatpush2.bf16.xpose.msra.mxu0 0
    %393 = vmatprep.subr.bf16.mxu0 0
    %394 = vmatpush2.bf16.xpose.msra.mxu0 0
    %395 = vmatprep.subr.bf16.mxu0 0
    %396 = vmatpush2.bf16.xpose.msra.mxu0 0
    %397 = vmatprep.subr.bf16.mxu0 0
    %398 = vmatpush2.bf16.xpose.msra.mxu0 0
    %399 = vmatprep.mubr.bf16.mxu0 0
    %400 = vmatmul.mubr.bf16.gmra.mxu0 %v362
    %v401 = vpop.f32.mrf.mxu0
    %v402 = vadd.f32 %v62, %v401
    %v403 = vpop.f32.mrf.mxu0
    %v404 = vpop.f32.mrf.mxu0
    %v405 = vadd.f32 %v63, %v404
    %v406 = vpop.f32.mrf.mxu0
    %407 = vdwg.mxu0
    %409 = vrot.lane.b32.xlu0 %v305, 120
    %v410 = vpop.permute.xlu0 %409
    %v412 = vsel %vm310, %v305, 0
    %v415 = vsel %vm310, %v410, 0
    %417 = vmatprep.subr.bf16.mxu0 0
    %418 = vmatpush1.bf16.xpose.msra.mxu0 0
    %419 = vmatprep.subr.bf16.mxu0 0
    %420 = vmatpush1.bf16.xpose.msra.mxu0 0
    %421 = vmatprep.subr.bf16.mxu0 0
    %422 = vmatpush1.bf16.xpose.msra.mxu0 0
    %423 = vmatprep.subr.bf16.mxu0 0
    %424 = vmatpush1.bf16.xpose.msra.mxu0 0
    %425 = vmatprep.subr.bf16.mxu0 0
    %426 = vmatpush1.bf16.xpose.msra.mxu0 0
    %427 = vmatprep.subr.bf16.mxu0 0
    %428 = vmatpush1.bf16.xpose.msra.mxu0 0
    %429 = vmatprep.subr.bf16.mxu0 0
    %430 = vmatpush1.bf16.xpose.msra.mxu0 0
    %431 = vmatprep.subr.bf16.mxu0 0
    %432 = vmatpush1.bf16.xpose.msra.mxu0 %v415
    %433 = vmatprep.subr.bf16.mxu0 0
    %434 = vmatpush2.bf16.xpose.msra.mxu0 0
    %435 = vmatprep.subr.bf16.mxu0 0
    %436 = vmatpush2.bf16.xpose.msra.mxu0 0
    %437 = vmatprep.subr.bf16.mxu0 0
    %438 = vmatpush2.bf16.xpose.msra.mxu0 0
    %439 = vmatprep.subr.bf16.mxu0 0
    %440 = vmatpush2.bf16.xpose.msra.mxu0 0
    %441 = vmatprep.subr.bf16.mxu0 0
    %442 = vmatpush2.bf16.xpose.msra.mxu0 0
    %443 = vmatprep.subr.bf16.mxu0 0
    %444 = vmatpush2.bf16.xpose.msra.mxu0 0
    %445 = vmatprep.subr.bf16.mxu0 0
    %446 = vmatpush2.bf16.xpose.msra.mxu0 0
    %447 = vmatprep.subr.bf16.mxu0 0
    %448 = vmatpush2.bf16.xpose.msra.mxu0 0
    %449 = vmatprep.mubr.bf16.mxu0 0
    %450 = vmatmul.mubr.bf16.gmra.mxu0 %v412
    %v451 = vpop.f32.mrf.mxu0
    %v452 = vadd.f32 %v62, %v451
    %v453 = vpop.f32.mrf.mxu0
    %v454 = vpop.f32.mrf.mxu0
    %v455 = vadd.f32 %v63, %v454
    %v456 = vpop.f32.mrf.mxu0
    %457 = vdwg.mxu0
    %459 = vrot.lane.b32.xlu0 %v306, 120
    %v460 = vpop.permute.xlu0 %459
    %v462 = vsel %vm310, %v306, 0
    %v465 = vsel %vm310, %v460, 0
    %467 = vmatprep.subr.bf16.mxu0 0
    %468 = vmatpush1.bf16.xpose.msra.mxu0 0
    %469 = vmatprep.subr.bf16.mxu0 0
    %470 = vmatpush1.bf16.xpose.msra.mxu0 0
    %471 = vmatprep.subr.bf16.mxu0 0
    %472 = vmatpush1.bf16.xpose.msra.mxu0 0
    %473 = vmatprep.subr.bf16.mxu0 0
    %474 = vmatpush1.bf16.xpose.msra.mxu0 0
    %475 = vmatprep.subr.bf16.mxu0 0
    %476 = vmatpush1.bf16.xpose.msra.mxu0 0
    %477 = vmatprep.subr.bf16.mxu0 0
    %478 = vmatpush1.bf16.xpose.msra.mxu0 0
    %479 = vmatprep.subr.bf16.mxu0 0
    %480 = vmatpush1.bf16.xpose.msra.mxu0 0
    %481 = vmatprep.subr.bf16.mxu0 0
    %482 = vmatpush1.bf16.xpose.msra.mxu0 %v465
    %483 = vmatprep.subr.bf16.mxu0 0
    %484 = vmatpush2.bf16.xpose.msra.mxu0 0
    %485 = vmatprep.subr.bf16.mxu0 0
    %486 = vmatpush2.bf16.xpose.msra.mxu0 0
    %487 = vmatprep.subr.bf16.mxu0 0
    %488 = vmatpush2.bf16.xpose.msra.mxu0 0
    %489 = vmatprep.subr.bf16.mxu0 0
    %490 = vmatpush2.bf16.xpose.msra.mxu0 0
    %491 = vmatprep.subr.bf16.mxu0 0
    %492 = vmatpush2.bf16.xpose.msra.mxu0 0
    %493 = vmatprep.subr.bf16.mxu0 0
    %494 = vmatpush2.bf16.xpose.msra.mxu0 0
    %495 = vmatprep.subr.bf16.mxu0 0
    %496 = vmatpush2.bf16.xpose.msra.mxu0 0
    %497 = vmatprep.subr.bf16.mxu0 0
    %498 = vmatpush2.bf16.xpose.msra.mxu0 0
    %499 = vmatprep.mubr.bf16.mxu0 0
    %500 = vmatmul.mubr.bf16.gmra.mxu0 %v462
    %v501 = vpop.f32.mrf.mxu0
    %v502 = vadd.f32 %v62, %v501
    %v503 = vpop.f32.mrf.mxu0
    %v504 = vpop.f32.mrf.mxu0
    %v505 = vadd.f32 %v63, %v504
    %v506 = vpop.f32.mrf.mxu0
    %507 = vdwg.mxu0
    %vm508 = vcmask 130048
    %v509 = vsel %vm508, %v352, -inf
    %510 = vmax.xlane.f32.xlu0 %v509
    %v511 = vpop.xlane.xlu0 %510
    %v512 = vsel %vm508, %v355, -inf
    %513 = vmax.xlane.f32.xlu0 %v512
    %v514 = vpop.xlane.xlu0 %513
    %v515 = vsel %vm508, %v402, -inf
    %516 = vmax.xlane.f32.xlu0 %v515
    %v517 = vpop.xlane.xlu0 %516
    %v518 = vsel %vm508, %v405, -inf
    %519 = vmax.xlane.f32.xlu0 %v518
    %v520 = vpop.xlane.xlu0 %519
    %v521 = vsel %vm508, %v452, -inf
    %522 = vmax.xlane.f32.xlu0 %v521
    %v523 = vpop.xlane.xlu0 %522
    %v524 = vsel %vm508, %v455, -inf
    %525 = vmax.xlane.f32.xlu0 %v524
    %v526 = vpop.xlane.xlu0 %525
    %v527 = vsel %vm508, %v502, -inf
    %528 = vmax.xlane.f32.xlu0 %v527
    %v529 = vpop.xlane.xlu0 %528
    %v530 = vsel %vm508, %v505, -inf
    %531 = vmax.xlane.f32.xlu0 %v530
    %v532 = vpop.xlane.xlu0 %531
    %v533 = vsub.f32 %v352, %v511
    %v534 = vsub.f32 %v355, %v514
    %v535 = vsub.f32 %v402, %v517
    %v536 = vsub.f32 %v405, %v520
    %v537 = vsub.f32 %v452, %v523
    %v538 = vsub.f32 %v455, %v526
    %v539 = vsub.f32 %v502, %v529
    %v540 = vsub.f32 %v505, %v532
    %v541 = vmul.f32 %v533, 1.442695
    %v542 = vpow.pop %v541
    %v543 = vmul.f32 %v534, 1.442695
    %v544 = vpow.pop %v543
    %v545 = vmul.f32 %v535, 1.442695
    %v546 = vpow.pop %v545
    %v547 = vmul.f32 %v536, 1.442695
    %v548 = vpow.pop %v547
    %v549 = vmul.f32 %v537, 1.442695
    %v550 = vpow.pop %v549
    %v551 = vmul.f32 %v538, 1.442695
    %v552 = vpow.pop %v551
    %v553 = vmul.f32 %v539, 1.442695
    %v554 = vpow.pop %v553
    %v555 = vmul.f32 %v540, 1.442695
    %v556 = vpow.pop %v555
    %v557 = vsel %vm508, %v542, 0.0
    %558 = vadd.xlane.f32.xlu0 %v557
    %v559 = vpop.xlane.xlu0 %558
    %v560 = vsel %vm508, %v544, 0.0
    %561 = vadd.xlane.f32.xlu0 %v560
    %v562 = vpop.xlane.xlu0 %561
    %v563 = vsel %vm508, %v546, 0.0
    %564 = vadd.xlane.f32.xlu0 %v563
    %v565 = vpop.xlane.xlu0 %564
    %v566 = vsel %vm508, %v548, 0.0
    %567 = vadd.xlane.f32.xlu0 %v566
    %v568 = vpop.xlane.xlu0 %567
    %v569 = vsel %vm508, %v550, 0.0
    %570 = vadd.xlane.f32.xlu0 %v569
    %v571 = vpop.xlane.xlu0 %570
    %v572 = vsel %vm508, %v552, 0.0
    %573 = vadd.xlane.f32.xlu0 %v572
    %v574 = vpop.xlane.xlu0 %573
    %v575 = vsel %vm508, %v554, 0.0
    %576 = vadd.xlane.f32.xlu0 %v575
    %v577 = vpop.xlane.xlu0 %576
    %v578 = vsel %vm508, %v556, 0.0
    %579 = vadd.xlane.f32.xlu0 %v578
    %v580 = vpop.xlane.xlu0 %579
    %v581 = vrcp.pop %v559
    %v582 = vrcp.pop %v562
    %v583 = vrcp.pop %v565
    %v584 = vrcp.pop %v568
    %v585 = vrcp.pop %v571
    %v586 = vrcp.pop %v574
    %v587 = vrcp.pop %v577
    %v588 = vrcp.pop %v580
    %v589 = vmul.f32 %v542, %v581
    %v590 = vmul.f32 %v544, %v582
    %v591 = vmul.f32 %v546, %v583
    %v592 = vmul.f32 %v548, %v584
    %v593 = vmul.f32 %v550, %v585
    %v594 = vmul.f32 %v552, %v586
    %v595 = vmul.f32 %v554, %v587
    %v596 = vmul.f32 %v556, %v588
    %v597 = vpack.c.bf16 %v590, %v589
    %v598 = vpack.c.bf16 %v592, %v591
    %v599 = vpack.c.bf16 %v594, %v593
    %v600 = vpack.c.bf16 %v596, %v595
    %601 = vrot.lane.b32.xlu0 %v303, 112
    %v602 = vpop.permute.xlu0 %601
    %v605 = vsel %vm508, %v597, 0
    %607 = vmatprep.subr.bf16.mxu0 0
    %608 = vmatpush1.bf16.msra.mxu0 0
    %609 = vmatprep.subr.bf16.mxu0 0
    %610 = vmatpush1.bf16.msra.mxu0 0
    %611 = vmatprep.subr.bf16.mxu0 0
    %612 = vmatpush1.bf16.msra.mxu0 0
    %613 = vmatprep.subr.bf16.mxu0 0
    %614 = vmatpush1.bf16.msra.mxu0 0
    %615 = vmatprep.subr.bf16.mxu0 0
    %616 = vmatpush1.bf16.msra.mxu0 0
    %617 = vmatprep.subr.bf16.mxu0 0
    %618 = vmatpush1.bf16.msra.mxu0 0
    %619 = vmatprep.subr.bf16.mxu0 0
    %620 = vmatpush1.bf16.msra.mxu0 0
    %621 = vmatprep.subr.bf16.mxu0 0
    %622 = vmatpush1.bf16.msra.mxu0 %v602
    %623 = vmatprep.subr.bf16.mxu0 0
    %624 = vmatpush2.bf16.msra.mxu0 0
    %625 = vmatprep.subr.bf16.mxu0 0
    %626 = vmatpush2.bf16.msra.mxu0 0
    %627 = vmatprep.subr.bf16.mxu0 0
    %628 = vmatpush2.bf16.msra.mxu0 0
    %629 = vmatprep.subr.bf16.mxu0 0
    %630 = vmatpush2.bf16.msra.mxu0 0
    %631 = vmatprep.subr.bf16.mxu0 0
    %632 = vmatpush2.bf16.msra.mxu0 0
    %633 = vmatprep.subr.bf16.mxu0 0
    %634 = vmatpush2.bf16.msra.mxu0 0
    %635 = vmatprep.subr.bf16.mxu0 0
    %636 = vmatpush2.bf16.msra.mxu0 0
    %637 = vmatprep.subr.bf16.mxu0 0
    %638 = vmatpush2.bf16.msra.mxu0 0
    %639 = vmatprep.mubr.bf16.mxu0 0
    %640 = vmatmul.mubr.bf16.gmra.mxu0 %v605
    %v641 = vpop.f32.mrf.mxu0
    %v642 = vadd.f32 0.0, %v641
    %v643 = vpop.f32.mrf.mxu0
    %v644 = vpop.f32.mrf.mxu0
    %v645 = vadd.f32 0.0, %v644
    %v646 = vpop.f32.mrf.mxu0
    %647 = vdwg.mxu0
    %648 = vrot.lane.b32.xlu0 %v304, 112
    %v649 = vpop.permute.xlu0 %648
    %v652 = vsel %vm508, %v598, 0
    %654 = vmatprep.subr.bf16.mxu0 0
    %655 = vmatpush1.bf16.msra.mxu0 0
    %656 = vmatprep.subr.bf16.mxu0 0
    %657 = vmatpush1.bf16.msra.mxu0 0
    %658 = vmatprep.subr.bf16.mxu0 0
    %659 = vmatpush1.bf16.msra.mxu0 0
    %660 = vmatprep.subr.bf16.mxu0 0
    %661 = vmatpush1.bf16.msra.mxu0 0
    %662 = vmatprep.subr.bf16.mxu0 0
    %663 = vmatpush1.bf16.msra.mxu0 0
    %664 = vmatprep.subr.bf16.mxu0 0
    %665 = vmatpush1.bf16.msra.mxu0 0
    %666 = vmatprep.subr.bf16.mxu0 0
    %667 = vmatpush1.bf16.msra.mxu0 0
    %668 = vmatprep.subr.bf16.mxu0 0
    %669 = vmatpush1.bf16.msra.mxu0 %v649
    %670 = vmatprep.subr.bf16.mxu0 0
    %671 = vmatpush2.bf16.msra.mxu0 0
    %672 = vmatprep.subr.bf16.mxu0 0
    %673 = vmatpush2.bf16.msra.mxu0 0
    %674 = vmatprep.subr.bf16.mxu0 0
    %675 = vmatpush2.bf16.msra.mxu0 0
    %676 = vmatprep.subr.bf16.mxu0 0
    %677 = vmatpush2.bf16.msra.mxu0 0
    %678 = vmatprep.subr.bf16.mxu0 0
    %679 = vmatpush2.bf16.msra.mxu0 0
    %680 = vmatprep.subr.bf16.mxu0 0
    %681 = vmatpush2.bf16.msra.mxu0 0
    %682 = vmatprep.subr.bf16.mxu0 0
    %683 = vmatpush2.bf16.msra.mxu0 0
    %684 = vmatprep.subr.bf16.mxu0 0
    %685 = vmatpush2.bf16.msra.mxu0 0
    %686 = vmatprep.mubr.bf16.mxu0 0
    %687 = vmatmul.mubr.bf16.gmra.mxu0 %v652
    %v688 = vpop.f32.mrf.mxu0
    %v689 = vadd.f32 0.0, %v688
    %v690 = vpop.f32.mrf.mxu0
    %v691 = vpop.f32.mrf.mxu0
    %v692 = vadd.f32 0.0, %v691
    %v693 = vpop.f32.mrf.mxu0
    %694 = vdwg.mxu0
    %695 = vrot.lane.b32.xlu0 %v305, 112
    %v696 = vpop.permute.xlu0 %695
    %v699 = vsel %vm508, %v599, 0
    %701 = vmatprep.subr.bf16.mxu0 0
    %702 = vmatpush1.bf16.msra.mxu0 0
    %703 = vmatprep.subr.bf16.mxu0 0
    %704 = vmatpush1.bf16.msra.mxu0 0
    %705 = vmatprep.subr.bf16.mxu0 0
    %706 = vmatpush1.bf16.msra.mxu0 0
    %707 = vmatprep.subr.bf16.mxu0 0
    %708 = vmatpush1.bf16.msra.mxu0 0
    %709 = vmatprep.subr.bf16.mxu0 0
    %710 = vmatpush1.bf16.msra.mxu0 0
    %711 = vmatprep.subr.bf16.mxu0 0
    %712 = vmatpush1.bf16.msra.mxu0 0
    %713 = vmatprep.subr.bf16.mxu0 0
    %714 = vmatpush1.bf16.msra.mxu0 0
    %715 = vmatprep.subr.bf16.mxu0 0
    %716 = vmatpush1.bf16.msra.mxu0 %v696
    %717 = vmatprep.subr.bf16.mxu0 0
    %718 = vmatpush2.bf16.msra.mxu0 0
    %719 = vmatprep.subr.bf16.mxu0 0
    %720 = vmatpush2.bf16.msra.mxu0 0
    %721 = vmatprep.subr.bf16.mxu0 0
    %722 = vmatpush2.bf16.msra.mxu0 0
    %723 = vmatprep.subr.bf16.mxu0 0
    %724 = vmatpush2.bf16.msra.mxu0 0
    %725 = vmatprep.subr.bf16.mxu0 0
    %726 = vmatpush2.bf16.msra.mxu0 0
    %727 = vmatprep.subr.bf16.mxu0 0
    %728 = vmatpush2.bf16.msra.mxu0 0
    %729 = vmatprep.subr.bf16.mxu0 0
    %730 = vmatpush2.bf16.msra.mxu0 0
    %731 = vmatprep.subr.bf16.mxu0 0
    %732 = vmatpush2.bf16.msra.mxu0 0
    %733 = vmatprep.mubr.bf16.mxu0 0
    %734 = vmatmul.mubr.bf16.gmra.mxu0 %v699
    %v735 = vpop.f32.mrf.mxu0
    %v736 = vadd.f32 0.0, %v735
    %v737 = vpop.f32.mrf.mxu0
    %v738 = vpop.f32.mrf.mxu0
    %v739 = vadd.f32 0.0, %v738
    %v740 = vpop.f32.mrf.mxu0
    %741 = vdwg.mxu0
    %742 = vrot.lane.b32.xlu0 %v306, 112
    %v743 = vpop.permute.xlu0 %742
    %v746 = vsel %vm508, %v600, 0
    %748 = vmatprep.subr.bf16.mxu0 0
    %749 = vmatpush1.bf16.msra.mxu0 0
    %750 = vmatprep.subr.bf16.mxu0 0
    %751 = vmatpush1.bf16.msra.mxu0 0
    %752 = vmatprep.subr.bf16.mxu0 0
    %753 = vmatpush1.bf16.msra.mxu0 0
    %754 = vmatprep.subr.bf16.mxu0 0
    %755 = vmatpush1.bf16.msra.mxu0 0
    %756 = vmatprep.subr.bf16.mxu0 0
    %757 = vmatpush1.bf16.msra.mxu0 0
    %758 = vmatprep.subr.bf16.mxu0 0
    %759 = vmatpush1.bf16.msra.mxu0 0
    %760 = vmatprep.subr.bf16.mxu0 0
    %761 = vmatpush1.bf16.msra.mxu0 0
    %762 = vmatprep.subr.bf16.mxu0 0
    %763 = vmatpush1.bf16.msra.mxu0 %v743
    %764 = vmatprep.subr.bf16.mxu0 0
    %765 = vmatpush2.bf16.msra.mxu0 0
    %766 = vmatprep.subr.bf16.mxu0 0
    %767 = vmatpush2.bf16.msra.mxu0 0
    %768 = vmatprep.subr.bf16.mxu0 0
    %769 = vmatpush2.bf16.msra.mxu0 0
    %770 = vmatprep.subr.bf16.mxu0 0
    %771 = vmatpush2.bf16.msra.mxu0 0
    %772 = vmatprep.subr.bf16.mxu0 0
    %773 = vmatpush2.bf16.msra.mxu0 0
    %774 = vmatprep.subr.bf16.mxu0 0
    %775 = vmatpush2.bf16.msra.mxu0 0
    %776 = vmatprep.subr.bf16.mxu0 0
    %777 = vmatpush2.bf16.msra.mxu0 0
    %778 = vmatprep.subr.bf16.mxu0 0
    %779 = vmatpush2.bf16.msra.mxu0 0
    %780 = vmatprep.mubr.bf16.mxu0 0
    %781 = vmatmul.mubr.bf16.gmra.mxu0 %v746
    %v782 = vpop.f32.mrf.mxu0
    %v783 = vadd.f32 0.0, %v782
    %v784 = vpop.f32.mrf.mxu0
    %v785 = vpop.f32.mrf.mxu0
    %v786 = vadd.f32 0.0, %v785
    %v787 = vpop.f32.mrf.mxu0
    %788 = vdwg.mxu0
    %v789 = vpack.c.bf16 %v645, %v642
    %v790 = vpack.c.bf16 %v692, %v689
    %v791 = vpack.c.bf16 %v739, %v736
    %v792 = vpack.c.bf16 %v786, %v783
    %v794 = vsel %vm310, %v789, 0
    %vm796 = vcmask 1043456
    %v798 = vsel %vm796, %v80, 0
    %800 = vmatprep.subr.bf16.mxu0 0
    %801 = vmatpush1.bf16.msra.mxu0 0
    %802 = vmatprep.subr.bf16.mxu0 0
    %803 = vmatpush1.bf16.msra.mxu0 0
    %804 = vmatprep.subr.bf16.mxu0 0
    %805 = vmatpush1.bf16.msra.mxu0 0
    %806 = vmatprep.subr.bf16.mxu0 0
    %807 = vmatpush1.bf16.msra.mxu0 0
    %808 = vmatprep.subr.bf16.mxu0 0
    %809 = vmatpush1.bf16.msra.mxu0 0
    %810 = vmatprep.subr.bf16.mxu0 0
    %811 = vmatpush1.bf16.msra.mxu0 0
    %812 = vmatprep.subr.bf16.mxu0 0
    %813 = vmatpush1.bf16.msra.mxu0 0
    %814 = vmatprep.subr.bf16.mxu0 0
    %815 = vmatpush1.bf16.msra.mxu0 %v798
    %816 = vmatprep.subr.bf16.mxu0 0
    %817 = vmatpush2.bf16.msra.mxu0 0
    %818 = vmatprep.subr.bf16.mxu0 0
    %819 = vmatpush2.bf16.msra.mxu0 0
    %820 = vmatprep.subr.bf16.mxu0 0
    %821 = vmatpush2.bf16.msra.mxu0 0
    %822 = vmatprep.subr.bf16.mxu0 0
    %823 = vmatpush2.bf16.msra.mxu0 0
    %824 = vmatprep.subr.bf16.mxu0 0
    %825 = vmatpush2.bf16.msra.mxu0 0
    %826 = vmatprep.subr.bf16.mxu0 0
    %827 = vmatpush2.bf16.msra.mxu0 0
    %828 = vmatprep.subr.bf16.mxu0 0
    %829 = vmatpush2.bf16.msra.mxu0 0
    %830 = vmatprep.subr.bf16.mxu0 0
    %831 = vmatpush2.bf16.msra.mxu0 0
    %832 = vmatprep.mubr.bf16.mxu0 0
    %833 = vmatmul.mubr.bf16.gmra.mxu0 %v794
    %v834 = vpop.f32.mrf.mxu0
    %v835 = vadd.f32 0.0, %v834
    %v836 = vpop.f32.mrf.mxu0
    %v837 = vpop.f32.mrf.mxu0
    %v838 = vadd.f32 0.0, %v837
    %v839 = vpop.f32.mrf.mxu0
    %840 = vdwg.mxu0
    %v842 = vsel %vm310, %v790, 0
    %v845 = vsel %vm796, %v81, 0
    %847 = vmatprep.subr.bf16.mxu0 0
    %848 = vmatpush1.bf16.msra.mxu0 0
    %849 = vmatprep.subr.bf16.mxu0 0
    %850 = vmatpush1.bf16.msra.mxu0 0
    %851 = vmatprep.subr.bf16.mxu0 0
    %852 = vmatpush1.bf16.msra.mxu0 0
    %853 = vmatprep.subr.bf16.mxu0 0
    %854 = vmatpush1.bf16.msra.mxu0 0
    %855 = vmatprep.subr.bf16.mxu0 0
    %856 = vmatpush1.bf16.msra.mxu0 0
    %857 = vmatprep.subr.bf16.mxu0 0
    %858 = vmatpush1.bf16.msra.mxu0 0
    %859 = vmatprep.subr.bf16.mxu0 0
    %860 = vmatpush1.bf16.msra.mxu0 0
    %861 = vmatprep.subr.bf16.mxu0 0
    %862 = vmatpush1.bf16.msra.mxu0 %v845
    %863 = vmatprep.subr.bf16.mxu0 0
    %864 = vmatpush2.bf16.msra.mxu0 0
    %865 = vmatprep.subr.bf16.mxu0 0
    %866 = vmatpush2.bf16.msra.mxu0 0
    %867 = vmatprep.subr.bf16.mxu0 0
    %868 = vmatpush2.bf16.msra.mxu0 0
    %869 = vmatprep.subr.bf16.mxu0 0
    %870 = vmatpush2.bf16.msra.mxu0 0
    %871 = vmatprep.subr.bf16.mxu0 0
    %872 = vmatpush2.bf16.msra.mxu0 0
    %873 = vmatprep.subr.bf16.mxu0 0
    %874 = vmatpush2.bf16.msra.mxu0 0
    %875 = vmatprep.subr.bf16.mxu0 0
    %876 = vmatpush2.bf16.msra.mxu0 0
    %877 = vmatprep.subr.bf16.mxu0 0
    %878 = vmatpush2.bf16.msra.mxu0 0
    %879 = vmatprep.mubr.bf16.mxu0 0
    %880 = vmatmul.mubr.bf16.gmra.mxu0 %v842
    %v881 = vpop.f32.mrf.mxu0
    %v882 = vadd.f32 0.0, %v881
    %v883 = vpop.f32.mrf.mxu0
    %v884 = vpop.f32.mrf.mxu0
    %v885 = vadd.f32 0.0, %v884
    %v886 = vpop.f32.mrf.mxu0
    %887 = vdwg.mxu0
    %v889 = vsel %vm310, %v791, 0
    %v892 = vsel %vm796, %v82, 0
    %894 = vmatprep.subr.bf16.mxu0 0
    %895 = vmatpush1.bf16.msra.mxu0 0
    %896 = vmatprep.subr.bf16.mxu0 0
    %897 = vmatpush1.bf16.msra.mxu0 0
    %898 = vmatprep.subr.bf16.mxu0 0
    %899 = vmatpush1.bf16.msra.mxu0 0
    %900 = vmatprep.subr.bf16.mxu0 0
    %901 = vmatpush1.bf16.msra.mxu0 0
    %902 = vmatprep.subr.bf16.mxu0 0
    %903 = vmatpush1.bf16.msra.mxu0 0
    %904 = vmatprep.subr.bf16.mxu0 0
    %905 = vmatpush1.bf16.msra.mxu0 0
    %906 = vmatprep.subr.bf16.mxu0 0
    %907 = vmatpush1.bf16.msra.mxu0 0
    %908 = vmatprep.subr.bf16.mxu0 0
    %909 = vmatpush1.bf16.msra.mxu0 %v892
    %910 = vmatprep.subr.bf16.mxu0 0
    %911 = vmatpush2.bf16.msra.mxu0 0
    %912 = vmatprep.subr.bf16.mxu0 0
    %913 = vmatpush2.bf16.msra.mxu0 0
    %914 = vmatprep.subr.bf16.mxu0 0
    %915 = vmatpush2.bf16.msra.mxu0 0
    %916 = vmatprep.subr.bf16.mxu0 0
    %917 = vmatpush2.bf16.msra.mxu0 0
    %918 = vmatprep.subr.bf16.mxu0 0
    %919 = vmatpush2.bf16.msra.mxu0 0
    %920 = vmatprep.subr.bf16.mxu0 0
    %921 = vmatpush2.bf16.msra.mxu0 0
    %922 = vmatprep.subr.bf16.mxu0 0
    %923 = vmatpush2.bf16.msra.mxu0 0
    %924 = vmatprep.subr.bf16.mxu0 0
    %925 = vmatpush2.bf16.msra.mxu0 0
    %926 = vmatprep.mubr.bf16.mxu0 0
    %927 = vmatmul.mubr.bf16.gmra.mxu0 %v889
    %v928 = vpop.f32.mrf.mxu0
    %v929 = vadd.f32 0.0, %v928
    %v930 = vpop.f32.mrf.mxu0
    %v931 = vpop.f32.mrf.mxu0
    %v932 = vadd.f32 0.0, %v931
    %v933 = vpop.f32.mrf.mxu0
    %934 = vdwg.mxu0
    %v936 = vsel %vm310, %v792, 0
    %v939 = vsel %vm796, %v83, 0
    %941 = vmatprep.subr.bf16.mxu0 0
    %942 = vmatpush1.bf16.msra.mxu0 0
    %943 = vmatprep.subr.bf16.mxu0 0
    %944 = vmatpush1.bf16.msra.mxu0 0
    %945 = vmatprep.subr.bf16.mxu0 0
    %946 = vmatpush1.bf16.msra.mxu0 0
    %947 = vmatprep.subr.bf16.mxu0 0
    %948 = vmatpush1.bf16.msra.mxu0 0
    %949 = vmatprep.subr.bf16.mxu0 0
    %950 = vmatpush1.bf16.msra.mxu0 0
    %951 = vmatprep.subr.bf16.mxu0 0
    %952 = vmatpush1.bf16.msra.mxu0 0
    %953 = vmatprep.subr.bf16.mxu0 0
    %954 = vmatpush1.bf16.msra.mxu0 0
    %955 = vmatprep.subr.bf16.mxu0 0
    %956 = vmatpush1.bf16.msra.mxu0 %v939
    %957 = vmatprep.subr.bf16.mxu0 0
    %958 = vmatpush2.bf16.msra.mxu0 0
    %959 = vmatprep.subr.bf16.mxu0 0
    %960 = vmatpush2.bf16.msra.mxu0 0
    %961 = vmatprep.subr.bf16.mxu0 0
    %962 = vmatpush2.bf16.msra.mxu0 0
    %963 = vmatprep.subr.bf16.mxu0 0
    %964 = vmatpush2.bf16.msra.mxu0 0
    %965 = vmatprep.subr.bf16.mxu0 0
    %966 = vmatpush2.bf16.msra.mxu0 0
    %967 = vmatprep.subr.bf16.mxu0 0
    %968 = vmatpush2.bf16.msra.mxu0 0
    %969 = vmatprep.subr.bf16.mxu0 0
    %970 = vmatpush2.bf16.msra.mxu0 0
    %971 = vmatprep.subr.bf16.mxu0 0
    %972 = vmatpush2.bf16.msra.mxu0 0
    %973 = vmatprep.mubr.bf16.mxu0 0
    %974 = vmatmul.mubr.bf16.gmra.mxu0 %v936
    %v975 = vpop.f32.mrf.mxu0
    %v976 = vadd.f32 0.0, %v975
    %v977 = vpop.f32.mrf.mxu0
    %v978 = vpop.f32.mrf.mxu0
    %v979 = vadd.f32 0.0, %v978
    %v980 = vpop.f32.mrf.mxu0
    %981 = vdwg.mxu0
    %v982 = vsel %vm99, %v835, 0.0
    %v983 = vsel %vm99, %v882, 0.0
    %v984 = vadd.f32 %v982, %v983
    %v985 = vsel %vm99, %v929, 0.0
    %v986 = vadd.f32 %v984, %v985
    %v987 = vsel %vm99, %v976, 0.0
    %v988 = vadd.f32 %v986, %v987
    %v989 = vsel %vm99, %v838, 0.0
    %v990 = vsel %vm99, %v885, 0.0
    %v991 = vadd.f32 %v989, %v990
    %v992 = vsel %vm99, %v932, 0.0
    %v993 = vadd.f32 %v991, %v992
    %v994 = vsel %vm99, %v979, 0.0
    %v995 = vadd.f32 %v993, %v994
    %v996 = vlaneseq
    %v997 = vshrl.u32 %v996, 7
    %v998 = vsub.s32 0, %v997
    %v999 = vrot.slane %v84, %v998
    %v1000 = vadd.f32 %v988, %v999
    %v1001 = vadd.f32 %v995, %v999
    %v1002 = vadd.f32 %v1000, %v31
    %v1003 = vadd.f32 %v1001, %v32
    %v1004 = vsel %vm99, %v1002, 0.0
    %1005 = vadd.xlane.f32.xlu0 %v1004
    %v1006 = vpop.xlane.xlu0 %1005
    %v1007 = vsel %vm99, %v1003, 0.0
    %1008 = vadd.xlane.f32.xlu0 %v1007
    %v1009 = vpop.xlane.xlu0 %1008
    %v1010 = vrcp.pop 32.0
    %v1011 = vmul.f32 %v1006, %v1010
    %v1012 = vmul.f32 %v1009, %v1010
    %v1013 = vmul.f32 %v1002, %v1002
    %v1014 = vmul.f32 %v1003, %v1003
    %v1015 = vsel %vm99, %v1013, 0.0
    %1016 = vadd.xlane.f32.xlu0 %v1015
    %v1017 = vpop.xlane.xlu0 %1016
    %v1018 = vsel %vm99, %v1014, 0.0
    %1019 = vadd.xlane.f32.xlu0 %v1018
    %v1020 = vpop.xlane.xlu0 %1019
    %v1021 = vmul.f32 %v1017, %v1010
    %v1022 = vmul.f32 %v1020, %v1010
    %v1023 = vmul.f32 %v1011, %v1011
    %v1024 = vmul.f32 %v1012, %v1012
    %v1025 = vsub.f32 %v1021, %v1023
    %v1026 = vsub.f32 %v1022, %v1024
    %v1027 = vmax.f32 %v1025, 0.0
    %v1028 = vmax.f32 %v1026, 0.0
    %v1029 = vsub.f32 %v1002, %v1011
    %v1030 = vsub.f32 %v1003, %v1012
    %v1031 = vadd.f32 %v1027, 1e-05
    %v1032 = vadd.f32 %v1028, 1e-05
    %v1033 = vrsqrt.pop %v1031
    %v1034 = vrsqrt.pop %v1032
    %v1035 = vmul.f32 %v1029, %v1033
    %v1036 = vmul.f32 %v1030, %v1034
    %v1037 = vlaneseq
    %v1038 = vshrl.u32 %v1037, 7
    %v1039 = vsub.s32 1, %v1038
    %v1040 = vrot.slane %v84, %v1039
    %v1041 = vmul.f32 %v1035, %v1040
    %v1042 = vmul.f32 %v1036, %v1040
    %v1043 = vlaneseq
    %v1044 = vshrl.u32 %v1043, 7
    %v1045 = vsub.s32 2, %v1044
    %v1046 = vrot.slane %v84, %v1045
    %v1047 = vadd.f32 %v1041, %v1046
    %v1048 = vadd.f32 %v1042, %v1046
    %v1049 = vpack.c.bf16 %v1048, %v1047
    %v1050 = vld [vmem:[%s4] sm:$0xf]
    %v1051 = vld [vmem:[%s4 + $0x4] sm:$0xf]
    %v1052 = vld [vmem:[%s4 + $0x8] sm:$0xf]
    %v1053 = vld [vmem:[%s4 + $0xc] sm:$0xf]
    %v1055 = vlaneseq
    %v1056 = vshrl.u32 %v1055, 7
    %v1057 = vsub.s32 0, %v1056
    %v1058 = vrot.slane %v85, %v1057
    %v1064 = vunpack.c.l.b16 %v1050
    %v1065 = vunpack.c.l.b16 %v1051
    %v1066 = vunpack.c.l.b16 %v1052
    %v1067 = vunpack.c.l.b16 %v1053
    %v1068 = vpack.c.b16 %v1065, %v1064
    %v1069 = vpack.c.b16 %v1067, %v1066
    %v1073 = vsel %vm99, %v1049, 0
    %1075 = vmatprep.subr.bf16.mxu0 0
    %1076 = vmatpush1.bf16.msra.mxu0 0
    %1077 = vmatprep.subr.bf16.mxu0 0
    %1078 = vmatpush1.bf16.msra.mxu0 0
    %1079 = vmatprep.subr.bf16.mxu0 0
    %1080 = vmatpush1.bf16.msra.mxu0 0
    %1081 = vmatprep.subr.bf16.mxu0 0
    %1082 = vmatpush1.bf16.msra.mxu0 0
    %1083 = vmatprep.subr.bf16.mxu0 0
    %1084 = vmatpush1.bf16.msra.mxu0 0
    %1085 = vmatprep.subr.bf16.mxu0 0
    %1086 = vmatpush1.bf16.msra.mxu0 0
    %1087 = vmatprep.subr.bf16.mxu0 0
    %1088 = vmatpush1.bf16.msra.mxu0 %v1069
    %1089 = vmatprep.subr.bf16.mxu0 0
    %1090 = vmatpush1.bf16.msra.mxu0 %v1068
    %1091 = vmatprep.subr.bf16.mxu0 0
    %1092 = vmatpush2.bf16.msra.mxu0 0
    %1093 = vmatprep.subr.bf16.mxu0 0
    %1094 = vmatpush2.bf16.msra.mxu0 0
    %1095 = vmatprep.subr.bf16.mxu0 0
    %1096 = vmatpush2.bf16.msra.mxu0 0
    %1097 = vmatprep.subr.bf16.mxu0 0
    %1098 = vmatpush2.bf16.msra.mxu0 0
    %1099 = vmatprep.subr.bf16.mxu0 0
    %1100 = vmatpush2.bf16.msra.mxu0 0
    %1101 = vmatprep.subr.bf16.mxu0 0
    %1102 = vmatpush2.bf16.msra.mxu0 0
    %1103 = vmatprep.subr.bf16.mxu0 0
    %1104 = vmatpush2.bf16.msra.mxu0 0
    %1105 = vmatprep.subr.bf16.mxu0 0
    %1106 = vmatpush2.bf16.msra.mxu0 0
    %1107 = vmatprep.mubr.bf16.mxu0 0
    %1108 = vmatmul.mubr.bf16.gmra.mxu0 %v1073
    %v1109 = vpop.f32.mrf.mxu0
    %v1110 = vadd.f32 %v1058, %v1109
    %v1111 = vpop.f32.mrf.mxu0
    %v1112 = vpop.f32.mrf.mxu0
    %v1113 = vadd.f32 %v1058, %v1112
    %v1114 = vpop.f32.mrf.mxu0
    %1115 = vdwg.mxu0
    %v1116 = vmax.f32 %v1110, 0.0
    %v1117 = vmax.f32 %v1113, 0.0
    %v1118 = vpack.c.bf16 %v1117, %v1116
    %v1119 = vld [vmem:[%s5] sm:$0xf]
    %v1120 = vld [vmem:[%s5 + $0x4] sm:$0xf]
    %v1121 = vld [vmem:[%s5 + $0x8] sm:$0xf]
    %v1122 = vld [vmem:[%s5 + $0xc] sm:$0xf]
    %v1123 = vld [vmem:[%s5 + $0x10] sm:$0xf]
    %v1124 = vld [vmem:[%s5 + $0x14] sm:$0xf]
    %v1125 = vld [vmem:[%s5 + $0x18] sm:$0xf]
    %v1126 = vld [vmem:[%s5 + $0x1c] sm:$0xf]
    %v1127 = vld [vmem:[%s5 + $0x20] sm:$0xf]
    %v1128 = vld [vmem:[%s5 + $0x24] sm:$0xf]
    %v1129 = vld [vmem:[%s5 + $0x28] sm:$0xf]
    %v1130 = vld [vmem:[%s5 + $0x2c] sm:$0xf]
    %v1131 = vld [vmem:[%s5 + $0x30] sm:$0xf]
    %v1132 = vld [vmem:[%s5 + $0x34] sm:$0xf]
    %v1133 = vld [vmem:[%s5 + $0x38] sm:$0xf]
    %v1134 = vld [vmem:[%s5 + $0x3c] sm:$0xf]
    %v1135 = vlaneseq
    %v1136 = vshrl.u32 %v1135, 7
    %v1137 = vsub.s32 5, %v1136
    %v1138 = vrot.slane %v84, %v1137
    %v1155 = vunpack.c.l.b16 %v1119
    %v1156 = vunpack.c.l.b16 %v1120
    %v1157 = vunpack.c.l.b16 %v1121
    %v1158 = vunpack.c.l.b16 %v1122
    %v1159 = vunpack.c.l.b16 %v1123
    %v1160 = vunpack.c.l.b16 %v1124
    %v1161 = vunpack.c.l.b16 %v1125
    %v1162 = vunpack.c.l.b16 %v1126
    %v1163 = vunpack.c.l.b16 %v1127
    %v1164 = vunpack.c.l.b16 %v1128
    %v1165 = vunpack.c.l.b16 %v1129
    %v1166 = vunpack.c.l.b16 %v1130
    %v1167 = vunpack.c.l.b16 %v1131
    %v1168 = vunpack.c.l.b16 %v1132
    %v1169 = vunpack.c.l.b16 %v1133
    %v1170 = vunpack.c.l.b16 %v1134
    %v1171 = vpack.c.b16 %v1156, %v1155
    %v1172 = vpack.c.b16 %v1158, %v1157
    %v1173 = vpack.c.b16 %v1160, %v1159
    %v1174 = vpack.c.b16 %v1162, %v1161
    %v1175 = vpack.c.b16 %v1164, %v1163
    %v1176 = vpack.c.b16 %v1166, %v1165
    %v1177 = vpack.c.b16 %v1168, %v1167
    %v1178 = vpack.c.b16 %v1170, %v1169
    %1187 = vmatprep.subr.bf16.mxu0 0
    %1188 = vmatpush1.bf16.msra.mxu0 %v1178
    %1189 = vmatprep.subr.bf16.mxu0 0
    %1190 = vmatpush1.bf16.msra.mxu0 %v1177
    %1191 = vmatprep.subr.bf16.mxu0 0
    %1192 = vmatpush1.bf16.msra.mxu0 %v1176
    %1193 = vmatprep.subr.bf16.mxu0 0
    %1194 = vmatpush1.bf16.msra.mxu0 %v1175
    %1195 = vmatprep.subr.bf16.mxu0 0
    %1196 = vmatpush1.bf16.msra.mxu0 %v1174
    %1197 = vmatprep.subr.bf16.mxu0 0
    %1198 = vmatpush1.bf16.msra.mxu0 %v1173
    %1199 = vmatprep.subr.bf16.mxu0 0
    %1200 = vmatpush1.bf16.msra.mxu0 %v1172
    %1201 = vmatprep.subr.bf16.mxu0 0
    %1202 = vmatpush1.bf16.msra.mxu0 %v1171
    %1203 = vmatprep.subr.bf16.mxu0 0
    %1204 = vmatpush2.bf16.msra.mxu0 0
    %1205 = vmatprep.subr.bf16.mxu0 0
    %1206 = vmatpush2.bf16.msra.mxu0 0
    %1207 = vmatprep.subr.bf16.mxu0 0
    %1208 = vmatpush2.bf16.msra.mxu0 0
    %1209 = vmatprep.subr.bf16.mxu0 0
    %1210 = vmatpush2.bf16.msra.mxu0 0
    %1211 = vmatprep.subr.bf16.mxu0 0
    %1212 = vmatpush2.bf16.msra.mxu0 0
    %1213 = vmatprep.subr.bf16.mxu0 0
    %1214 = vmatpush2.bf16.msra.mxu0 0
    %1215 = vmatprep.subr.bf16.mxu0 0
    %1216 = vmatpush2.bf16.msra.mxu0 0
    %1217 = vmatprep.subr.bf16.mxu0 0
    %1218 = vmatpush2.bf16.msra.mxu0 0
    %1219 = vmatprep.mubr.bf16.mxu0 0
    %1220 = vmatmul.mubr.bf16.gmra.mxu0 %v1118
    %v1221 = vpop.f32.mrf.mxu0
    %v1222 = vadd.f32 %v1138, %v1221
    %v1223 = vpop.f32.mrf.mxu0
    %v1224 = vpop.f32.mrf.mxu0
    %v1225 = vadd.f32 %v1138, %v1224
    %v1226 = vpop.f32.mrf.mxu0
    %1227 = vdwg.mxu0
    %v1228 = vadd.f32 %v1222, %v1047
    %v1229 = vadd.f32 %v1225, %v1048
    %v1230 = vsel %vm99, %v1228, 0.0
    %1231 = vadd.xlane.f32.xlu0 %v1230
    %v1232 = vpop.xlane.xlu0 %1231
    %v1233 = vsel %vm99, %v1229, 0.0
    %1234 = vadd.xlane.f32.xlu0 %v1233
    %v1235 = vpop.xlane.xlu0 %1234
    %v1236 = vmul.f32 %v1232, %v1010
    %v1237 = vmul.f32 %v1235, %v1010
    %v1238 = vmul.f32 %v1228, %v1228
    %v1239 = vmul.f32 %v1229, %v1229
    %v1240 = vsel %vm99, %v1238, 0.0
    %1241 = vadd.xlane.f32.xlu0 %v1240
    %v1242 = vpop.xlane.xlu0 %1241
    %v1243 = vsel %vm99, %v1239, 0.0
    %1244 = vadd.xlane.f32.xlu0 %v1243
    %v1245 = vpop.xlane.xlu0 %1244
    %v1246 = vmul.f32 %v1242, %v1010
    %v1247 = vmul.f32 %v1245, %v1010
    %v1248 = vmul.f32 %v1236, %v1236
    %v1249 = vmul.f32 %v1237, %v1237
    %v1250 = vsub.f32 %v1246, %v1248
    %v1251 = vsub.f32 %v1247, %v1249
    %v1252 = vmax.f32 %v1250, 0.0
    %v1253 = vmax.f32 %v1251, 0.0
    %v1254 = vsub.f32 %v1228, %v1236
    %v1255 = vsub.f32 %v1229, %v1237
    %v1256 = vadd.f32 %v1252, 1e-05
    %v1257 = vadd.f32 %v1253, 1e-05
    %v1258 = vrsqrt.pop %v1256
    %v1259 = vrsqrt.pop %v1257
    %v1260 = vmul.f32 %v1254, %v1258
    %v1261 = vmul.f32 %v1255, %v1259
    %v1262 = vlaneseq
    %v1263 = vshrl.u32 %v1262, 7
    %v1264 = vsub.s32 3, %v1263
    %v1265 = vrot.slane %v84, %v1264
    %v1266 = vmul.f32 %v1260, %v1265
    %v1267 = vmul.f32 %v1261, %v1265
    %v1268 = vlaneseq
    %v1269 = vshrl.u32 %v1268, 7
    %v1270 = vsub.s32 4, %v1269
    %v1271 = vrot.slane %v84, %v1270
    %v1272 = vadd.f32 %v1266, %v1271
    %v1273 = vadd.f32 %v1267, %v1271
    %s1274 = scalar_lea.vmem %s2, 64
    %v1275 = vld [vmem:[%s1274] sm:$0xf]
    %v1276 = vld [vmem:[%s1274 + $0x4] sm:$0xf]
    %v1277 = vld [vmem:[%s1274 + $0x8] sm:$0xf]
    %v1278 = vld [vmem:[%s1274 + $0xc] sm:$0xf]
    %v1279 = vld [vmem:[%s1274 + $0x10] sm:$0xf]
    %v1280 = vld [vmem:[%s1274 + $0x14] sm:$0xf]
    %v1281 = vld [vmem:[%s1274 + $0x18] sm:$0xf]
    %v1282 = vld [vmem:[%s1274 + $0x1c] sm:$0xf]
    %v1283 = vld [vmem:[%s1274 + $0x20] sm:$0xf]
    %v1284 = vld [vmem:[%s1274 + $0x24] sm:$0xf]
    %v1285 = vld [vmem:[%s1274 + $0x28] sm:$0xf]
    %v1286 = vld [vmem:[%s1274 + $0x2c] sm:$0xf]
    %v1287 = vld [vmem:[%s1274 + $0x30] sm:$0xf]
    %v1288 = vld [vmem:[%s1274 + $0x34] sm:$0xf]
    %v1289 = vld [vmem:[%s1274 + $0x38] sm:$0xf]
    %v1290 = vld [vmem:[%s1274 + $0x3c] sm:$0xf]
    %s1291 = scalar_lea.vmem %s3, 16
    %v1292 = vld [vmem:[%s1291] sm:$0xf]
    %v1293 = vld [vmem:[%s1291 + $0x4] sm:$0xf]
    %v1294 = vld [vmem:[%s1291 + $0x8] sm:$0xf]
    %v1295 = vld [vmem:[%s1291 + $0xc] sm:$0xf]
    %s1296 = scalar_lea.vmem %s6, 8
    %v1297 = vld [vmem:[%s1296] sm:$0x3f]
    %s1298 = scalar_lea.vmem %s7, 1
    %v1299 = vld [vmem:[%s1298] sm:$0x1]
    %v1300 = vpack.c.bf16 %v1273, %v1272
    %v1305 = vunpack.c.l.b16 %v1275
    %v1306 = vunpack.c.l.b16 %v1276
    %v1307 = vunpack.c.l.b16 %v1277
    %v1308 = vunpack.c.l.b16 %v1278
    %v1309 = vpack.c.b16 %v1306, %v1305
    %v1310 = vpack.c.b16 %v1308, %v1307
    %v1314 = vsel %vm99, %v1300, 0
    %1316 = vmatprep.subr.bf16.mxu0 0
    %1317 = vmatpush1.bf16.msra.mxu0 0
    %1318 = vmatprep.subr.bf16.mxu0 0
    %1319 = vmatpush1.bf16.msra.mxu0 0
    %1320 = vmatprep.subr.bf16.mxu0 0
    %1321 = vmatpush1.bf16.msra.mxu0 0
    %1322 = vmatprep.subr.bf16.mxu0 0
    %1323 = vmatpush1.bf16.msra.mxu0 0
    %1324 = vmatprep.subr.bf16.mxu0 0
    %1325 = vmatpush1.bf16.msra.mxu0 0
    %1326 = vmatprep.subr.bf16.mxu0 0
    %1327 = vmatpush1.bf16.msra.mxu0 0
    %1328 = vmatprep.subr.bf16.mxu0 0
    %1329 = vmatpush1.bf16.msra.mxu0 %v1310
    %1330 = vmatprep.subr.bf16.mxu0 0
    %1331 = vmatpush1.bf16.msra.mxu0 %v1309
    %1332 = vmatprep.subr.bf16.mxu0 0
    %1333 = vmatpush2.bf16.msra.mxu0 0
    %1334 = vmatprep.subr.bf16.mxu0 0
    %1335 = vmatpush2.bf16.msra.mxu0 0
    %1336 = vmatprep.subr.bf16.mxu0 0
    %1337 = vmatpush2.bf16.msra.mxu0 0
    %1338 = vmatprep.subr.bf16.mxu0 0
    %1339 = vmatpush2.bf16.msra.mxu0 0
    %1340 = vmatprep.subr.bf16.mxu0 0
    %1341 = vmatpush2.bf16.msra.mxu0 0
    %1342 = vmatprep.subr.bf16.mxu0 0
    %1343 = vmatpush2.bf16.msra.mxu0 0
    %1344 = vmatprep.subr.bf16.mxu0 0
    %1345 = vmatpush2.bf16.msra.mxu0 0
    %1346 = vmatprep.subr.bf16.mxu0 0
    %1347 = vmatpush2.bf16.msra.mxu0 0
    %1348 = vmatprep.mubr.bf16.mxu0 0
    %1349 = vmatmul.mubr.bf16.gmra.mxu0 %v1314
    %v1350 = vpop.f32.mrf.mxu0
    %v1351 = vadd.f32 0.0, %v1350
    %v1352 = vpop.f32.mrf.mxu0
    %v1353 = vpop.f32.mrf.mxu0
    %v1354 = vadd.f32 0.0, %v1353
    %v1355 = vpop.f32.mrf.mxu0
    %1356 = vdwg.mxu0
    %v1361 = vunpack.c.l.b16 %v1279
    %v1362 = vunpack.c.l.b16 %v1280
    %v1363 = vunpack.c.l.b16 %v1281
    %v1364 = vunpack.c.l.b16 %v1282
    %v1365 = vpack.c.b16 %v1362, %v1361
    %v1366 = vpack.c.b16 %v1364, %v1363
    %1369 = vmatprep.subr.bf16.mxu0 0
    %1370 = vmatpush1.bf16.msra.mxu0 0
    %1371 = vmatprep.subr.bf16.mxu0 0
    %1372 = vmatpush1.bf16.msra.mxu0 0
    %1373 = vmatprep.subr.bf16.mxu0 0
    %1374 = vmatpush1.bf16.msra.mxu0 0
    %1375 = vmatprep.subr.bf16.mxu0 0
    %1376 = vmatpush1.bf16.msra.mxu0 0
    %1377 = vmatprep.subr.bf16.mxu0 0
    %1378 = vmatpush1.bf16.msra.mxu0 0
    %1379 = vmatprep.subr.bf16.mxu0 0
    %1380 = vmatpush1.bf16.msra.mxu0 0
    %1381 = vmatprep.subr.bf16.mxu0 0
    %1382 = vmatpush1.bf16.msra.mxu0 %v1366
    %1383 = vmatprep.subr.bf16.mxu0 0
    %1384 = vmatpush1.bf16.msra.mxu0 %v1365
    %1385 = vmatprep.subr.bf16.mxu0 0
    %1386 = vmatpush2.bf16.msra.mxu0 0
    %1387 = vmatprep.subr.bf16.mxu0 0
    %1388 = vmatpush2.bf16.msra.mxu0 0
    %1389 = vmatprep.subr.bf16.mxu0 0
    %1390 = vmatpush2.bf16.msra.mxu0 0
    %1391 = vmatprep.subr.bf16.mxu0 0
    %1392 = vmatpush2.bf16.msra.mxu0 0
    %1393 = vmatprep.subr.bf16.mxu0 0
    %1394 = vmatpush2.bf16.msra.mxu0 0
    %1395 = vmatprep.subr.bf16.mxu0 0
    %1396 = vmatpush2.bf16.msra.mxu0 0
    %1397 = vmatprep.subr.bf16.mxu0 0
    %1398 = vmatpush2.bf16.msra.mxu0 0
    %1399 = vmatprep.subr.bf16.mxu0 0
    %1400 = vmatpush2.bf16.msra.mxu0 0
    %1401 = vmatprep.mubr.bf16.mxu0 0
    %1402 = vmatmul.mubr.bf16.gmra.mxu0 %v1314
    %v1403 = vpop.f32.mrf.mxu0
    %v1404 = vadd.f32 0.0, %v1403
    %v1405 = vpop.f32.mrf.mxu0
    %v1406 = vpop.f32.mrf.mxu0
    %v1407 = vadd.f32 0.0, %v1406
    %v1408 = vpop.f32.mrf.mxu0
    %1409 = vdwg.mxu0
    %v1414 = vunpack.c.l.b16 %v1283
    %v1415 = vunpack.c.l.b16 %v1284
    %v1416 = vunpack.c.l.b16 %v1285
    %v1417 = vunpack.c.l.b16 %v1286
    %v1418 = vpack.c.b16 %v1415, %v1414
    %v1419 = vpack.c.b16 %v1417, %v1416
    %1422 = vmatprep.subr.bf16.mxu0 0
    %1423 = vmatpush1.bf16.msra.mxu0 0
    %1424 = vmatprep.subr.bf16.mxu0 0
    %1425 = vmatpush1.bf16.msra.mxu0 0
    %1426 = vmatprep.subr.bf16.mxu0 0
    %1427 = vmatpush1.bf16.msra.mxu0 0
    %1428 = vmatprep.subr.bf16.mxu0 0
    %1429 = vmatpush1.bf16.msra.mxu0 0
    %1430 = vmatprep.subr.bf16.mxu0 0
    %1431 = vmatpush1.bf16.msra.mxu0 0
    %1432 = vmatprep.subr.bf16.mxu0 0
    %1433 = vmatpush1.bf16.msra.mxu0 0
    %1434 = vmatprep.subr.bf16.mxu0 0
    %1435 = vmatpush1.bf16.msra.mxu0 %v1419
    %1436 = vmatprep.subr.bf16.mxu0 0
    %1437 = vmatpush1.bf16.msra.mxu0 %v1418
    %1438 = vmatprep.subr.bf16.mxu0 0
    %1439 = vmatpush2.bf16.msra.mxu0 0
    %1440 = vmatprep.subr.bf16.mxu0 0
    %1441 = vmatpush2.bf16.msra.mxu0 0
    %1442 = vmatprep.subr.bf16.mxu0 0
    %1443 = vmatpush2.bf16.msra.mxu0 0
    %1444 = vmatprep.subr.bf16.mxu0 0
    %1445 = vmatpush2.bf16.msra.mxu0 0
    %1446 = vmatprep.subr.bf16.mxu0 0
    %1447 = vmatpush2.bf16.msra.mxu0 0
    %1448 = vmatprep.subr.bf16.mxu0 0
    %1449 = vmatpush2.bf16.msra.mxu0 0
    %1450 = vmatprep.subr.bf16.mxu0 0
    %1451 = vmatpush2.bf16.msra.mxu0 0
    %1452 = vmatprep.subr.bf16.mxu0 0
    %1453 = vmatpush2.bf16.msra.mxu0 0
    %1454 = vmatprep.mubr.bf16.mxu0 0
    %1455 = vmatmul.mubr.bf16.gmra.mxu0 %v1314
    %v1456 = vpop.f32.mrf.mxu0
    %v1457 = vadd.f32 0.0, %v1456
    %v1458 = vpop.f32.mrf.mxu0
    %v1459 = vpop.f32.mrf.mxu0
    %v1460 = vadd.f32 0.0, %v1459
    %v1461 = vpop.f32.mrf.mxu0
    %1462 = vdwg.mxu0
    %v1467 = vunpack.c.l.b16 %v1287
    %v1468 = vunpack.c.l.b16 %v1288
    %v1469 = vunpack.c.l.b16 %v1289
    %v1470 = vunpack.c.l.b16 %v1290
    %v1471 = vpack.c.b16 %v1468, %v1467
    %v1472 = vpack.c.b16 %v1470, %v1469
    %1475 = vmatprep.subr.bf16.mxu0 0
    %1476 = vmatpush1.bf16.msra.mxu0 0
    %1477 = vmatprep.subr.bf16.mxu0 0
    %1478 = vmatpush1.bf16.msra.mxu0 0
    %1479 = vmatprep.subr.bf16.mxu0 0
    %1480 = vmatpush1.bf16.msra.mxu0 0
    %1481 = vmatprep.subr.bf16.mxu0 0
    %1482 = vmatpush1.bf16.msra.mxu0 0
    %1483 = vmatprep.subr.bf16.mxu0 0
    %1484 = vmatpush1.bf16.msra.mxu0 0
    %1485 = vmatprep.subr.bf16.mxu0 0
    %1486 = vmatpush1.bf16.msra.mxu0 0
    %1487 = vmatprep.subr.bf16.mxu0 0
    %1488 = vmatpush1.bf16.msra.mxu0 %v1472
    %1489 = vmatprep.subr.bf16.mxu0 0
    %1490 = vmatpush1.bf16.msra.mxu0 %v1471
    %1491 = vmatprep.subr.bf16.mxu0 0
    %1492 = vmatpush2.bf16.msra.mxu0 0
    %1493 = vmatprep.subr.bf16.mxu0 0
    %1494 = vmatpush2.bf16.msra.mxu0 0
    %1495 = vmatprep.subr.bf16.mxu0 0
    %1496 = vmatpush2.bf16.msra.mxu0 0
    %1497 = vmatprep.subr.bf16.mxu0 0
    %1498 = vmatpush2.bf16.msra.mxu0 0
    %1499 = vmatprep.subr.bf16.mxu0 0
    %1500 = vmatpush2.bf16.msra.mxu0 0
    %1501 = vmatprep.subr.bf16.mxu0 0
    %1502 = vmatpush2.bf16.msra.mxu0 0
    %1503 = vmatprep.subr.bf16.mxu0 0
    %1504 = vmatpush2.bf16.msra.mxu0 0
    %1505 = vmatprep.subr.bf16.mxu0 0
    %1506 = vmatpush2.bf16.msra.mxu0 0
    %1507 = vmatprep.mubr.bf16.mxu0 0
    %1508 = vmatmul.mubr.bf16.gmra.mxu0 %v1314
    %v1509 = vpop.f32.mrf.mxu0
    %v1510 = vadd.f32 0.0, %v1509
    %v1511 = vpop.f32.mrf.mxu0
    %v1512 = vpop.f32.mrf.mxu0
    %v1513 = vadd.f32 0.0, %v1512
    %v1514 = vpop.f32.mrf.mxu0
    %1515 = vdwg.mxu0
    %v1516 = vpack.c.bf16 %v1354, %v1351
    %v1517 = vpack.c.bf16 %v1407, %v1404
    %v1518 = vpack.c.bf16 %v1460, %v1457
    %v1519 = vpack.c.bf16 %v1513, %v1510
    %1521 = vrot.lane.b32.xlu0 %v1516, 120
    %v1522 = vpop.permute.xlu0 %1521
    %v1524 = vsel %vm310, %v1516, 0
    %v1527 = vsel %vm310, %v1522, 0
    %1529 = vmatprep.subr.bf16.mxu0 0
    %1530 = vmatpush1.bf16.xpose.msra.mxu0 0
    %1531 = vmatprep.subr.bf16.mxu0 0
    %1532 = vmatpush1.bf16.xpose.msra.mxu0 0
    %1533 = vmatprep.subr.bf16.mxu0 0
    %1534 = vmatpush1.bf16.xpose.msra.mxu0 0
    %1535 = vmatprep.subr.bf16.mxu0 0
    %1536 = vmatpush1.bf16.xpose.msra.mxu0 0
    %1537 = vmatprep.subr.bf16.mxu0 0
    %1538 = vmatpush1.bf16.xpose.msra.mxu0 0
    %1539 = vmatprep.subr.bf16.mxu0 0
    %1540 = vmatpush1.bf16.xpose.msra.mxu0 0
    %1541 = vmatprep.subr.bf16.mxu0 0
    %1542 = vmatpush1.bf16.xpose.msra.mxu0 0
    %1543 = vmatprep.subr.bf16.mxu0 0
    %1544 = vmatpush1.bf16.xpose.msra.mxu0 %v1527
    %1545 = vmatprep.subr.bf16.mxu0 0
    %1546 = vmatpush2.bf16.xpose.msra.mxu0 0
    %1547 = vmatprep.subr.bf16.mxu0 0
    %1548 = vmatpush2.bf16.xpose.msra.mxu0 0
    %1549 = vmatprep.subr.bf16.mxu0 0
    %1550 = vmatpush2.bf16.xpose.msra.mxu0 0
    %1551 = vmatprep.subr.bf16.mxu0 0
    %1552 = vmatpush2.bf16.xpose.msra.mxu0 0
    %1553 = vmatprep.subr.bf16.mxu0 0
    %1554 = vmatpush2.bf16.xpose.msra.mxu0 0
    %1555 = vmatprep.subr.bf16.mxu0 0
    %1556 = vmatpush2.bf16.xpose.msra.mxu0 0
    %1557 = vmatprep.subr.bf16.mxu0 0
    %1558 = vmatpush2.bf16.xpose.msra.mxu0 0
    %1559 = vmatprep.subr.bf16.mxu0 0
    %1560 = vmatpush2.bf16.xpose.msra.mxu0 0
    %1561 = vmatprep.mubr.bf16.mxu0 0
    %1562 = vmatmul.mubr.bf16.gmra.mxu0 %v1524
    %v1563 = vpop.f32.mrf.mxu0
    %v1564 = vadd.f32 %v62, %v1563
    %v1565 = vpop.f32.mrf.mxu0
    %v1566 = vpop.f32.mrf.mxu0
    %v1567 = vadd.f32 %v63, %v1566
    %v1568 = vpop.f32.mrf.mxu0
    %1569 = vdwg.mxu0
    %1571 = vrot.lane.b32.xlu0 %v1517, 120
    %v1572 = vpop.permute.xlu0 %1571
    %v1574 = vsel %vm310, %v1517, 0
    %v1577 = vsel %vm310, %v1572, 0
    %1579 = vmatprep.subr.bf16.mxu0 0
    %1580 = vmatpush1.bf16.xpose.msra.mxu0 0
    %1581 = vmatprep.subr.bf16.mxu0 0
    %1582 = vmatpush1.bf16.xpose.msra.mxu0 0
    %1583 = vmatprep.subr.bf16.mxu0 0
    %1584 = vmatpush1.bf16.xpose.msra.mxu0 0
    %1585 = vmatprep.subr.bf16.mxu0 0
    %1586 = vmatpush1.bf16.xpose.msra.mxu0 0
    %1587 = vmatprep.subr.bf16.mxu0 0
    %1588 = vmatpush1.bf16.xpose.msra.mxu0 0
    %1589 = vmatprep.subr.bf16.mxu0 0
    %1590 = vmatpush1.bf16.xpose.msra.mxu0 0
    %1591 = vmatprep.subr.bf16.mxu0 0
    %1592 = vmatpush1.bf16.xpose.msra.mxu0 0
    %1593 = vmatprep.subr.bf16.mxu0 0
    %1594 = vmatpush1.bf16.xpose.msra.mxu0 %v1577
    %1595 = vmatprep.subr.bf16.mxu0 0
    %1596 = vmatpush2.bf16.xpose.msra.mxu0 0
    %1597 = vmatprep.subr.bf16.mxu0 0
    %1598 = vmatpush2.bf16.xpose.msra.mxu0 0
    %1599 = vmatprep.subr.bf16.mxu0 0
    %1600 = vmatpush2.bf16.xpose.msra.mxu0 0
    %1601 = vmatprep.subr.bf16.mxu0 0
    %1602 = vmatpush2.bf16.xpose.msra.mxu0 0
    %1603 = vmatprep.subr.bf16.mxu0 0
    %1604 = vmatpush2.bf16.xpose.msra.mxu0 0
    %1605 = vmatprep.subr.bf16.mxu0 0
    %1606 = vmatpush2.bf16.xpose.msra.mxu0 0
    %1607 = vmatprep.subr.bf16.mxu0 0
    %1608 = vmatpush2.bf16.xpose.msra.mxu0 0
    %1609 = vmatprep.subr.bf16.mxu0 0
    %1610 = vmatpush2.bf16.xpose.msra.mxu0 0
    %1611 = vmatprep.mubr.bf16.mxu0 0
    %1612 = vmatmul.mubr.bf16.gmra.mxu0 %v1574
    %v1613 = vpop.f32.mrf.mxu0
    %v1614 = vadd.f32 %v62, %v1613
    %v1615 = vpop.f32.mrf.mxu0
    %v1616 = vpop.f32.mrf.mxu0
    %v1617 = vadd.f32 %v63, %v1616
    %v1618 = vpop.f32.mrf.mxu0
    %1619 = vdwg.mxu0
    %1621 = vrot.lane.b32.xlu0 %v1518, 120
    %v1622 = vpop.permute.xlu0 %1621
    %v1624 = vsel %vm310, %v1518, 0
    %v1627 = vsel %vm310, %v1622, 0
    %1629 = vmatprep.subr.bf16.mxu0 0
    %1630 = vmatpush1.bf16.xpose.msra.mxu0 0
    %1631 = vmatprep.subr.bf16.mxu0 0
    %1632 = vmatpush1.bf16.xpose.msra.mxu0 0
    %1633 = vmatprep.subr.bf16.mxu0 0
    %1634 = vmatpush1.bf16.xpose.msra.mxu0 0
    %1635 = vmatprep.subr.bf16.mxu0 0
    %1636 = vmatpush1.bf16.xpose.msra.mxu0 0
    %1637 = vmatprep.subr.bf16.mxu0 0
    %1638 = vmatpush1.bf16.xpose.msra.mxu0 0
    %1639 = vmatprep.subr.bf16.mxu0 0
    %1640 = vmatpush1.bf16.xpose.msra.mxu0 0
    %1641 = vmatprep.subr.bf16.mxu0 0
    %1642 = vmatpush1.bf16.xpose.msra.mxu0 0
    %1643 = vmatprep.subr.bf16.mxu0 0
    %1644 = vmatpush1.bf16.xpose.msra.mxu0 %v1627
    %1645 = vmatprep.subr.bf16.mxu0 0
    %1646 = vmatpush2.bf16.xpose.msra.mxu0 0
    %1647 = vmatprep.subr.bf16.mxu0 0
    %1648 = vmatpush2.bf16.xpose.msra.mxu0 0
    %1649 = vmatprep.subr.bf16.mxu0 0
    %1650 = vmatpush2.bf16.xpose.msra.mxu0 0
    %1651 = vmatprep.subr.bf16.mxu0 0
    %1652 = vmatpush2.bf16.xpose.msra.mxu0 0
    %1653 = vmatprep.subr.bf16.mxu0 0
    %1654 = vmatpush2.bf16.xpose.msra.mxu0 0
    %1655 = vmatprep.subr.bf16.mxu0 0
    %1656 = vmatpush2.bf16.xpose.msra.mxu0 0
    %1657 = vmatprep.subr.bf16.mxu0 0
    %1658 = vmatpush2.bf16.xpose.msra.mxu0 0
    %1659 = vmatprep.subr.bf16.mxu0 0
    %1660 = vmatpush2.bf16.xpose.msra.mxu0 0
    %1661 = vmatprep.mubr.bf16.mxu0 0
    %1662 = vmatmul.mubr.bf16.gmra.mxu0 %v1624
    %v1663 = vpop.f32.mrf.mxu0
    %v1664 = vadd.f32 %v62, %v1663
    %v1665 = vpop.f32.mrf.mxu0
    %v1666 = vpop.f32.mrf.mxu0
    %v1667 = vadd.f32 %v63, %v1666
    %v1668 = vpop.f32.mrf.mxu0
    %1669 = vdwg.mxu0
    %1671 = vrot.lane.b32.xlu0 %v1519, 120
    %v1672 = vpop.permute.xlu0 %1671
    %v1674 = vsel %vm310, %v1519, 0
    %v1677 = vsel %vm310, %v1672, 0
    %1679 = vmatprep.subr.bf16.mxu0 0
    %1680 = vmatpush1.bf16.xpose.msra.mxu0 0
    %1681 = vmatprep.subr.bf16.mxu0 0
    %1682 = vmatpush1.bf16.xpose.msra.mxu0 0
    %1683 = vmatprep.subr.bf16.mxu0 0
    %1684 = vmatpush1.bf16.xpose.msra.mxu0 0
    %1685 = vmatprep.subr.bf16.mxu0 0
    %1686 = vmatpush1.bf16.xpose.msra.mxu0 0
    %1687 = vmatprep.subr.bf16.mxu0 0
    %1688 = vmatpush1.bf16.xpose.msra.mxu0 0
    %1689 = vmatprep.subr.bf16.mxu0 0
    %1690 = vmatpush1.bf16.xpose.msra.mxu0 0
    %1691 = vmatprep.subr.bf16.mxu0 0
    %1692 = vmatpush1.bf16.xpose.msra.mxu0 0
    %1693 = vmatprep.subr.bf16.mxu0 0
    %1694 = vmatpush1.bf16.xpose.msra.mxu0 %v1677
    %1695 = vmatprep.subr.bf16.mxu0 0
    %1696 = vmatpush2.bf16.xpose.msra.mxu0 0
    %1697 = vmatprep.subr.bf16.mxu0 0
    %1698 = vmatpush2.bf16.xpose.msra.mxu0 0
    %1699 = vmatprep.subr.bf16.mxu0 0
    %1700 = vmatpush2.bf16.xpose.msra.mxu0 0
    %1701 = vmatprep.subr.bf16.mxu0 0
    %1702 = vmatpush2.bf16.xpose.msra.mxu0 0
    %1703 = vmatprep.subr.bf16.mxu0 0
    %1704 = vmatpush2.bf16.xpose.msra.mxu0 0
    %1705 = vmatprep.subr.bf16.mxu0 0
    %1706 = vmatpush2.bf16.xpose.msra.mxu0 0
    %1707 = vmatprep.subr.bf16.mxu0 0
    %1708 = vmatpush2.bf16.xpose.msra.mxu0 0
    %1709 = vmatprep.subr.bf16.mxu0 0
    %1710 = vmatpush2.bf16.xpose.msra.mxu0 0
    %1711 = vmatprep.mubr.bf16.mxu0 0
    %1712 = vmatmul.mubr.bf16.gmra.mxu0 %v1674
    %v1713 = vpop.f32.mrf.mxu0
    %v1714 = vadd.f32 %v62, %v1713
    %v1715 = vpop.f32.mrf.mxu0
    %v1716 = vpop.f32.mrf.mxu0
    %v1717 = vadd.f32 %v63, %v1716
    %v1718 = vpop.f32.mrf.mxu0
    %1719 = vdwg.mxu0
    %v1720 = vsel %vm508, %v1564, -inf
    %1721 = vmax.xlane.f32.xlu0 %v1720
    %v1722 = vpop.xlane.xlu0 %1721
    %v1723 = vsel %vm508, %v1567, -inf
    %1724 = vmax.xlane.f32.xlu0 %v1723
    %v1725 = vpop.xlane.xlu0 %1724
    %v1726 = vsel %vm508, %v1614, -inf
    %1727 = vmax.xlane.f32.xlu0 %v1726
    %v1728 = vpop.xlane.xlu0 %1727
    %v1729 = vsel %vm508, %v1617, -inf
    %1730 = vmax.xlane.f32.xlu0 %v1729
    %v1731 = vpop.xlane.xlu0 %1730
    %v1732 = vsel %vm508, %v1664, -inf
    %1733 = vmax.xlane.f32.xlu0 %v1732
    %v1734 = vpop.xlane.xlu0 %1733
    %v1735 = vsel %vm508, %v1667, -inf
    %1736 = vmax.xlane.f32.xlu0 %v1735
    %v1737 = vpop.xlane.xlu0 %1736
    %v1738 = vsel %vm508, %v1714, -inf
    %1739 = vmax.xlane.f32.xlu0 %v1738
    %v1740 = vpop.xlane.xlu0 %1739
    %v1741 = vsel %vm508, %v1717, -inf
    %1742 = vmax.xlane.f32.xlu0 %v1741
    %v1743 = vpop.xlane.xlu0 %1742
    %v1744 = vsub.f32 %v1564, %v1722
    %v1745 = vsub.f32 %v1567, %v1725
    %v1746 = vsub.f32 %v1614, %v1728
    %v1747 = vsub.f32 %v1617, %v1731
    %v1748 = vsub.f32 %v1664, %v1734
    %v1749 = vsub.f32 %v1667, %v1737
    %v1750 = vsub.f32 %v1714, %v1740
    %v1751 = vsub.f32 %v1717, %v1743
    %v1752 = vmul.f32 %v1744, 1.442695
    %v1753 = vpow.pop %v1752
    %v1754 = vmul.f32 %v1745, 1.442695
    %v1755 = vpow.pop %v1754
    %v1756 = vmul.f32 %v1746, 1.442695
    %v1757 = vpow.pop %v1756
    %v1758 = vmul.f32 %v1747, 1.442695
    %v1759 = vpow.pop %v1758
    %v1760 = vmul.f32 %v1748, 1.442695
    %v1761 = vpow.pop %v1760
    %v1762 = vmul.f32 %v1749, 1.442695
    %v1763 = vpow.pop %v1762
    %v1764 = vmul.f32 %v1750, 1.442695
    %v1765 = vpow.pop %v1764
    %v1766 = vmul.f32 %v1751, 1.442695
    %v1767 = vpow.pop %v1766
    %v1768 = vsel %vm508, %v1753, 0.0
    %1769 = vadd.xlane.f32.xlu0 %v1768
    %v1770 = vpop.xlane.xlu0 %1769
    %v1771 = vsel %vm508, %v1755, 0.0
    %1772 = vadd.xlane.f32.xlu0 %v1771
    %v1773 = vpop.xlane.xlu0 %1772
    %v1774 = vsel %vm508, %v1757, 0.0
    %1775 = vadd.xlane.f32.xlu0 %v1774
    %v1776 = vpop.xlane.xlu0 %1775
    %v1777 = vsel %vm508, %v1759, 0.0
    %1778 = vadd.xlane.f32.xlu0 %v1777
    %v1779 = vpop.xlane.xlu0 %1778
    %v1780 = vsel %vm508, %v1761, 0.0
    %1781 = vadd.xlane.f32.xlu0 %v1780
    %v1782 = vpop.xlane.xlu0 %1781
    %v1783 = vsel %vm508, %v1763, 0.0
    %1784 = vadd.xlane.f32.xlu0 %v1783
    %v1785 = vpop.xlane.xlu0 %1784
    %v1786 = vsel %vm508, %v1765, 0.0
    %1787 = vadd.xlane.f32.xlu0 %v1786
    %v1788 = vpop.xlane.xlu0 %1787
    %v1789 = vsel %vm508, %v1767, 0.0
    %1790 = vadd.xlane.f32.xlu0 %v1789
    %v1791 = vpop.xlane.xlu0 %1790
    %v1792 = vrcp.pop %v1770
    %v1793 = vrcp.pop %v1773
    %v1794 = vrcp.pop %v1776
    %v1795 = vrcp.pop %v1779
    %v1796 = vrcp.pop %v1782
    %v1797 = vrcp.pop %v1785
    %v1798 = vrcp.pop %v1788
    %v1799 = vrcp.pop %v1791
    %v1800 = vmul.f32 %v1753, %v1792
    %v1801 = vmul.f32 %v1755, %v1793
    %v1802 = vmul.f32 %v1757, %v1794
    %v1803 = vmul.f32 %v1759, %v1795
    %v1804 = vmul.f32 %v1761, %v1796
    %v1805 = vmul.f32 %v1763, %v1797
    %v1806 = vmul.f32 %v1765, %v1798
    %v1807 = vmul.f32 %v1767, %v1799
    %v1808 = vpack.c.bf16 %v1801, %v1800
    %v1809 = vpack.c.bf16 %v1803, %v1802
    %v1810 = vpack.c.bf16 %v1805, %v1804
    %v1811 = vpack.c.bf16 %v1807, %v1806
    %1812 = vrot.lane.b32.xlu0 %v1516, 112
    %v1813 = vpop.permute.xlu0 %1812
    %v1816 = vsel %vm508, %v1808, 0
    %1818 = vmatprep.subr.bf16.mxu0 0
    %1819 = vmatpush1.bf16.msra.mxu0 0
    %1820 = vmatprep.subr.bf16.mxu0 0
    %1821 = vmatpush1.bf16.msra.mxu0 0
    %1822 = vmatprep.subr.bf16.mxu0 0
    %1823 = vmatpush1.bf16.msra.mxu0 0
    %1824 = vmatprep.subr.bf16.mxu0 0
    %1825 = vmatpush1.bf16.msra.mxu0 0
    %1826 = vmatprep.subr.bf16.mxu0 0
    %1827 = vmatpush1.bf16.msra.mxu0 0
    %1828 = vmatprep.subr.bf16.mxu0 0
    %1829 = vmatpush1.bf16.msra.mxu0 0
    %1830 = vmatprep.subr.bf16.mxu0 0
    %1831 = vmatpush1.bf16.msra.mxu0 0
    %1832 = vmatprep.subr.bf16.mxu0 0
    %1833 = vmatpush1.bf16.msra.mxu0 %v1813
    %1834 = vmatprep.subr.bf16.mxu0 0
    %1835 = vmatpush2.bf16.msra.mxu0 0
    %1836 = vmatprep.subr.bf16.mxu0 0
    %1837 = vmatpush2.bf16.msra.mxu0 0
    %1838 = vmatprep.subr.bf16.mxu0 0
    %1839 = vmatpush2.bf16.msra.mxu0 0
    %1840 = vmatprep.subr.bf16.mxu0 0
    %1841 = vmatpush2.bf16.msra.mxu0 0
    %1842 = vmatprep.subr.bf16.mxu0 0
    %1843 = vmatpush2.bf16.msra.mxu0 0
    %1844 = vmatprep.subr.bf16.mxu0 0
    %1845 = vmatpush2.bf16.msra.mxu0 0
    %1846 = vmatprep.subr.bf16.mxu0 0
    %1847 = vmatpush2.bf16.msra.mxu0 0
    %1848 = vmatprep.subr.bf16.mxu0 0
    %1849 = vmatpush2.bf16.msra.mxu0 0
    %1850 = vmatprep.mubr.bf16.mxu0 0
    %1851 = vmatmul.mubr.bf16.gmra.mxu0 %v1816
    %v1852 = vpop.f32.mrf.mxu0
    %v1853 = vadd.f32 0.0, %v1852
    %v1854 = vpop.f32.mrf.mxu0
    %v1855 = vpop.f32.mrf.mxu0
    %v1856 = vadd.f32 0.0, %v1855
    %v1857 = vpop.f32.mrf.mxu0
    %1858 = vdwg.mxu0
    %1859 = vrot.lane.b32.xlu0 %v1517, 112
    %v1860 = vpop.permute.xlu0 %1859
    %v1863 = vsel %vm508, %v1809, 0
    %1865 = vmatprep.subr.bf16.mxu0 0
    %1866 = vmatpush1.bf16.msra.mxu0 0
    %1867 = vmatprep.subr.bf16.mxu0 0
    %1868 = vmatpush1.bf16.msra.mxu0 0
    %1869 = vmatprep.subr.bf16.mxu0 0
    %1870 = vmatpush1.bf16.msra.mxu0 0
    %1871 = vmatprep.subr.bf16.mxu0 0
    %1872 = vmatpush1.bf16.msra.mxu0 0
    %1873 = vmatprep.subr.bf16.mxu0 0
    %1874 = vmatpush1.bf16.msra.mxu0 0
    %1875 = vmatprep.subr.bf16.mxu0 0
    %1876 = vmatpush1.bf16.msra.mxu0 0
    %1877 = vmatprep.subr.bf16.mxu0 0
    %1878 = vmatpush1.bf16.msra.mxu0 0
    %1879 = vmatprep.subr.bf16.mxu0 0
    %1880 = vmatpush1.bf16.msra.mxu0 %v1860
    %1881 = vmatprep.subr.bf16.mxu0 0
    %1882 = vmatpush2.bf16.msra.mxu0 0
    %1883 = vmatprep.subr.bf16.mxu0 0
    %1884 = vmatpush2.bf16.msra.mxu0 0
    %1885 = vmatprep.subr.bf16.mxu0 0
    %1886 = vmatpush2.bf16.msra.mxu0 0
    %1887 = vmatprep.subr.bf16.mxu0 0
    %1888 = vmatpush2.bf16.msra.mxu0 0
    %1889 = vmatprep.subr.bf16.mxu0 0
    %1890 = vmatpush2.bf16.msra.mxu0 0
    %1891 = vmatprep.subr.bf16.mxu0 0
    %1892 = vmatpush2.bf16.msra.mxu0 0
    %1893 = vmatprep.subr.bf16.mxu0 0
    %1894 = vmatpush2.bf16.msra.mxu0 0
    %1895 = vmatprep.subr.bf16.mxu0 0
    %1896 = vmatpush2.bf16.msra.mxu0 0
    %1897 = vmatprep.mubr.bf16.mxu0 0
    %1898 = vmatmul.mubr.bf16.gmra.mxu0 %v1863
    %v1899 = vpop.f32.mrf.mxu0
    %v1900 = vadd.f32 0.0, %v1899
    %v1901 = vpop.f32.mrf.mxu0
    %v1902 = vpop.f32.mrf.mxu0
    %v1903 = vadd.f32 0.0, %v1902
    %v1904 = vpop.f32.mrf.mxu0
    %1905 = vdwg.mxu0
    %1906 = vrot.lane.b32.xlu0 %v1518, 112
    %v1907 = vpop.permute.xlu0 %1906
    %v1910 = vsel %vm508, %v1810, 0
    %1912 = vmatprep.subr.bf16.mxu0 0
    %1913 = vmatpush1.bf16.msra.mxu0 0
    %1914 = vmatprep.subr.bf16.mxu0 0
    %1915 = vmatpush1.bf16.msra.mxu0 0
    %1916 = vmatprep.subr.bf16.mxu0 0
    %1917 = vmatpush1.bf16.msra.mxu0 0
    %1918 = vmatprep.subr.bf16.mxu0 0
    %1919 = vmatpush1.bf16.msra.mxu0 0
    %1920 = vmatprep.subr.bf16.mxu0 0
    %1921 = vmatpush1.bf16.msra.mxu0 0
    %1922 = vmatprep.subr.bf16.mxu0 0
    %1923 = vmatpush1.bf16.msra.mxu0 0
    %1924 = vmatprep.subr.bf16.mxu0 0
    %1925 = vmatpush1.bf16.msra.mxu0 0
    %1926 = vmatprep.subr.bf16.mxu0 0
    %1927 = vmatpush1.bf16.msra.mxu0 %v1907
    %1928 = vmatprep.subr.bf16.mxu0 0
    %1929 = vmatpush2.bf16.msra.mxu0 0
    %1930 = vmatprep.subr.bf16.mxu0 0
    %1931 = vmatpush2.bf16.msra.mxu0 0
    %1932 = vmatprep.subr.bf16.mxu0 0
    %1933 = vmatpush2.bf16.msra.mxu0 0
    %1934 = vmatprep.subr.bf16.mxu0 0
    %1935 = vmatpush2.bf16.msra.mxu0 0
    %1936 = vmatprep.subr.bf16.mxu0 0
    %1937 = vmatpush2.bf16.msra.mxu0 0
    %1938 = vmatprep.subr.bf16.mxu0 0
    %1939 = vmatpush2.bf16.msra.mxu0 0
    %1940 = vmatprep.subr.bf16.mxu0 0
    %1941 = vmatpush2.bf16.msra.mxu0 0
    %1942 = vmatprep.subr.bf16.mxu0 0
    %1943 = vmatpush2.bf16.msra.mxu0 0
    %1944 = vmatprep.mubr.bf16.mxu0 0
    %1945 = vmatmul.mubr.bf16.gmra.mxu0 %v1910
    %v1946 = vpop.f32.mrf.mxu0
    %v1947 = vadd.f32 0.0, %v1946
    %v1948 = vpop.f32.mrf.mxu0
    %v1949 = vpop.f32.mrf.mxu0
    %v1950 = vadd.f32 0.0, %v1949
    %v1951 = vpop.f32.mrf.mxu0
    %1952 = vdwg.mxu0
    %1953 = vrot.lane.b32.xlu0 %v1519, 112
    %v1954 = vpop.permute.xlu0 %1953
    %v1957 = vsel %vm508, %v1811, 0
    %1959 = vmatprep.subr.bf16.mxu0 0
    %1960 = vmatpush1.bf16.msra.mxu0 0
    %1961 = vmatprep.subr.bf16.mxu0 0
    %1962 = vmatpush1.bf16.msra.mxu0 0
    %1963 = vmatprep.subr.bf16.mxu0 0
    %1964 = vmatpush1.bf16.msra.mxu0 0
    %1965 = vmatprep.subr.bf16.mxu0 0
    %1966 = vmatpush1.bf16.msra.mxu0 0
    %1967 = vmatprep.subr.bf16.mxu0 0
    %1968 = vmatpush1.bf16.msra.mxu0 0
    %1969 = vmatprep.subr.bf16.mxu0 0
    %1970 = vmatpush1.bf16.msra.mxu0 0
    %1971 = vmatprep.subr.bf16.mxu0 0
    %1972 = vmatpush1.bf16.msra.mxu0 0
    %1973 = vmatprep.subr.bf16.mxu0 0
    %1974 = vmatpush1.bf16.msra.mxu0 %v1954
    %1975 = vmatprep.subr.bf16.mxu0 0
    %1976 = vmatpush2.bf16.msra.mxu0 0
    %1977 = vmatprep.subr.bf16.mxu0 0
    %1978 = vmatpush2.bf16.msra.mxu0 0
    %1979 = vmatprep.subr.bf16.mxu0 0
    %1980 = vmatpush2.bf16.msra.mxu0 0
    %1981 = vmatprep.subr.bf16.mxu0 0
    %1982 = vmatpush2.bf16.msra.mxu0 0
    %1983 = vmatprep.subr.bf16.mxu0 0
    %1984 = vmatpush2.bf16.msra.mxu0 0
    %1985 = vmatprep.subr.bf16.mxu0 0
    %1986 = vmatpush2.bf16.msra.mxu0 0
    %1987 = vmatprep.subr.bf16.mxu0 0
    %1988 = vmatpush2.bf16.msra.mxu0 0
    %1989 = vmatprep.subr.bf16.mxu0 0
    %1990 = vmatpush2.bf16.msra.mxu0 0
    %1991 = vmatprep.mubr.bf16.mxu0 0
    %1992 = vmatmul.mubr.bf16.gmra.mxu0 %v1957
    %v1993 = vpop.f32.mrf.mxu0
    %v1994 = vadd.f32 0.0, %v1993
    %v1995 = vpop.f32.mrf.mxu0
    %v1996 = vpop.f32.mrf.mxu0
    %v1997 = vadd.f32 0.0, %v1996
    %v1998 = vpop.f32.mrf.mxu0
    %1999 = vdwg.mxu0
    %v2000 = vpack.c.bf16 %v1856, %v1853
    %v2001 = vpack.c.bf16 %v1903, %v1900
    %v2002 = vpack.c.bf16 %v1950, %v1947
    %v2003 = vpack.c.bf16 %v1997, %v1994
    %v2005 = vsel %vm310, %v2000, 0
    %v2008 = vsel %vm796, %v1292, 0
    %2010 = vmatprep.subr.bf16.mxu0 0
    %2011 = vmatpush1.bf16.msra.mxu0 0
    %2012 = vmatprep.subr.bf16.mxu0 0
    %2013 = vmatpush1.bf16.msra.mxu0 0
    %2014 = vmatprep.subr.bf16.mxu0 0
    %2015 = vmatpush1.bf16.msra.mxu0 0
    %2016 = vmatprep.subr.bf16.mxu0 0
    %2017 = vmatpush1.bf16.msra.mxu0 0
    %2018 = vmatprep.subr.bf16.mxu0 0
    %2019 = vmatpush1.bf16.msra.mxu0 0
    %2020 = vmatprep.subr.bf16.mxu0 0
    %2021 = vmatpush1.bf16.msra.mxu0 0
    %2022 = vmatprep.subr.bf16.mxu0 0
    %2023 = vmatpush1.bf16.msra.mxu0 0
    %2024 = vmatprep.subr.bf16.mxu0 0
    %2025 = vmatpush1.bf16.msra.mxu0 %v2008
    %2026 = vmatprep.subr.bf16.mxu0 0
    %2027 = vmatpush2.bf16.msra.mxu0 0
    %2028 = vmatprep.subr.bf16.mxu0 0
    %2029 = vmatpush2.bf16.msra.mxu0 0
    %2030 = vmatprep.subr.bf16.mxu0 0
    %2031 = vmatpush2.bf16.msra.mxu0 0
    %2032 = vmatprep.subr.bf16.mxu0 0
    %2033 = vmatpush2.bf16.msra.mxu0 0
    %2034 = vmatprep.subr.bf16.mxu0 0
    %2035 = vmatpush2.bf16.msra.mxu0 0
    %2036 = vmatprep.subr.bf16.mxu0 0
    %2037 = vmatpush2.bf16.msra.mxu0 0
    %2038 = vmatprep.subr.bf16.mxu0 0
    %2039 = vmatpush2.bf16.msra.mxu0 0
    %2040 = vmatprep.subr.bf16.mxu0 0
    %2041 = vmatpush2.bf16.msra.mxu0 0
    %2042 = vmatprep.mubr.bf16.mxu0 0
    %2043 = vmatmul.mubr.bf16.gmra.mxu0 %v2005
    %v2044 = vpop.f32.mrf.mxu0
    %v2045 = vadd.f32 0.0, %v2044
    %v2046 = vpop.f32.mrf.mxu0
    %v2047 = vpop.f32.mrf.mxu0
    %v2048 = vadd.f32 0.0, %v2047
    %v2049 = vpop.f32.mrf.mxu0
    %2050 = vdwg.mxu0
    %v2052 = vsel %vm310, %v2001, 0
    %v2055 = vsel %vm796, %v1293, 0
    %2057 = vmatprep.subr.bf16.mxu0 0
    %2058 = vmatpush1.bf16.msra.mxu0 0
    %2059 = vmatprep.subr.bf16.mxu0 0
    %2060 = vmatpush1.bf16.msra.mxu0 0
    %2061 = vmatprep.subr.bf16.mxu0 0
    %2062 = vmatpush1.bf16.msra.mxu0 0
    %2063 = vmatprep.subr.bf16.mxu0 0
    %2064 = vmatpush1.bf16.msra.mxu0 0
    %2065 = vmatprep.subr.bf16.mxu0 0
    %2066 = vmatpush1.bf16.msra.mxu0 0
    %2067 = vmatprep.subr.bf16.mxu0 0
    %2068 = vmatpush1.bf16.msra.mxu0 0
    %2069 = vmatprep.subr.bf16.mxu0 0
    %2070 = vmatpush1.bf16.msra.mxu0 0
    %2071 = vmatprep.subr.bf16.mxu0 0
    %2072 = vmatpush1.bf16.msra.mxu0 %v2055
    %2073 = vmatprep.subr.bf16.mxu0 0
    %2074 = vmatpush2.bf16.msra.mxu0 0
    %2075 = vmatprep.subr.bf16.mxu0 0
    %2076 = vmatpush2.bf16.msra.mxu0 0
    %2077 = vmatprep.subr.bf16.mxu0 0
    %2078 = vmatpush2.bf16.msra.mxu0 0
    %2079 = vmatprep.subr.bf16.mxu0 0
    %2080 = vmatpush2.bf16.msra.mxu0 0
    %2081 = vmatprep.subr.bf16.mxu0 0
    %2082 = vmatpush2.bf16.msra.mxu0 0
    %2083 = vmatprep.subr.bf16.mxu0 0
    %2084 = vmatpush2.bf16.msra.mxu0 0
    %2085 = vmatprep.subr.bf16.mxu0 0
    %2086 = vmatpush2.bf16.msra.mxu0 0
    %2087 = vmatprep.subr.bf16.mxu0 0
    %2088 = vmatpush2.bf16.msra.mxu0 0
    %2089 = vmatprep.mubr.bf16.mxu0 0
    %2090 = vmatmul.mubr.bf16.gmra.mxu0 %v2052
    %v2091 = vpop.f32.mrf.mxu0
    %v2092 = vadd.f32 0.0, %v2091
    %v2093 = vpop.f32.mrf.mxu0
    %v2094 = vpop.f32.mrf.mxu0
    %v2095 = vadd.f32 0.0, %v2094
    %v2096 = vpop.f32.mrf.mxu0
    %2097 = vdwg.mxu0
    %v2099 = vsel %vm310, %v2002, 0
    %v2102 = vsel %vm796, %v1294, 0
    %2104 = vmatprep.subr.bf16.mxu0 0
    %2105 = vmatpush1.bf16.msra.mxu0 0
    %2106 = vmatprep.subr.bf16.mxu0 0
    %2107 = vmatpush1.bf16.msra.mxu0 0
    %2108 = vmatprep.subr.bf16.mxu0 0
    %2109 = vmatpush1.bf16.msra.mxu0 0
    %2110 = vmatprep.subr.bf16.mxu0 0
    %2111 = vmatpush1.bf16.msra.mxu0 0
    %2112 = vmatprep.subr.bf16.mxu0 0
    %2113 = vmatpush1.bf16.msra.mxu0 0
    %2114 = vmatprep.subr.bf16.mxu0 0
    %2115 = vmatpush1.bf16.msra.mxu0 0
    %2116 = vmatprep.subr.bf16.mxu0 0
    %2117 = vmatpush1.bf16.msra.mxu0 0
    %2118 = vmatprep.subr.bf16.mxu0 0
    %2119 = vmatpush1.bf16.msra.mxu0 %v2102
    %2120 = vmatprep.subr.bf16.mxu0 0
    %2121 = vmatpush2.bf16.msra.mxu0 0
    %2122 = vmatprep.subr.bf16.mxu0 0
    %2123 = vmatpush2.bf16.msra.mxu0 0
    %2124 = vmatprep.subr.bf16.mxu0 0
    %2125 = vmatpush2.bf16.msra.mxu0 0
    %2126 = vmatprep.subr.bf16.mxu0 0
    %2127 = vmatpush2.bf16.msra.mxu0 0
    %2128 = vmatprep.subr.bf16.mxu0 0
    %2129 = vmatpush2.bf16.msra.mxu0 0
    %2130 = vmatprep.subr.bf16.mxu0 0
    %2131 = vmatpush2.bf16.msra.mxu0 0
    %2132 = vmatprep.subr.bf16.mxu0 0
    %2133 = vmatpush2.bf16.msra.mxu0 0
    %2134 = vmatprep.subr.bf16.mxu0 0
    %2135 = vmatpush2.bf16.msra.mxu0 0
    %2136 = vmatprep.mubr.bf16.mxu0 0
    %2137 = vmatmul.mubr.bf16.gmra.mxu0 %v2099
    %v2138 = vpop.f32.mrf.mxu0
    %v2139 = vadd.f32 0.0, %v2138
    %v2140 = vpop.f32.mrf.mxu0
    %v2141 = vpop.f32.mrf.mxu0
    %v2142 = vadd.f32 0.0, %v2141
    %v2143 = vpop.f32.mrf.mxu0
    %2144 = vdwg.mxu0
    %v2146 = vsel %vm310, %v2003, 0
    %v2149 = vsel %vm796, %v1295, 0
    %2151 = vmatprep.subr.bf16.mxu0 0
    %2152 = vmatpush1.bf16.msra.mxu0 0
    %2153 = vmatprep.subr.bf16.mxu0 0
    %2154 = vmatpush1.bf16.msra.mxu0 0
    %2155 = vmatprep.subr.bf16.mxu0 0
    %2156 = vmatpush1.bf16.msra.mxu0 0
    %2157 = vmatprep.subr.bf16.mxu0 0
    %2158 = vmatpush1.bf16.msra.mxu0 0
    %2159 = vmatprep.subr.bf16.mxu0 0
    %2160 = vmatpush1.bf16.msra.mxu0 0
    %2161 = vmatprep.subr.bf16.mxu0 0
    %2162 = vmatpush1.bf16.msra.mxu0 0
    %2163 = vmatprep.subr.bf16.mxu0 0
    %2164 = vmatpush1.bf16.msra.mxu0 0
    %2165 = vmatprep.subr.bf16.mxu0 0
    %2166 = vmatpush1.bf16.msra.mxu0 %v2149
    %2167 = vmatprep.subr.bf16.mxu0 0
    %2168 = vmatpush2.bf16.msra.mxu0 0
    %2169 = vmatprep.subr.bf16.mxu0 0
    %2170 = vmatpush2.bf16.msra.mxu0 0
    %2171 = vmatprep.subr.bf16.mxu0 0
    %2172 = vmatpush2.bf16.msra.mxu0 0
    %2173 = vmatprep.subr.bf16.mxu0 0
    %2174 = vmatpush2.bf16.msra.mxu0 0
    %2175 = vmatprep.subr.bf16.mxu0 0
    %2176 = vmatpush2.bf16.msra.mxu0 0
    %2177 = vmatprep.subr.bf16.mxu0 0
    %2178 = vmatpush2.bf16.msra.mxu0 0
    %2179 = vmatprep.subr.bf16.mxu0 0
    %2180 = vmatpush2.bf16.msra.mxu0 0
    %2181 = vmatprep.subr.bf16.mxu0 0
    %2182 = vmatpush2.bf16.msra.mxu0 0
    %2183 = vmatprep.mubr.bf16.mxu0 0
    %2184 = vmatmul.mubr.bf16.gmra.mxu0 %v2146
    %v2185 = vpop.f32.mrf.mxu0
    %v2186 = vadd.f32 0.0, %v2185
    %v2187 = vpop.f32.mrf.mxu0
    %v2188 = vpop.f32.mrf.mxu0
    %v2189 = vadd.f32 0.0, %v2188
    %v2190 = vpop.f32.mrf.mxu0
    %2191 = vdwg.mxu0
    %v2192 = vsel %vm99, %v2045, 0.0
    %v2193 = vsel %vm99, %v2092, 0.0
    %v2194 = vadd.f32 %v2192, %v2193
    %v2195 = vsel %vm99, %v2139, 0.0
    %v2196 = vadd.f32 %v2194, %v2195
    %v2197 = vsel %vm99, %v2186, 0.0
    %v2198 = vadd.f32 %v2196, %v2197
    %v2199 = vsel %vm99, %v2048, 0.0
    %v2200 = vsel %vm99, %v2095, 0.0
    %v2201 = vadd.f32 %v2199, %v2200
    %v2202 = vsel %vm99, %v2142, 0.0
    %v2203 = vadd.f32 %v2201, %v2202
    %v2204 = vsel %vm99, %v2189, 0.0
    %v2205 = vadd.f32 %v2203, %v2204
    %v2206 = vlaneseq
    %v2207 = vshrl.u32 %v2206, 7
    %v2208 = vsub.s32 0, %v2207
    %v2209 = vrot.slane %v1297, %v2208
    %v2210 = vadd.f32 %v2198, %v2209
    %v2211 = vadd.f32 %v2205, %v2209
    %v2212 = vadd.f32 %v2210, %v1272
    %v2213 = vadd.f32 %v2211, %v1273
    %v2214 = vsel %vm99, %v2212, 0.0
    %2215 = vadd.xlane.f32.xlu0 %v2214
    %v2216 = vpop.xlane.xlu0 %2215
    %v2217 = vsel %vm99, %v2213, 0.0
    %2218 = vadd.xlane.f32.xlu0 %v2217
    %v2219 = vpop.xlane.xlu0 %2218
    %v2220 = vmul.f32 %v2216, %v1010
    %v2221 = vmul.f32 %v2219, %v1010
    %v2222 = vmul.f32 %v2212, %v2212
    %v2223 = vmul.f32 %v2213, %v2213
    %v2224 = vsel %vm99, %v2222, 0.0
    %2225 = vadd.xlane.f32.xlu0 %v2224
    %v2226 = vpop.xlane.xlu0 %2225
    %v2227 = vsel %vm99, %v2223, 0.0
    %2228 = vadd.xlane.f32.xlu0 %v2227
    %v2229 = vpop.xlane.xlu0 %2228
    %v2230 = vmul.f32 %v2226, %v1010
    %v2231 = vmul.f32 %v2229, %v1010
    %v2232 = vmul.f32 %v2220, %v2220
    %v2233 = vmul.f32 %v2221, %v2221
    %v2234 = vsub.f32 %v2230, %v2232
    %v2235 = vsub.f32 %v2231, %v2233
    %v2236 = vmax.f32 %v2234, 0.0
    %v2237 = vmax.f32 %v2235, 0.0
    %v2238 = vsub.f32 %v2212, %v2220
    %v2239 = vsub.f32 %v2213, %v2221
    %v2240 = vadd.f32 %v2236, 1e-05
    %v2241 = vadd.f32 %v2237, 1e-05
    %v2242 = vrsqrt.pop %v2240
    %v2243 = vrsqrt.pop %v2241
    %v2244 = vmul.f32 %v2238, %v2242
    %v2245 = vmul.f32 %v2239, %v2243
    %v2246 = vlaneseq
    %v2247 = vshrl.u32 %v2246, 7
    %v2248 = vsub.s32 1, %v2247
    %v2249 = vrot.slane %v1297, %v2248
    %v2250 = vmul.f32 %v2244, %v2249
    %v2251 = vmul.f32 %v2245, %v2249
    %v2252 = vlaneseq
    %v2253 = vshrl.u32 %v2252, 7
    %v2254 = vsub.s32 2, %v2253
    %v2255 = vrot.slane %v1297, %v2254
    %v2256 = vadd.f32 %v2250, %v2255
    %v2257 = vadd.f32 %v2251, %v2255
    %v2258 = vpack.c.bf16 %v2257, %v2256
    %s2259 = scalar_lea.vmem %s4, 16
    %v2260 = vld [vmem:[%s2259] sm:$0xf]
    %v2261 = vld [vmem:[%s2259 + $0x4] sm:$0xf]
    %v2262 = vld [vmem:[%s2259 + $0x8] sm:$0xf]
    %v2263 = vld [vmem:[%s2259 + $0xc] sm:$0xf]
    %v2265 = vlaneseq
    %v2266 = vshrl.u32 %v2265, 7
    %v2267 = vsub.s32 0, %v2266
    %v2268 = vrot.slane %v1299, %v2267
    %v2274 = vunpack.c.l.b16 %v2260
    %v2275 = vunpack.c.l.b16 %v2261
    %v2276 = vunpack.c.l.b16 %v2262
    %v2277 = vunpack.c.l.b16 %v2263
    %v2278 = vpack.c.b16 %v2275, %v2274
    %v2279 = vpack.c.b16 %v2277, %v2276
    %v2283 = vsel %vm99, %v2258, 0
    %2285 = vmatprep.subr.bf16.mxu0 0
    %2286 = vmatpush1.bf16.msra.mxu0 0
    %2287 = vmatprep.subr.bf16.mxu0 0
    %2288 = vmatpush1.bf16.msra.mxu0 0
    %2289 = vmatprep.subr.bf16.mxu0 0
    %2290 = vmatpush1.bf16.msra.mxu0 0
    %2291 = vmatprep.subr.bf16.mxu0 0
    %2292 = vmatpush1.bf16.msra.mxu0 0
    %2293 = vmatprep.subr.bf16.mxu0 0
    %2294 = vmatpush1.bf16.msra.mxu0 0
    %2295 = vmatprep.subr.bf16.mxu0 0
    %2296 = vmatpush1.bf16.msra.mxu0 0
    %2297 = vmatprep.subr.bf16.mxu0 0
    %2298 = vmatpush1.bf16.msra.mxu0 %v2279
    %2299 = vmatprep.subr.bf16.mxu0 0
    %2300 = vmatpush1.bf16.msra.mxu0 %v2278
    %2301 = vmatprep.subr.bf16.mxu0 0
    %2302 = vmatpush2.bf16.msra.mxu0 0
    %2303 = vmatprep.subr.bf16.mxu0 0
    %2304 = vmatpush2.bf16.msra.mxu0 0
    %2305 = vmatprep.subr.bf16.mxu0 0
    %2306 = vmatpush2.bf16.msra.mxu0 0
    %2307 = vmatprep.subr.bf16.mxu0 0
    %2308 = vmatpush2.bf16.msra.mxu0 0
    %2309 = vmatprep.subr.bf16.mxu0 0
    %2310 = vmatpush2.bf16.msra.mxu0 0
    %2311 = vmatprep.subr.bf16.mxu0 0
    %2312 = vmatpush2.bf16.msra.mxu0 0
    %2313 = vmatprep.subr.bf16.mxu0 0
    %2314 = vmatpush2.bf16.msra.mxu0 0
    %2315 = vmatprep.subr.bf16.mxu0 0
    %2316 = vmatpush2.bf16.msra.mxu0 0
    %2317 = vmatprep.mubr.bf16.mxu0 0
    %2318 = vmatmul.mubr.bf16.gmra.mxu0 %v2283
    %v2319 = vpop.f32.mrf.mxu0
    %v2320 = vadd.f32 %v2268, %v2319
    %v2321 = vpop.f32.mrf.mxu0
    %v2322 = vpop.f32.mrf.mxu0
    %v2323 = vadd.f32 %v2268, %v2322
    %v2324 = vpop.f32.mrf.mxu0
    %2325 = vdwg.mxu0
    %v2326 = vmax.f32 %v2320, 0.0
    %v2327 = vmax.f32 %v2323, 0.0
    %v2328 = vpack.c.bf16 %v2327, %v2326
    %s2329 = scalar_lea.vmem %s5, 64
    %v2330 = vld [vmem:[%s2329] sm:$0xf]
    %v2331 = vld [vmem:[%s2329 + $0x4] sm:$0xf]
    %v2332 = vld [vmem:[%s2329 + $0x8] sm:$0xf]
    %v2333 = vld [vmem:[%s2329 + $0xc] sm:$0xf]
    %v2334 = vld [vmem:[%s2329 + $0x10] sm:$0xf]
    %v2335 = vld [vmem:[%s2329 + $0x14] sm:$0xf]
    %v2336 = vld [vmem:[%s2329 + $0x18] sm:$0xf]
    %v2337 = vld [vmem:[%s2329 + $0x1c] sm:$0xf]
    %v2338 = vld [vmem:[%s2329 + $0x20] sm:$0xf]
    %v2339 = vld [vmem:[%s2329 + $0x24] sm:$0xf]
    %v2340 = vld [vmem:[%s2329 + $0x28] sm:$0xf]
    %v2341 = vld [vmem:[%s2329 + $0x2c] sm:$0xf]
    %v2342 = vld [vmem:[%s2329 + $0x30] sm:$0xf]
    %v2343 = vld [vmem:[%s2329 + $0x34] sm:$0xf]
    %v2344 = vld [vmem:[%s2329 + $0x38] sm:$0xf]
    %v2345 = vld [vmem:[%s2329 + $0x3c] sm:$0xf]
    %v2346 = vlaneseq
    %v2347 = vshrl.u32 %v2346, 7
    %v2348 = vsub.s32 5, %v2347
    %v2349 = vrot.slane %v1297, %v2348
    %v2366 = vunpack.c.l.b16 %v2330
    %v2367 = vunpack.c.l.b16 %v2331
    %v2368 = vunpack.c.l.b16 %v2332
    %v2369 = vunpack.c.l.b16 %v2333
    %v2370 = vunpack.c.l.b16 %v2334
    %v2371 = vunpack.c.l.b16 %v2335
    %v2372 = vunpack.c.l.b16 %v2336
    %v2373 = vunpack.c.l.b16 %v2337
    %v2374 = vunpack.c.l.b16 %v2338
    %v2375 = vunpack.c.l.b16 %v2339
    %v2376 = vunpack.c.l.b16 %v2340
    %v2377 = vunpack.c.l.b16 %v2341
    %v2378 = vunpack.c.l.b16 %v2342
    %v2379 = vunpack.c.l.b16 %v2343
    %v2380 = vunpack.c.l.b16 %v2344
    %v2381 = vunpack.c.l.b16 %v2345
    %v2382 = vpack.c.b16 %v2367, %v2366
    %v2383 = vpack.c.b16 %v2369, %v2368
    %v2384 = vpack.c.b16 %v2371, %v2370
    %v2385 = vpack.c.b16 %v2373, %v2372
    %v2386 = vpack.c.b16 %v2375, %v2374
    %v2387 = vpack.c.b16 %v2377, %v2376
    %v2388 = vpack.c.b16 %v2379, %v2378
    %v2389 = vpack.c.b16 %v2381, %v2380
    %2398 = vmatprep.subr.bf16.mxu0 0
    %2399 = vmatpush1.bf16.msra.mxu0 %v2389
    %2400 = vmatprep.subr.bf16.mxu0 0
    %2401 = vmatpush1.bf16.msra.mxu0 %v2388
    %2402 = vmatprep.subr.bf16.mxu0 0
    %2403 = vmatpush1.bf16.msra.mxu0 %v2387
    %2404 = vmatprep.subr.bf16.mxu0 0
    %2405 = vmatpush1.bf16.msra.mxu0 %v2386
    %2406 = vmatprep.subr.bf16.mxu0 0
    %2407 = vmatpush1.bf16.msra.mxu0 %v2385
    %2408 = vmatprep.subr.bf16.mxu0 0
    %2409 = vmatpush1.bf16.msra.mxu0 %v2384
    %2410 = vmatprep.subr.bf16.mxu0 0
    %2411 = vmatpush1.bf16.msra.mxu0 %v2383
    %2412 = vmatprep.subr.bf16.mxu0 0
    %2413 = vmatpush1.bf16.msra.mxu0 %v2382
    %2414 = vmatprep.subr.bf16.mxu0 0
    %2415 = vmatpush2.bf16.msra.mxu0 0
    %2416 = vmatprep.subr.bf16.mxu0 0
    %2417 = vmatpush2.bf16.msra.mxu0 0
    %2418 = vmatprep.subr.bf16.mxu0 0
    %2419 = vmatpush2.bf16.msra.mxu0 0
    %2420 = vmatprep.subr.bf16.mxu0 0
    %2421 = vmatpush2.bf16.msra.mxu0 0
    %2422 = vmatprep.subr.bf16.mxu0 0
    %2423 = vmatpush2.bf16.msra.mxu0 0
    %2424 = vmatprep.subr.bf16.mxu0 0
    %2425 = vmatpush2.bf16.msra.mxu0 0
    %2426 = vmatprep.subr.bf16.mxu0 0
    %2427 = vmatpush2.bf16.msra.mxu0 0
    %2428 = vmatprep.subr.bf16.mxu0 0
    %2429 = vmatpush2.bf16.msra.mxu0 0
    %2430 = vmatprep.mubr.bf16.mxu0 0
    %2431 = vmatmul.mubr.bf16.gmra.mxu0 %v2328
    %v2432 = vpop.f32.mrf.mxu0
    %v2433 = vadd.f32 %v2349, %v2432
    %v2434 = vpop.f32.mrf.mxu0
    %v2435 = vpop.f32.mrf.mxu0
    %v2436 = vadd.f32 %v2349, %v2435
    %v2437 = vpop.f32.mrf.mxu0
    %2438 = vdwg.mxu0
    %v2439 = vadd.f32 %v2433, %v2256
    %v2440 = vadd.f32 %v2436, %v2257
    %v2441 = vsel %vm99, %v2439, 0.0
    %2442 = vadd.xlane.f32.xlu0 %v2441
    %v2443 = vpop.xlane.xlu0 %2442
    %v2444 = vsel %vm99, %v2440, 0.0
    %2445 = vadd.xlane.f32.xlu0 %v2444
    %v2446 = vpop.xlane.xlu0 %2445
    %v2447 = vmul.f32 %v2443, %v1010
    %v2448 = vmul.f32 %v2446, %v1010
    %v2449 = vmul.f32 %v2439, %v2439
    %v2450 = vmul.f32 %v2440, %v2440
    %v2451 = vsel %vm99, %v2449, 0.0
    %2452 = vadd.xlane.f32.xlu0 %v2451
    %v2453 = vpop.xlane.xlu0 %2452
    %v2454 = vsel %vm99, %v2450, 0.0
    %2455 = vadd.xlane.f32.xlu0 %v2454
    %v2456 = vpop.xlane.xlu0 %2455
    %v2457 = vmul.f32 %v2453, %v1010
    %v2458 = vmul.f32 %v2456, %v1010
    %v2459 = vmul.f32 %v2447, %v2447
    %v2460 = vmul.f32 %v2448, %v2448
    %v2461 = vsub.f32 %v2457, %v2459
    %v2462 = vsub.f32 %v2458, %v2460
    %v2463 = vmax.f32 %v2461, 0.0
    %v2464 = vmax.f32 %v2462, 0.0
    %v2465 = vsub.f32 %v2439, %v2447
    %v2466 = vsub.f32 %v2440, %v2448
    %v2467 = vadd.f32 %v2463, 1e-05
    %v2468 = vadd.f32 %v2464, 1e-05
    %v2469 = vrsqrt.pop %v2467
    %v2470 = vrsqrt.pop %v2468
    %v2471 = vmul.f32 %v2465, %v2469
    %v2472 = vmul.f32 %v2466, %v2470
    %v2473 = vlaneseq
    %v2474 = vshrl.u32 %v2473, 7
    %v2475 = vsub.s32 3, %v2474
    %v2476 = vrot.slane %v1297, %v2475
    %v2477 = vmul.f32 %v2471, %v2476
    %v2478 = vmul.f32 %v2472, %v2476
    %v2479 = vlaneseq
    %v2480 = vshrl.u32 %v2479, 7
    %v2481 = vsub.s32 4, %v2480
    %v2482 = vrot.slane %v1297, %v2481
    %v2483 = vadd.f32 %v2477, %v2482
    %v2484 = vadd.f32 %v2478, %v2482
    %s2485 = scalar_lea.vmem %s2, 128
    %v2486 = vld [vmem:[%s2485] sm:$0xf]
    %v2487 = vld [vmem:[%s2485 + $0x4] sm:$0xf]
    %v2488 = vld [vmem:[%s2485 + $0x8] sm:$0xf]
    %v2489 = vld [vmem:[%s2485 + $0xc] sm:$0xf]
    %v2490 = vld [vmem:[%s2485 + $0x10] sm:$0xf]
    %v2491 = vld [vmem:[%s2485 + $0x14] sm:$0xf]
    %v2492 = vld [vmem:[%s2485 + $0x18] sm:$0xf]
    %v2493 = vld [vmem:[%s2485 + $0x1c] sm:$0xf]
    %v2494 = vld [vmem:[%s2485 + $0x20] sm:$0xf]
    %v2495 = vld [vmem:[%s2485 + $0x24] sm:$0xf]
    %v2496 = vld [vmem:[%s2485 + $0x28] sm:$0xf]
    %v2497 = vld [vmem:[%s2485 + $0x2c] sm:$0xf]
    %v2498 = vld [vmem:[%s2485 + $0x30] sm:$0xf]
    %v2499 = vld [vmem:[%s2485 + $0x34] sm:$0xf]
    %v2500 = vld [vmem:[%s2485 + $0x38] sm:$0xf]
    %v2501 = vld [vmem:[%s2485 + $0x3c] sm:$0xf]
    %s2502 = scalar_lea.vmem %s3, 32
    %v2503 = vld [vmem:[%s2502] sm:$0xf]
    %v2504 = vld [vmem:[%s2502 + $0x4] sm:$0xf]
    %v2505 = vld [vmem:[%s2502 + $0x8] sm:$0xf]
    %v2506 = vld [vmem:[%s2502 + $0xc] sm:$0xf]
    %s2507 = scalar_lea.vmem %s6, 16
    %v2508 = vld [vmem:[%s2507] sm:$0x3f]
    %s2509 = scalar_lea.vmem %s7, 2
    %v2510 = vld [vmem:[%s2509] sm:$0x1]
    %v2511 = vpack.c.bf16 %v2484, %v2483
    %v2516 = vunpack.c.l.b16 %v2486
    %v2517 = vunpack.c.l.b16 %v2487
    %v2518 = vunpack.c.l.b16 %v2488
    %v2519 = vunpack.c.l.b16 %v2489
    %v2520 = vpack.c.b16 %v2517, %v2516
    %v2521 = vpack.c.b16 %v2519, %v2518
    %v2525 = vsel %vm99, %v2511, 0
    %2527 = vmatprep.subr.bf16.mxu0 0
    %2528 = vmatpush1.bf16.msra.mxu0 0
    %2529 = vmatprep.subr.bf16.mxu0 0
    %2530 = vmatpush1.bf16.msra.mxu0 0
    %2531 = vmatprep.subr.bf16.mxu0 0
    %2532 = vmatpush1.bf16.msra.mxu0 0
    %2533 = vmatprep.subr.bf16.mxu0 0
    %2534 = vmatpush1.bf16.msra.mxu0 0
    %2535 = vmatprep.subr.bf16.mxu0 0
    %2536 = vmatpush1.bf16.msra.mxu0 0
    %2537 = vmatprep.subr.bf16.mxu0 0
    %2538 = vmatpush1.bf16.msra.mxu0 0
    %2539 = vmatprep.subr.bf16.mxu0 0
    %2540 = vmatpush1.bf16.msra.mxu0 %v2521
    %2541 = vmatprep.subr.bf16.mxu0 0
    %2542 = vmatpush1.bf16.msra.mxu0 %v2520
    %2543 = vmatprep.subr.bf16.mxu0 0
    %2544 = vmatpush2.bf16.msra.mxu0 0
    %2545 = vmatprep.subr.bf16.mxu0 0
    %2546 = vmatpush2.bf16.msra.mxu0 0
    %2547 = vmatprep.subr.bf16.mxu0 0
    %2548 = vmatpush2.bf16.msra.mxu0 0
    %2549 = vmatprep.subr.bf16.mxu0 0
    %2550 = vmatpush2.bf16.msra.mxu0 0
    %2551 = vmatprep.subr.bf16.mxu0 0
    %2552 = vmatpush2.bf16.msra.mxu0 0
    %2553 = vmatprep.subr.bf16.mxu0 0
    %2554 = vmatpush2.bf16.msra.mxu0 0
    %2555 = vmatprep.subr.bf16.mxu0 0
    %2556 = vmatpush2.bf16.msra.mxu0 0
    %2557 = vmatprep.subr.bf16.mxu0 0
    %2558 = vmatpush2.bf16.msra.mxu0 0
    %2559 = vmatprep.mubr.bf16.mxu0 0
    %2560 = vmatmul.mubr.bf16.gmra.mxu0 %v2525
    %v2561 = vpop.f32.mrf.mxu0
    %v2562 = vadd.f32 0.0, %v2561
    %v2563 = vpop.f32.mrf.mxu0
    %v2564 = vpop.f32.mrf.mxu0
    %v2565 = vadd.f32 0.0, %v2564
    %v2566 = vpop.f32.mrf.mxu0
    %2567 = vdwg.mxu0
    %v2572 = vunpack.c.l.b16 %v2490
    %v2573 = vunpack.c.l.b16 %v2491
    %v2574 = vunpack.c.l.b16 %v2492
    %v2575 = vunpack.c.l.b16 %v2493
    %v2576 = vpack.c.b16 %v2573, %v2572
    %v2577 = vpack.c.b16 %v2575, %v2574
    %2580 = vmatprep.subr.bf16.mxu0 0
    %2581 = vmatpush1.bf16.msra.mxu0 0
    %2582 = vmatprep.subr.bf16.mxu0 0
    %2583 = vmatpush1.bf16.msra.mxu0 0
    %2584 = vmatprep.subr.bf16.mxu0 0
    %2585 = vmatpush1.bf16.msra.mxu0 0
    %2586 = vmatprep.subr.bf16.mxu0 0
    %2587 = vmatpush1.bf16.msra.mxu0 0
    %2588 = vmatprep.subr.bf16.mxu0 0
    %2589 = vmatpush1.bf16.msra.mxu0 0
    %2590 = vmatprep.subr.bf16.mxu0 0
    %2591 = vmatpush1.bf16.msra.mxu0 0
    %2592 = vmatprep.subr.bf16.mxu0 0
    %2593 = vmatpush1.bf16.msra.mxu0 %v2577
    %2594 = vmatprep.subr.bf16.mxu0 0
    %2595 = vmatpush1.bf16.msra.mxu0 %v2576
    %2596 = vmatprep.subr.bf16.mxu0 0
    %2597 = vmatpush2.bf16.msra.mxu0 0
    %2598 = vmatprep.subr.bf16.mxu0 0
    %2599 = vmatpush2.bf16.msra.mxu0 0
    %2600 = vmatprep.subr.bf16.mxu0 0
    %2601 = vmatpush2.bf16.msra.mxu0 0
    %2602 = vmatprep.subr.bf16.mxu0 0
    %2603 = vmatpush2.bf16.msra.mxu0 0
    %2604 = vmatprep.subr.bf16.mxu0 0
    %2605 = vmatpush2.bf16.msra.mxu0 0
    %2606 = vmatprep.subr.bf16.mxu0 0
    %2607 = vmatpush2.bf16.msra.mxu0 0
    %2608 = vmatprep.subr.bf16.mxu0 0
    %2609 = vmatpush2.bf16.msra.mxu0 0
    %2610 = vmatprep.subr.bf16.mxu0 0
    %2611 = vmatpush2.bf16.msra.mxu0 0
    %2612 = vmatprep.mubr.bf16.mxu0 0
    %2613 = vmatmul.mubr.bf16.gmra.mxu0 %v2525
    %v2614 = vpop.f32.mrf.mxu0
    %v2615 = vadd.f32 0.0, %v2614
    %v2616 = vpop.f32.mrf.mxu0
    %v2617 = vpop.f32.mrf.mxu0
    %v2618 = vadd.f32 0.0, %v2617
    %v2619 = vpop.f32.mrf.mxu0
    %2620 = vdwg.mxu0
    %v2625 = vunpack.c.l.b16 %v2494
    %v2626 = vunpack.c.l.b16 %v2495
    %v2627 = vunpack.c.l.b16 %v2496
    %v2628 = vunpack.c.l.b16 %v2497
    %v2629 = vpack.c.b16 %v2626, %v2625
    %v2630 = vpack.c.b16 %v2628, %v2627
    %2633 = vmatprep.subr.bf16.mxu0 0
    %2634 = vmatpush1.bf16.msra.mxu0 0
    %2635 = vmatprep.subr.bf16.mxu0 0
    %2636 = vmatpush1.bf16.msra.mxu0 0
    %2637 = vmatprep.subr.bf16.mxu0 0
    %2638 = vmatpush1.bf16.msra.mxu0 0
    %2639 = vmatprep.subr.bf16.mxu0 0
    %2640 = vmatpush1.bf16.msra.mxu0 0
    %2641 = vmatprep.subr.bf16.mxu0 0
    %2642 = vmatpush1.bf16.msra.mxu0 0
    %2643 = vmatprep.subr.bf16.mxu0 0
    %2644 = vmatpush1.bf16.msra.mxu0 0
    %2645 = vmatprep.subr.bf16.mxu0 0
    %2646 = vmatpush1.bf16.msra.mxu0 %v2630
    %2647 = vmatprep.subr.bf16.mxu0 0
    %2648 = vmatpush1.bf16.msra.mxu0 %v2629
    %2649 = vmatprep.subr.bf16.mxu0 0
    %2650 = vmatpush2.bf16.msra.mxu0 0
    %2651 = vmatprep.subr.bf16.mxu0 0
    %2652 = vmatpush2.bf16.msra.mxu0 0
    %2653 = vmatprep.subr.bf16.mxu0 0
    %2654 = vmatpush2.bf16.msra.mxu0 0
    %2655 = vmatprep.subr.bf16.mxu0 0
    %2656 = vmatpush2.bf16.msra.mxu0 0
    %2657 = vmatprep.subr.bf16.mxu0 0
    %2658 = vmatpush2.bf16.msra.mxu0 0
    %2659 = vmatprep.subr.bf16.mxu0 0
    %2660 = vmatpush2.bf16.msra.mxu0 0
    %2661 = vmatprep.subr.bf16.mxu0 0
    %2662 = vmatpush2.bf16.msra.mxu0 0
    %2663 = vmatprep.subr.bf16.mxu0 0
    %2664 = vmatpush2.bf16.msra.mxu0 0
    %2665 = vmatprep.mubr.bf16.mxu0 0
    %2666 = vmatmul.mubr.bf16.gmra.mxu0 %v2525
    %v2667 = vpop.f32.mrf.mxu0
    %v2668 = vadd.f32 0.0, %v2667
    %v2669 = vpop.f32.mrf.mxu0
    %v2670 = vpop.f32.mrf.mxu0
    %v2671 = vadd.f32 0.0, %v2670
    %v2672 = vpop.f32.mrf.mxu0
    %2673 = vdwg.mxu0
    %v2678 = vunpack.c.l.b16 %v2498
    %v2679 = vunpack.c.l.b16 %v2499
    %v2680 = vunpack.c.l.b16 %v2500
    %v2681 = vunpack.c.l.b16 %v2501
    %v2682 = vpack.c.b16 %v2679, %v2678
    %v2683 = vpack.c.b16 %v2681, %v2680
    %2686 = vmatprep.subr.bf16.mxu0 0
    %2687 = vmatpush1.bf16.msra.mxu0 0
    %2688 = vmatprep.subr.bf16.mxu0 0
    %2689 = vmatpush1.bf16.msra.mxu0 0
    %2690 = vmatprep.subr.bf16.mxu0 0
    %2691 = vmatpush1.bf16.msra.mxu0 0
    %2692 = vmatprep.subr.bf16.mxu0 0
    %2693 = vmatpush1.bf16.msra.mxu0 0
    %2694 = vmatprep.subr.bf16.mxu0 0
    %2695 = vmatpush1.bf16.msra.mxu0 0
    %2696 = vmatprep.subr.bf16.mxu0 0
    %2697 = vmatpush1.bf16.msra.mxu0 0
    %2698 = vmatprep.subr.bf16.mxu0 0
    %2699 = vmatpush1.bf16.msra.mxu0 %v2683
    %2700 = vmatprep.subr.bf16.mxu0 0
    %2701 = vmatpush1.bf16.msra.mxu0 %v2682
    %2702 = vmatprep.subr.bf16.mxu0 0
    %2703 = vmatpush2.bf16.msra.mxu0 0
    %2704 = vmatprep.subr.bf16.mxu0 0
    %2705 = vmatpush2.bf16.msra.mxu0 0
    %2706 = vmatprep.subr.bf16.mxu0 0
    %2707 = vmatpush2.bf16.msra.mxu0 0
    %2708 = vmatprep.subr.bf16.mxu0 0
    %2709 = vmatpush2.bf16.msra.mxu0 0
    %2710 = vmatprep.subr.bf16.mxu0 0
    %2711 = vmatpush2.bf16.msra.mxu0 0
    %2712 = vmatprep.subr.bf16.mxu0 0
    %2713 = vmatpush2.bf16.msra.mxu0 0
    %2714 = vmatprep.subr.bf16.mxu0 0
    %2715 = vmatpush2.bf16.msra.mxu0 0
    %2716 = vmatprep.subr.bf16.mxu0 0
    %2717 = vmatpush2.bf16.msra.mxu0 0
    %2718 = vmatprep.mubr.bf16.mxu0 0
    %2719 = vmatmul.mubr.bf16.gmra.mxu0 %v2525
    %v2720 = vpop.f32.mrf.mxu0
    %v2721 = vadd.f32 0.0, %v2720
    %v2722 = vpop.f32.mrf.mxu0
    %v2723 = vpop.f32.mrf.mxu0
    %v2724 = vadd.f32 0.0, %v2723
    %v2725 = vpop.f32.mrf.mxu0
    %2726 = vdwg.mxu0
    %v2727 = vpack.c.bf16 %v2565, %v2562
    %v2728 = vpack.c.bf16 %v2618, %v2615
    %v2729 = vpack.c.bf16 %v2671, %v2668
    %v2730 = vpack.c.bf16 %v2724, %v2721
    %2732 = vrot.lane.b32.xlu0 %v2727, 120
    %v2733 = vpop.permute.xlu0 %2732
    %v2735 = vsel %vm310, %v2727, 0
    %v2738 = vsel %vm310, %v2733, 0
    %2740 = vmatprep.subr.bf16.mxu0 0
    %2741 = vmatpush1.bf16.xpose.msra.mxu0 0
    %2742 = vmatprep.subr.bf16.mxu0 0
    %2743 = vmatpush1.bf16.xpose.msra.mxu0 0
    %2744 = vmatprep.subr.bf16.mxu0 0
    %2745 = vmatpush1.bf16.xpose.msra.mxu0 0
    %2746 = vmatprep.subr.bf16.mxu0 0
    %2747 = vmatpush1.bf16.xpose.msra.mxu0 0
    %2748 = vmatprep.subr.bf16.mxu0 0
    %2749 = vmatpush1.bf16.xpose.msra.mxu0 0
    %2750 = vmatprep.subr.bf16.mxu0 0
    %2751 = vmatpush1.bf16.xpose.msra.mxu0 0
    %2752 = vmatprep.subr.bf16.mxu0 0
    %2753 = vmatpush1.bf16.xpose.msra.mxu0 0
    %2754 = vmatprep.subr.bf16.mxu0 0
    %2755 = vmatpush1.bf16.xpose.msra.mxu0 %v2738
    %2756 = vmatprep.subr.bf16.mxu0 0
    %2757 = vmatpush2.bf16.xpose.msra.mxu0 0
    %2758 = vmatprep.subr.bf16.mxu0 0
    %2759 = vmatpush2.bf16.xpose.msra.mxu0 0
    %2760 = vmatprep.subr.bf16.mxu0 0
    %2761 = vmatpush2.bf16.xpose.msra.mxu0 0
    %2762 = vmatprep.subr.bf16.mxu0 0
    %2763 = vmatpush2.bf16.xpose.msra.mxu0 0
    %2764 = vmatprep.subr.bf16.mxu0 0
    %2765 = vmatpush2.bf16.xpose.msra.mxu0 0
    %2766 = vmatprep.subr.bf16.mxu0 0
    %2767 = vmatpush2.bf16.xpose.msra.mxu0 0
    %2768 = vmatprep.subr.bf16.mxu0 0
    %2769 = vmatpush2.bf16.xpose.msra.mxu0 0
    %2770 = vmatprep.subr.bf16.mxu0 0
    %2771 = vmatpush2.bf16.xpose.msra.mxu0 0
    %2772 = vmatprep.mubr.bf16.mxu0 0
    %2773 = vmatmul.mubr.bf16.gmra.mxu0 %v2735
    %v2774 = vpop.f32.mrf.mxu0
    %v2775 = vadd.f32 %v62, %v2774
    %v2776 = vpop.f32.mrf.mxu0
    %v2777 = vpop.f32.mrf.mxu0
    %v2778 = vadd.f32 %v63, %v2777
    %v2779 = vpop.f32.mrf.mxu0
    %2780 = vdwg.mxu0
    %2782 = vrot.lane.b32.xlu0 %v2728, 120
    %v2783 = vpop.permute.xlu0 %2782
    %v2785 = vsel %vm310, %v2728, 0
    %v2788 = vsel %vm310, %v2783, 0
    %2790 = vmatprep.subr.bf16.mxu0 0
    %2791 = vmatpush1.bf16.xpose.msra.mxu0 0
    %2792 = vmatprep.subr.bf16.mxu0 0
    %2793 = vmatpush1.bf16.xpose.msra.mxu0 0
    %2794 = vmatprep.subr.bf16.mxu0 0
    %2795 = vmatpush1.bf16.xpose.msra.mxu0 0
    %2796 = vmatprep.subr.bf16.mxu0 0
    %2797 = vmatpush1.bf16.xpose.msra.mxu0 0
    %2798 = vmatprep.subr.bf16.mxu0 0
    %2799 = vmatpush1.bf16.xpose.msra.mxu0 0
    %2800 = vmatprep.subr.bf16.mxu0 0
    %2801 = vmatpush1.bf16.xpose.msra.mxu0 0
    %2802 = vmatprep.subr.bf16.mxu0 0
    %2803 = vmatpush1.bf16.xpose.msra.mxu0 0
    %2804 = vmatprep.subr.bf16.mxu0 0
    %2805 = vmatpush1.bf16.xpose.msra.mxu0 %v2788
    %2806 = vmatprep.subr.bf16.mxu0 0
    %2807 = vmatpush2.bf16.xpose.msra.mxu0 0
    %2808 = vmatprep.subr.bf16.mxu0 0
    %2809 = vmatpush2.bf16.xpose.msra.mxu0 0
    %2810 = vmatprep.subr.bf16.mxu0 0
    %2811 = vmatpush2.bf16.xpose.msra.mxu0 0
    %2812 = vmatprep.subr.bf16.mxu0 0
    %2813 = vmatpush2.bf16.xpose.msra.mxu0 0
    %2814 = vmatprep.subr.bf16.mxu0 0
    %2815 = vmatpush2.bf16.xpose.msra.mxu0 0
    %2816 = vmatprep.subr.bf16.mxu0 0
    %2817 = vmatpush2.bf16.xpose.msra.mxu0 0
    %2818 = vmatprep.subr.bf16.mxu0 0
    %2819 = vmatpush2.bf16.xpose.msra.mxu0 0
    %2820 = vmatprep.subr.bf16.mxu0 0
    %2821 = vmatpush2.bf16.xpose.msra.mxu0 0
    %2822 = vmatprep.mubr.bf16.mxu0 0
    %2823 = vmatmul.mubr.bf16.gmra.mxu0 %v2785
    %v2824 = vpop.f32.mrf.mxu0
    %v2825 = vadd.f32 %v62, %v2824
    %v2826 = vpop.f32.mrf.mxu0
    %v2827 = vpop.f32.mrf.mxu0
    %v2828 = vadd.f32 %v63, %v2827
    %v2829 = vpop.f32.mrf.mxu0
    %2830 = vdwg.mxu0
    %2832 = vrot.lane.b32.xlu0 %v2729, 120
    %v2833 = vpop.permute.xlu0 %2832
    %v2835 = vsel %vm310, %v2729, 0
    %v2838 = vsel %vm310, %v2833, 0
    %2840 = vmatprep.subr.bf16.mxu0 0
    %2841 = vmatpush1.bf16.xpose.msra.mxu0 0
    %2842 = vmatprep.subr.bf16.mxu0 0
    %2843 = vmatpush1.bf16.xpose.msra.mxu0 0
    %2844 = vmatprep.subr.bf16.mxu0 0
    %2845 = vmatpush1.bf16.xpose.msra.mxu0 0
    %2846 = vmatprep.subr.bf16.mxu0 0
    %2847 = vmatpush1.bf16.xpose.msra.mxu0 0
    %2848 = vmatprep.subr.bf16.mxu0 0
    %2849 = vmatpush1.bf16.xpose.msra.mxu0 0
    %2850 = vmatprep.subr.bf16.mxu0 0
    %2851 = vmatpush1.bf16.xpose.msra.mxu0 0
    %2852 = vmatprep.subr.bf16.mxu0 0
    %2853 = vmatpush1.bf16.xpose.msra.mxu0 0
    %2854 = vmatprep.subr.bf16.mxu0 0
    %2855 = vmatpush1.bf16.xpose.msra.mxu0 %v2838
    %2856 = vmatprep.subr.bf16.mxu0 0
    %2857 = vmatpush2.bf16.xpose.msra.mxu0 0
    %2858 = vmatprep.subr.bf16.mxu0 0
    %2859 = vmatpush2.bf16.xpose.msra.mxu0 0
    %2860 = vmatprep.subr.bf16.mxu0 0
    %2861 = vmatpush2.bf16.xpose.msra.mxu0 0
    %2862 = vmatprep.subr.bf16.mxu0 0
    %2863 = vmatpush2.bf16.xpose.msra.mxu0 0
    %2864 = vmatprep.subr.bf16.mxu0 0
    %2865 = vmatpush2.bf16.xpose.msra.mxu0 0
    %2866 = vmatprep.subr.bf16.mxu0 0
    %2867 = vmatpush2.bf16.xpose.msra.mxu0 0
    %2868 = vmatprep.subr.bf16.mxu0 0
    %2869 = vmatpush2.bf16.xpose.msra.mxu0 0
    %2870 = vmatprep.subr.bf16.mxu0 0
    %2871 = vmatpush2.bf16.xpose.msra.mxu0 0
    %2872 = vmatprep.mubr.bf16.mxu0 0
    %2873 = vmatmul.mubr.bf16.gmra.mxu0 %v2835
    %v2874 = vpop.f32.mrf.mxu0
    %v2875 = vadd.f32 %v62, %v2874
    %v2876 = vpop.f32.mrf.mxu0
    %v2877 = vpop.f32.mrf.mxu0
    %v2878 = vadd.f32 %v63, %v2877
    %v2879 = vpop.f32.mrf.mxu0
    %2880 = vdwg.mxu0
    %2882 = vrot.lane.b32.xlu0 %v2730, 120
    %v2883 = vpop.permute.xlu0 %2882
    %v2885 = vsel %vm310, %v2730, 0
    %v2888 = vsel %vm310, %v2883, 0
    %2890 = vmatprep.subr.bf16.mxu0 0
    %2891 = vmatpush1.bf16.xpose.msra.mxu0 0
    %2892 = vmatprep.subr.bf16.mxu0 0
    %2893 = vmatpush1.bf16.xpose.msra.mxu0 0
    %2894 = vmatprep.subr.bf16.mxu0 0
    %2895 = vmatpush1.bf16.xpose.msra.mxu0 0
    %2896 = vmatprep.subr.bf16.mxu0 0
    %2897 = vmatpush1.bf16.xpose.msra.mxu0 0
    %2898 = vmatprep.subr.bf16.mxu0 0
    %2899 = vmatpush1.bf16.xpose.msra.mxu0 0
    %2900 = vmatprep.subr.bf16.mxu0 0
    %2901 = vmatpush1.bf16.xpose.msra.mxu0 0
    %2902 = vmatprep.subr.bf16.mxu0 0
    %2903 = vmatpush1.bf16.xpose.msra.mxu0 0
    %2904 = vmatprep.subr.bf16.mxu0 0
    %2905 = vmatpush1.bf16.xpose.msra.mxu0 %v2888
    %2906 = vmatprep.subr.bf16.mxu0 0
    %2907 = vmatpush2.bf16.xpose.msra.mxu0 0
    %2908 = vmatprep.subr.bf16.mxu0 0
    %2909 = vmatpush2.bf16.xpose.msra.mxu0 0
    %2910 = vmatprep.subr.bf16.mxu0 0
    %2911 = vmatpush2.bf16.xpose.msra.mxu0 0
    %2912 = vmatprep.subr.bf16.mxu0 0
    %2913 = vmatpush2.bf16.xpose.msra.mxu0 0
    %2914 = vmatprep.subr.bf16.mxu0 0
    %2915 = vmatpush2.bf16.xpose.msra.mxu0 0
    %2916 = vmatprep.subr.bf16.mxu0 0
    %2917 = vmatpush2.bf16.xpose.msra.mxu0 0
    %2918 = vmatprep.subr.bf16.mxu0 0
    %2919 = vmatpush2.bf16.xpose.msra.mxu0 0
    %2920 = vmatprep.subr.bf16.mxu0 0
    %2921 = vmatpush2.bf16.xpose.msra.mxu0 0
    %2922 = vmatprep.mubr.bf16.mxu0 0
    %2923 = vmatmul.mubr.bf16.gmra.mxu0 %v2885
    %v2924 = vpop.f32.mrf.mxu0
    %v2925 = vadd.f32 %v62, %v2924
    %v2926 = vpop.f32.mrf.mxu0
    %v2927 = vpop.f32.mrf.mxu0
    %v2928 = vadd.f32 %v63, %v2927
    %v2929 = vpop.f32.mrf.mxu0
    %2930 = vdwg.mxu0
    %v2931 = vsel %vm508, %v2775, -inf
    %2932 = vmax.xlane.f32.xlu0 %v2931
    %v2933 = vpop.xlane.xlu0 %2932
    %v2934 = vsel %vm508, %v2778, -inf
    %2935 = vmax.xlane.f32.xlu0 %v2934
    %v2936 = vpop.xlane.xlu0 %2935
    %v2937 = vsel %vm508, %v2825, -inf
    %2938 = vmax.xlane.f32.xlu0 %v2937
    %v2939 = vpop.xlane.xlu0 %2938
    %v2940 = vsel %vm508, %v2828, -inf
    %2941 = vmax.xlane.f32.xlu0 %v2940
    %v2942 = vpop.xlane.xlu0 %2941
    %v2943 = vsel %vm508, %v2875, -inf
    %2944 = vmax.xlane.f32.xlu0 %v2943
    %v2945 = vpop.xlane.xlu0 %2944
    %v2946 = vsel %vm508, %v2878, -inf
    %2947 = vmax.xlane.f32.xlu0 %v2946
    %v2948 = vpop.xlane.xlu0 %2947
    %v2949 = vsel %vm508, %v2925, -inf
    %2950 = vmax.xlane.f32.xlu0 %v2949
    %v2951 = vpop.xlane.xlu0 %2950
    %v2952 = vsel %vm508, %v2928, -inf
    %2953 = vmax.xlane.f32.xlu0 %v2952
    %v2954 = vpop.xlane.xlu0 %2953
    %v2955 = vsub.f32 %v2775, %v2933
    %v2956 = vsub.f32 %v2778, %v2936
    %v2957 = vsub.f32 %v2825, %v2939
    %v2958 = vsub.f32 %v2828, %v2942
    %v2959 = vsub.f32 %v2875, %v2945
    %v2960 = vsub.f32 %v2878, %v2948
    %v2961 = vsub.f32 %v2925, %v2951
    %v2962 = vsub.f32 %v2928, %v2954
    %v2963 = vmul.f32 %v2955, 1.442695
    %v2964 = vpow.pop %v2963
    %v2965 = vmul.f32 %v2956, 1.442695
    %v2966 = vpow.pop %v2965
    %v2967 = vmul.f32 %v2957, 1.442695
    %v2968 = vpow.pop %v2967
    %v2969 = vmul.f32 %v2958, 1.442695
    %v2970 = vpow.pop %v2969
    %v2971 = vmul.f32 %v2959, 1.442695
    %v2972 = vpow.pop %v2971
    %v2973 = vmul.f32 %v2960, 1.442695
    %v2974 = vpow.pop %v2973
    %v2975 = vmul.f32 %v2961, 1.442695
    %v2976 = vpow.pop %v2975
    %v2977 = vmul.f32 %v2962, 1.442695
    %v2978 = vpow.pop %v2977
    %v2979 = vsel %vm508, %v2964, 0.0
    %2980 = vadd.xlane.f32.xlu0 %v2979
    %v2981 = vpop.xlane.xlu0 %2980
    %v2982 = vsel %vm508, %v2966, 0.0
    %2983 = vadd.xlane.f32.xlu0 %v2982
    %v2984 = vpop.xlane.xlu0 %2983
    %v2985 = vsel %vm508, %v2968, 0.0
    %2986 = vadd.xlane.f32.xlu0 %v2985
    %v2987 = vpop.xlane.xlu0 %2986
    %v2988 = vsel %vm508, %v2970, 0.0
    %2989 = vadd.xlane.f32.xlu0 %v2988
    %v2990 = vpop.xlane.xlu0 %2989
    %v2991 = vsel %vm508, %v2972, 0.0
    %2992 = vadd.xlane.f32.xlu0 %v2991
    %v2993 = vpop.xlane.xlu0 %2992
    %v2994 = vsel %vm508, %v2974, 0.0
    %2995 = vadd.xlane.f32.xlu0 %v2994
    %v2996 = vpop.xlane.xlu0 %2995
    %v2997 = vsel %vm508, %v2976, 0.0
    %2998 = vadd.xlane.f32.xlu0 %v2997
    %v2999 = vpop.xlane.xlu0 %2998
    %v3000 = vsel %vm508, %v2978, 0.0
    %3001 = vadd.xlane.f32.xlu0 %v3000
    %v3002 = vpop.xlane.xlu0 %3001
    %v3003 = vrcp.pop %v2981
    %v3004 = vrcp.pop %v2984
    %v3005 = vrcp.pop %v2987
    %v3006 = vrcp.pop %v2990
    %v3007 = vrcp.pop %v2993
    %v3008 = vrcp.pop %v2996
    %v3009 = vrcp.pop %v2999
    %v3010 = vrcp.pop %v3002
    %v3011 = vmul.f32 %v2964, %v3003
    %v3012 = vmul.f32 %v2966, %v3004
    %v3013 = vmul.f32 %v2968, %v3005
    %v3014 = vmul.f32 %v2970, %v3006
    %v3015 = vmul.f32 %v2972, %v3007
    %v3016 = vmul.f32 %v2974, %v3008
    %v3017 = vmul.f32 %v2976, %v3009
    %v3018 = vmul.f32 %v2978, %v3010
    %v3019 = vpack.c.bf16 %v3012, %v3011
    %v3020 = vpack.c.bf16 %v3014, %v3013
    %v3021 = vpack.c.bf16 %v3016, %v3015
    %v3022 = vpack.c.bf16 %v3018, %v3017
    %3023 = vrot.lane.b32.xlu0 %v2727, 112
    %v3024 = vpop.permute.xlu0 %3023
    %v3027 = vsel %vm508, %v3019, 0
    %3029 = vmatprep.subr.bf16.mxu0 0
    %3030 = vmatpush1.bf16.msra.mxu0 0
    %3031 = vmatprep.subr.bf16.mxu0 0
    %3032 = vmatpush1.bf16.msra.mxu0 0
    %3033 = vmatprep.subr.bf16.mxu0 0
    %3034 = vmatpush1.bf16.msra.mxu0 0
    %3035 = vmatprep.subr.bf16.mxu0 0
    %3036 = vmatpush1.bf16.msra.mxu0 0
    %3037 = vmatprep.subr.bf16.mxu0 0
    %3038 = vmatpush1.bf16.msra.mxu0 0
    %3039 = vmatprep.subr.bf16.mxu0 0
    %3040 = vmatpush1.bf16.msra.mxu0 0
    %3041 = vmatprep.subr.bf16.mxu0 0
    %3042 = vmatpush1.bf16.msra.mxu0 0
    %3043 = vmatprep.subr.bf16.mxu0 0
    %3044 = vmatpush1.bf16.msra.mxu0 %v3024
    %3045 = vmatprep.subr.bf16.mxu0 0
    %3046 = vmatpush2.bf16.msra.mxu0 0
    %3047 = vmatprep.subr.bf16.mxu0 0
    %3048 = vmatpush2.bf16.msra.mxu0 0
    %3049 = vmatprep.subr.bf16.mxu0 0
    %3050 = vmatpush2.bf16.msra.mxu0 0
    %3051 = vmatprep.subr.bf16.mxu0 0
    %3052 = vmatpush2.bf16.msra.mxu0 0
    %3053 = vmatprep.subr.bf16.mxu0 0
    %3054 = vmatpush2.bf16.msra.mxu0 0
    %3055 = vmatprep.subr.bf16.mxu0 0
    %3056 = vmatpush2.bf16.msra.mxu0 0
    %3057 = vmatprep.subr.bf16.mxu0 0
    %3058 = vmatpush2.bf16.msra.mxu0 0
    %3059 = vmatprep.subr.bf16.mxu0 0
    %3060 = vmatpush2.bf16.msra.mxu0 0
    %3061 = vmatprep.mubr.bf16.mxu0 0
    %3062 = vmatmul.mubr.bf16.gmra.mxu0 %v3027
    %v3063 = vpop.f32.mrf.mxu0
    %v3064 = vadd.f32 0.0, %v3063
    %v3065 = vpop.f32.mrf.mxu0
    %v3066 = vpop.f32.mrf.mxu0
    %v3067 = vadd.f32 0.0, %v3066
    %v3068 = vpop.f32.mrf.mxu0
    %3069 = vdwg.mxu0
    %3070 = vrot.lane.b32.xlu0 %v2728, 112
    %v3071 = vpop.permute.xlu0 %3070
    %v3074 = vsel %vm508, %v3020, 0
    %3076 = vmatprep.subr.bf16.mxu0 0
    %3077 = vmatpush1.bf16.msra.mxu0 0
    %3078 = vmatprep.subr.bf16.mxu0 0
    %3079 = vmatpush1.bf16.msra.mxu0 0
    %3080 = vmatprep.subr.bf16.mxu0 0
    %3081 = vmatpush1.bf16.msra.mxu0 0
    %3082 = vmatprep.subr.bf16.mxu0 0
    %3083 = vmatpush1.bf16.msra.mxu0 0
    %3084 = vmatprep.subr.bf16.mxu0 0
    %3085 = vmatpush1.bf16.msra.mxu0 0
    %3086 = vmatprep.subr.bf16.mxu0 0
    %3087 = vmatpush1.bf16.msra.mxu0 0
    %3088 = vmatprep.subr.bf16.mxu0 0
    %3089 = vmatpush1.bf16.msra.mxu0 0
    %3090 = vmatprep.subr.bf16.mxu0 0
    %3091 = vmatpush1.bf16.msra.mxu0 %v3071
    %3092 = vmatprep.subr.bf16.mxu0 0
    %3093 = vmatpush2.bf16.msra.mxu0 0
    %3094 = vmatprep.subr.bf16.mxu0 0
    %3095 = vmatpush2.bf16.msra.mxu0 0
    %3096 = vmatprep.subr.bf16.mxu0 0
    %3097 = vmatpush2.bf16.msra.mxu0 0
    %3098 = vmatprep.subr.bf16.mxu0 0
    %3099 = vmatpush2.bf16.msra.mxu0 0
    %3100 = vmatprep.subr.bf16.mxu0 0
    %3101 = vmatpush2.bf16.msra.mxu0 0
    %3102 = vmatprep.subr.bf16.mxu0 0
    %3103 = vmatpush2.bf16.msra.mxu0 0
    %3104 = vmatprep.subr.bf16.mxu0 0
    %3105 = vmatpush2.bf16.msra.mxu0 0
    %3106 = vmatprep.subr.bf16.mxu0 0
    %3107 = vmatpush2.bf16.msra.mxu0 0
    %3108 = vmatprep.mubr.bf16.mxu0 0
    %3109 = vmatmul.mubr.bf16.gmra.mxu0 %v3074
    %v3110 = vpop.f32.mrf.mxu0
    %v3111 = vadd.f32 0.0, %v3110
    %v3112 = vpop.f32.mrf.mxu0
    %v3113 = vpop.f32.mrf.mxu0
    %v3114 = vadd.f32 0.0, %v3113
    %v3115 = vpop.f32.mrf.mxu0
    %3116 = vdwg.mxu0
    %3117 = vrot.lane.b32.xlu0 %v2729, 112
    %v3118 = vpop.permute.xlu0 %3117
    %v3121 = vsel %vm508, %v3021, 0
    %3123 = vmatprep.subr.bf16.mxu0 0
    %3124 = vmatpush1.bf16.msra.mxu0 0
    %3125 = vmatprep.subr.bf16.mxu0 0
    %3126 = vmatpush1.bf16.msra.mxu0 0
    %3127 = vmatprep.subr.bf16.mxu0 0
    %3128 = vmatpush1.bf16.msra.mxu0 0
    %3129 = vmatprep.subr.bf16.mxu0 0
    %3130 = vmatpush1.bf16.msra.mxu0 0
    %3131 = vmatprep.subr.bf16.mxu0 0
    %3132 = vmatpush1.bf16.msra.mxu0 0
    %3133 = vmatprep.subr.bf16.mxu0 0
    %3134 = vmatpush1.bf16.msra.mxu0 0
    %3135 = vmatprep.subr.bf16.mxu0 0
    %3136 = vmatpush1.bf16.msra.mxu0 0
    %3137 = vmatprep.subr.bf16.mxu0 0
    %3138 = vmatpush1.bf16.msra.mxu0 %v3118
    %3139 = vmatprep.subr.bf16.mxu0 0
    %3140 = vmatpush2.bf16.msra.mxu0 0
    %3141 = vmatprep.subr.bf16.mxu0 0
    %3142 = vmatpush2.bf16.msra.mxu0 0
    %3143 = vmatprep.subr.bf16.mxu0 0
    %3144 = vmatpush2.bf16.msra.mxu0 0
    %3145 = vmatprep.subr.bf16.mxu0 0
    %3146 = vmatpush2.bf16.msra.mxu0 0
    %3147 = vmatprep.subr.bf16.mxu0 0
    %3148 = vmatpush2.bf16.msra.mxu0 0
    %3149 = vmatprep.subr.bf16.mxu0 0
    %3150 = vmatpush2.bf16.msra.mxu0 0
    %3151 = vmatprep.subr.bf16.mxu0 0
    %3152 = vmatpush2.bf16.msra.mxu0 0
    %3153 = vmatprep.subr.bf16.mxu0 0
    %3154 = vmatpush2.bf16.msra.mxu0 0
    %3155 = vmatprep.mubr.bf16.mxu0 0
    %3156 = vmatmul.mubr.bf16.gmra.mxu0 %v3121
    %v3157 = vpop.f32.mrf.mxu0
    %v3158 = vadd.f32 0.0, %v3157
    %v3159 = vpop.f32.mrf.mxu0
    %v3160 = vpop.f32.mrf.mxu0
    %v3161 = vadd.f32 0.0, %v3160
    %v3162 = vpop.f32.mrf.mxu0
    %3163 = vdwg.mxu0
    %3164 = vrot.lane.b32.xlu0 %v2730, 112
    %v3165 = vpop.permute.xlu0 %3164
    %v3168 = vsel %vm508, %v3022, 0
    %3170 = vmatprep.subr.bf16.mxu0 0
    %3171 = vmatpush1.bf16.msra.mxu0 0
    %3172 = vmatprep.subr.bf16.mxu0 0
    %3173 = vmatpush1.bf16.msra.mxu0 0
    %3174 = vmatprep.subr.bf16.mxu0 0
    %3175 = vmatpush1.bf16.msra.mxu0 0
    %3176 = vmatprep.subr.bf16.mxu0 0
    %3177 = vmatpush1.bf16.msra.mxu0 0
    %3178 = vmatprep.subr.bf16.mxu0 0
    %3179 = vmatpush1.bf16.msra.mxu0 0
    %3180 = vmatprep.subr.bf16.mxu0 0
    %3181 = vmatpush1.bf16.msra.mxu0 0
    %3182 = vmatprep.subr.bf16.mxu0 0
    %3183 = vmatpush1.bf16.msra.mxu0 0
    %3184 = vmatprep.subr.bf16.mxu0 0
    %3185 = vmatpush1.bf16.msra.mxu0 %v3165
    %3186 = vmatprep.subr.bf16.mxu0 0
    %3187 = vmatpush2.bf16.msra.mxu0 0
    %3188 = vmatprep.subr.bf16.mxu0 0
    %3189 = vmatpush2.bf16.msra.mxu0 0
    %3190 = vmatprep.subr.bf16.mxu0 0
    %3191 = vmatpush2.bf16.msra.mxu0 0
    %3192 = vmatprep.subr.bf16.mxu0 0
    %3193 = vmatpush2.bf16.msra.mxu0 0
    %3194 = vmatprep.subr.bf16.mxu0 0
    %3195 = vmatpush2.bf16.msra.mxu0 0
    %3196 = vmatprep.subr.bf16.mxu0 0
    %3197 = vmatpush2.bf16.msra.mxu0 0
    %3198 = vmatprep.subr.bf16.mxu0 0
    %3199 = vmatpush2.bf16.msra.mxu0 0
    %3200 = vmatprep.subr.bf16.mxu0 0
    %3201 = vmatpush2.bf16.msra.mxu0 0
    %3202 = vmatprep.mubr.bf16.mxu0 0
    %3203 = vmatmul.mubr.bf16.gmra.mxu0 %v3168
    %v3204 = vpop.f32.mrf.mxu0
    %v3205 = vadd.f32 0.0, %v3204
    %v3206 = vpop.f32.mrf.mxu0
    %v3207 = vpop.f32.mrf.mxu0
    %v3208 = vadd.f32 0.0, %v3207
    %v3209 = vpop.f32.mrf.mxu0
    %3210 = vdwg.mxu0
    %v3211 = vpack.c.bf16 %v3067, %v3064
    %v3212 = vpack.c.bf16 %v3114, %v3111
    %v3213 = vpack.c.bf16 %v3161, %v3158
    %v3214 = vpack.c.bf16 %v3208, %v3205
    %v3216 = vsel %vm310, %v3211, 0
    %v3219 = vsel %vm796, %v2503, 0
    %3221 = vmatprep.subr.bf16.mxu0 0
    %3222 = vmatpush1.bf16.msra.mxu0 0
    %3223 = vmatprep.subr.bf16.mxu0 0
    %3224 = vmatpush1.bf16.msra.mxu0 0
    %3225 = vmatprep.subr.bf16.mxu0 0
    %3226 = vmatpush1.bf16.msra.mxu0 0
    %3227 = vmatprep.subr.bf16.mxu0 0
    %3228 = vmatpush1.bf16.msra.mxu0 0
    %3229 = vmatprep.subr.bf16.mxu0 0
    %3230 = vmatpush1.bf16.msra.mxu0 0
    %3231 = vmatprep.subr.bf16.mxu0 0
    %3232 = vmatpush1.bf16.msra.mxu0 0
    %3233 = vmatprep.subr.bf16.mxu0 0
    %3234 = vmatpush1.bf16.msra.mxu0 0
    %3235 = vmatprep.subr.bf16.mxu0 0
    %3236 = vmatpush1.bf16.msra.mxu0 %v3219
    %3237 = vmatprep.subr.bf16.mxu0 0
    %3238 = vmatpush2.bf16.msra.mxu0 0
    %3239 = vmatprep.subr.bf16.mxu0 0
    %3240 = vmatpush2.bf16.msra.mxu0 0
    %3241 = vmatprep.subr.bf16.mxu0 0
    %3242 = vmatpush2.bf16.msra.mxu0 0
    %3243 = vmatprep.subr.bf16.mxu0 0
    %3244 = vmatpush2.bf16.msra.mxu0 0
    %3245 = vmatprep.subr.bf16.mxu0 0
    %3246 = vmatpush2.bf16.msra.mxu0 0
    %3247 = vmatprep.subr.bf16.mxu0 0
    %3248 = vmatpush2.bf16.msra.mxu0 0
    %3249 = vmatprep.subr.bf16.mxu0 0
    %3250 = vmatpush2.bf16.msra.mxu0 0
    %3251 = vmatprep.subr.bf16.mxu0 0
    %3252 = vmatpush2.bf16.msra.mxu0 0
    %3253 = vmatprep.mubr.bf16.mxu0 0
    %3254 = vmatmul.mubr.bf16.gmra.mxu0 %v3216
    %v3255 = vpop.f32.mrf.mxu0
    %v3256 = vadd.f32 0.0, %v3255
    %v3257 = vpop.f32.mrf.mxu0
    %v3258 = vpop.f32.mrf.mxu0
    %v3259 = vadd.f32 0.0, %v3258
    %v3260 = vpop.f32.mrf.mxu0
    %3261 = vdwg.mxu0
    %v3263 = vsel %vm310, %v3212, 0
    %v3266 = vsel %vm796, %v2504, 0
    %3268 = vmatprep.subr.bf16.mxu0 0
    %3269 = vmatpush1.bf16.msra.mxu0 0
    %3270 = vmatprep.subr.bf16.mxu0 0
    %3271 = vmatpush1.bf16.msra.mxu0 0
    %3272 = vmatprep.subr.bf16.mxu0 0
    %3273 = vmatpush1.bf16.msra.mxu0 0
    %3274 = vmatprep.subr.bf16.mxu0 0
    %3275 = vmatpush1.bf16.msra.mxu0 0
    %3276 = vmatprep.subr.bf16.mxu0 0
    %3277 = vmatpush1.bf16.msra.mxu0 0
    %3278 = vmatprep.subr.bf16.mxu0 0
    %3279 = vmatpush1.bf16.msra.mxu0 0
    %3280 = vmatprep.subr.bf16.mxu0 0
    %3281 = vmatpush1.bf16.msra.mxu0 0
    %3282 = vmatprep.subr.bf16.mxu0 0
    %3283 = vmatpush1.bf16.msra.mxu0 %v3266
    %3284 = vmatprep.subr.bf16.mxu0 0
    %3285 = vmatpush2.bf16.msra.mxu0 0
    %3286 = vmatprep.subr.bf16.mxu0 0
    %3287 = vmatpush2.bf16.msra.mxu0 0
    %3288 = vmatprep.subr.bf16.mxu0 0
    %3289 = vmatpush2.bf16.msra.mxu0 0
    %3290 = vmatprep.subr.bf16.mxu0 0
    %3291 = vmatpush2.bf16.msra.mxu0 0
    %3292 = vmatprep.subr.bf16.mxu0 0
    %3293 = vmatpush2.bf16.msra.mxu0 0
    %3294 = vmatprep.subr.bf16.mxu0 0
    %3295 = vmatpush2.bf16.msra.mxu0 0
    %3296 = vmatprep.subr.bf16.mxu0 0
    %3297 = vmatpush2.bf16.msra.mxu0 0
    %3298 = vmatprep.subr.bf16.mxu0 0
    %3299 = vmatpush2.bf16.msra.mxu0 0
    %3300 = vmatprep.mubr.bf16.mxu0 0
    %3301 = vmatmul.mubr.bf16.gmra.mxu0 %v3263
    %v3302 = vpop.f32.mrf.mxu0
    %v3303 = vadd.f32 0.0, %v3302
    %v3304 = vpop.f32.mrf.mxu0
    %v3305 = vpop.f32.mrf.mxu0
    %v3306 = vadd.f32 0.0, %v3305
    %v3307 = vpop.f32.mrf.mxu0
    %3308 = vdwg.mxu0
    %v3310 = vsel %vm310, %v3213, 0
    %v3313 = vsel %vm796, %v2505, 0
    %3315 = vmatprep.subr.bf16.mxu0 0
    %3316 = vmatpush1.bf16.msra.mxu0 0
    %3317 = vmatprep.subr.bf16.mxu0 0
    %3318 = vmatpush1.bf16.msra.mxu0 0
    %3319 = vmatprep.subr.bf16.mxu0 0
    %3320 = vmatpush1.bf16.msra.mxu0 0
    %3321 = vmatprep.subr.bf16.mxu0 0
    %3322 = vmatpush1.bf16.msra.mxu0 0
    %3323 = vmatprep.subr.bf16.mxu0 0
    %3324 = vmatpush1.bf16.msra.mxu0 0
    %3325 = vmatprep.subr.bf16.mxu0 0
    %3326 = vmatpush1.bf16.msra.mxu0 0
    %3327 = vmatprep.subr.bf16.mxu0 0
    %3328 = vmatpush1.bf16.msra.mxu0 0
    %3329 = vmatprep.subr.bf16.mxu0 0
    %3330 = vmatpush1.bf16.msra.mxu0 %v3313
    %3331 = vmatprep.subr.bf16.mxu0 0
    %3332 = vmatpush2.bf16.msra.mxu0 0
    %3333 = vmatprep.subr.bf16.mxu0 0
    %3334 = vmatpush2.bf16.msra.mxu0 0
    %3335 = vmatprep.subr.bf16.mxu0 0
    %3336 = vmatpush2.bf16.msra.mxu0 0
    %3337 = vmatprep.subr.bf16.mxu0 0
    %3338 = vmatpush2.bf16.msra.mxu0 0
    %3339 = vmatprep.subr.bf16.mxu0 0
    %3340 = vmatpush2.bf16.msra.mxu0 0
    %3341 = vmatprep.subr.bf16.mxu0 0
    %3342 = vmatpush2.bf16.msra.mxu0 0
    %3343 = vmatprep.subr.bf16.mxu0 0
    %3344 = vmatpush2.bf16.msra.mxu0 0
    %3345 = vmatprep.subr.bf16.mxu0 0
    %3346 = vmatpush2.bf16.msra.mxu0 0
    %3347 = vmatprep.mubr.bf16.mxu0 0
    %3348 = vmatmul.mubr.bf16.gmra.mxu0 %v3310
    %v3349 = vpop.f32.mrf.mxu0
    %v3350 = vadd.f32 0.0, %v3349
    %v3351 = vpop.f32.mrf.mxu0
    %v3352 = vpop.f32.mrf.mxu0
    %v3353 = vadd.f32 0.0, %v3352
    %v3354 = vpop.f32.mrf.mxu0
    %3355 = vdwg.mxu0
    %v3357 = vsel %vm310, %v3214, 0
    %v3360 = vsel %vm796, %v2506, 0
    %3362 = vmatprep.subr.bf16.mxu0 0
    %3363 = vmatpush1.bf16.msra.mxu0 0
    %3364 = vmatprep.subr.bf16.mxu0 0
    %3365 = vmatpush1.bf16.msra.mxu0 0
    %3366 = vmatprep.subr.bf16.mxu0 0
    %3367 = vmatpush1.bf16.msra.mxu0 0
    %3368 = vmatprep.subr.bf16.mxu0 0
    %3369 = vmatpush1.bf16.msra.mxu0 0
    %3370 = vmatprep.subr.bf16.mxu0 0
    %3371 = vmatpush1.bf16.msra.mxu0 0
    %3372 = vmatprep.subr.bf16.mxu0 0
    %3373 = vmatpush1.bf16.msra.mxu0 0
    %3374 = vmatprep.subr.bf16.mxu0 0
    %3375 = vmatpush1.bf16.msra.mxu0 0
    %3376 = vmatprep.subr.bf16.mxu0 0
    %3377 = vmatpush1.bf16.msra.mxu0 %v3360
    %3378 = vmatprep.subr.bf16.mxu0 0
    %3379 = vmatpush2.bf16.msra.mxu0 0
    %3380 = vmatprep.subr.bf16.mxu0 0
    %3381 = vmatpush2.bf16.msra.mxu0 0
    %3382 = vmatprep.subr.bf16.mxu0 0
    %3383 = vmatpush2.bf16.msra.mxu0 0
    %3384 = vmatprep.subr.bf16.mxu0 0
    %3385 = vmatpush2.bf16.msra.mxu0 0
    %3386 = vmatprep.subr.bf16.mxu0 0
    %3387 = vmatpush2.bf16.msra.mxu0 0
    %3388 = vmatprep.subr.bf16.mxu0 0
    %3389 = vmatpush2.bf16.msra.mxu0 0
    %3390 = vmatprep.subr.bf16.mxu0 0
    %3391 = vmatpush2.bf16.msra.mxu0 0
    %3392 = vmatprep.subr.bf16.mxu0 0
    %3393 = vmatpush2.bf16.msra.mxu0 0
    %3394 = vmatprep.mubr.bf16.mxu0 0
    %3395 = vmatmul.mubr.bf16.gmra.mxu0 %v3357
    %v3396 = vpop.f32.mrf.mxu0
    %v3397 = vadd.f32 0.0, %v3396
    %v3398 = vpop.f32.mrf.mxu0
    %v3399 = vpop.f32.mrf.mxu0
    %v3400 = vadd.f32 0.0, %v3399
    %v3401 = vpop.f32.mrf.mxu0
    %3402 = vdwg.mxu0
    %v3403 = vsel %vm99, %v3256, 0.0
    %v3404 = vsel %vm99, %v3303, 0.0
    %v3405 = vadd.f32 %v3403, %v3404
    %v3406 = vsel %vm99, %v3350, 0.0
    %v3407 = vadd.f32 %v3405, %v3406
    %v3408 = vsel %vm99, %v3397, 0.0
    %v3409 = vadd.f32 %v3407, %v3408
    %v3410 = vsel %vm99, %v3259, 0.0
    %v3411 = vsel %vm99, %v3306, 0.0
    %v3412 = vadd.f32 %v3410, %v3411
    %v3413 = vsel %vm99, %v3353, 0.0
    %v3414 = vadd.f32 %v3412, %v3413
    %v3415 = vsel %vm99, %v3400, 0.0
    %v3416 = vadd.f32 %v3414, %v3415
    %v3417 = vlaneseq
    %v3418 = vshrl.u32 %v3417, 7
    %v3419 = vsub.s32 0, %v3418
    %v3420 = vrot.slane %v2508, %v3419
    %v3421 = vadd.f32 %v3409, %v3420
    %v3422 = vadd.f32 %v3416, %v3420
    %v3423 = vadd.f32 %v3421, %v2483
    %v3424 = vadd.f32 %v3422, %v2484
    %v3425 = vsel %vm99, %v3423, 0.0
    %3426 = vadd.xlane.f32.xlu0 %v3425
    %v3427 = vpop.xlane.xlu0 %3426
    %v3428 = vsel %vm99, %v3424, 0.0
    %3429 = vadd.xlane.f32.xlu0 %v3428
    %v3430 = vpop.xlane.xlu0 %3429
    %v3431 = vmul.f32 %v3427, %v1010
    %v3432 = vmul.f32 %v3430, %v1010
    %v3433 = vmul.f32 %v3423, %v3423
    %v3434 = vmul.f32 %v3424, %v3424
    %v3435 = vsel %vm99, %v3433, 0.0
    %3436 = vadd.xlane.f32.xlu0 %v3435
    %v3437 = vpop.xlane.xlu0 %3436
    %v3438 = vsel %vm99, %v3434, 0.0
    %3439 = vadd.xlane.f32.xlu0 %v3438
    %v3440 = vpop.xlane.xlu0 %3439
    %v3441 = vmul.f32 %v3437, %v1010
    %v3442 = vmul.f32 %v3440, %v1010
    %v3443 = vmul.f32 %v3431, %v3431
    %v3444 = vmul.f32 %v3432, %v3432
    %v3445 = vsub.f32 %v3441, %v3443
    %v3446 = vsub.f32 %v3442, %v3444
    %v3447 = vmax.f32 %v3445, 0.0
    %v3448 = vmax.f32 %v3446, 0.0
    %v3449 = vsub.f32 %v3423, %v3431
    %v3450 = vsub.f32 %v3424, %v3432
    %v3451 = vadd.f32 %v3447, 1e-05
    %v3452 = vadd.f32 %v3448, 1e-05
    %v3453 = vrsqrt.pop %v3451
    %v3454 = vrsqrt.pop %v3452
    %v3455 = vmul.f32 %v3449, %v3453
    %v3456 = vmul.f32 %v3450, %v3454
    %v3457 = vlaneseq
    %v3458 = vshrl.u32 %v3457, 7
    %v3459 = vsub.s32 1, %v3458
    %v3460 = vrot.slane %v2508, %v3459
    %v3461 = vmul.f32 %v3455, %v3460
    %v3462 = vmul.f32 %v3456, %v3460
    %v3463 = vlaneseq
    %v3464 = vshrl.u32 %v3463, 7
    %v3465 = vsub.s32 2, %v3464
    %v3466 = vrot.slane %v2508, %v3465
    %v3467 = vadd.f32 %v3461, %v3466
    %v3468 = vadd.f32 %v3462, %v3466
    %v3469 = vpack.c.bf16 %v3468, %v3467
    %s3470 = scalar_lea.vmem %s4, 32
    %v3471 = vld [vmem:[%s3470] sm:$0xf]
    %v3472 = vld [vmem:[%s3470 + $0x4] sm:$0xf]
    %v3473 = vld [vmem:[%s3470 + $0x8] sm:$0xf]
    %v3474 = vld [vmem:[%s3470 + $0xc] sm:$0xf]
    %v3476 = vlaneseq
    %v3477 = vshrl.u32 %v3476, 7
    %v3478 = vsub.s32 0, %v3477
    %v3479 = vrot.slane %v2510, %v3478
    %v3485 = vunpack.c.l.b16 %v3471
    %v3486 = vunpack.c.l.b16 %v3472
    %v3487 = vunpack.c.l.b16 %v3473
    %v3488 = vunpack.c.l.b16 %v3474
    %v3489 = vpack.c.b16 %v3486, %v3485
    %v3490 = vpack.c.b16 %v3488, %v3487
    %v3494 = vsel %vm99, %v3469, 0
    %3496 = vmatprep.subr.bf16.mxu0 0
    %3497 = vmatpush1.bf16.msra.mxu0 0
    %3498 = vmatprep.subr.bf16.mxu0 0
    %3499 = vmatpush1.bf16.msra.mxu0 0
    %3500 = vmatprep.subr.bf16.mxu0 0
    %3501 = vmatpush1.bf16.msra.mxu0 0
    %3502 = vmatprep.subr.bf16.mxu0 0
    %3503 = vmatpush1.bf16.msra.mxu0 0
    %3504 = vmatprep.subr.bf16.mxu0 0
    %3505 = vmatpush1.bf16.msra.mxu0 0
    %3506 = vmatprep.subr.bf16.mxu0 0
    %3507 = vmatpush1.bf16.msra.mxu0 0
    %3508 = vmatprep.subr.bf16.mxu0 0
    %3509 = vmatpush1.bf16.msra.mxu0 %v3490
    %3510 = vmatprep.subr.bf16.mxu0 0
    %3511 = vmatpush1.bf16.msra.mxu0 %v3489
    %3512 = vmatprep.subr.bf16.mxu0 0
    %3513 = vmatpush2.bf16.msra.mxu0 0
    %3514 = vmatprep.subr.bf16.mxu0 0
    %3515 = vmatpush2.bf16.msra.mxu0 0
    %3516 = vmatprep.subr.bf16.mxu0 0
    %3517 = vmatpush2.bf16.msra.mxu0 0
    %3518 = vmatprep.subr.bf16.mxu0 0
    %3519 = vmatpush2.bf16.msra.mxu0 0
    %3520 = vmatprep.subr.bf16.mxu0 0
    %3521 = vmatpush2.bf16.msra.mxu0 0
    %3522 = vmatprep.subr.bf16.mxu0 0
    %3523 = vmatpush2.bf16.msra.mxu0 0
    %3524 = vmatprep.subr.bf16.mxu0 0
    %3525 = vmatpush2.bf16.msra.mxu0 0
    %3526 = vmatprep.subr.bf16.mxu0 0
    %3527 = vmatpush2.bf16.msra.mxu0 0
    %3528 = vmatprep.mubr.bf16.mxu0 0
    %3529 = vmatmul.mubr.bf16.gmra.mxu0 %v3494
    %v3530 = vpop.f32.mrf.mxu0
    %v3531 = vadd.f32 %v3479, %v3530
    %v3532 = vpop.f32.mrf.mxu0
    %v3533 = vpop.f32.mrf.mxu0
    %v3534 = vadd.f32 %v3479, %v3533
    %v3535 = vpop.f32.mrf.mxu0
    %3536 = vdwg.mxu0
    %v3537 = vmax.f32 %v3531, 0.0
    %v3538 = vmax.f32 %v3534, 0.0
    %v3539 = vpack.c.bf16 %v3538, %v3537
    %s3540 = scalar_lea.vmem %s5, 128
    %v3541 = vld [vmem:[%s3540] sm:$0xf]
    %v3542 = vld [vmem:[%s3540 + $0x4] sm:$0xf]
    %v3543 = vld [vmem:[%s3540 + $0x8] sm:$0xf]
    %v3544 = vld [vmem:[%s3540 + $0xc] sm:$0xf]
    %v3545 = vld [vmem:[%s3540 + $0x10] sm:$0xf]
    %v3546 = vld [vmem:[%s3540 + $0x14] sm:$0xf]
    %v3547 = vld [vmem:[%s3540 + $0x18] sm:$0xf]
    %v3548 = vld [vmem:[%s3540 + $0x1c] sm:$0xf]
    %v3549 = vld [vmem:[%s3540 + $0x20] sm:$0xf]
    %v3550 = vld [vmem:[%s3540 + $0x24] sm:$0xf]
    %v3551 = vld [vmem:[%s3540 + $0x28] sm:$0xf]
    %v3552 = vld [vmem:[%s3540 + $0x2c] sm:$0xf]
    %v3553 = vld [vmem:[%s3540 + $0x30] sm:$0xf]
    %v3554 = vld [vmem:[%s3540 + $0x34] sm:$0xf]
    %v3555 = vld [vmem:[%s3540 + $0x38] sm:$0xf]
    %v3556 = vld [vmem:[%s3540 + $0x3c] sm:$0xf]
    %v3557 = vlaneseq
    %v3558 = vshrl.u32 %v3557, 7
    %v3559 = vsub.s32 5, %v3558
    %v3560 = vrot.slane %v2508, %v3559
    %v3577 = vunpack.c.l.b16 %v3541
    %v3578 = vunpack.c.l.b16 %v3542
    %v3579 = vunpack.c.l.b16 %v3543
    %v3580 = vunpack.c.l.b16 %v3544
    %v3581 = vunpack.c.l.b16 %v3545
    %v3582 = vunpack.c.l.b16 %v3546
    %v3583 = vunpack.c.l.b16 %v3547
    %v3584 = vunpack.c.l.b16 %v3548
    %v3585 = vunpack.c.l.b16 %v3549
    %v3586 = vunpack.c.l.b16 %v3550
    %v3587 = vunpack.c.l.b16 %v3551
    %v3588 = vunpack.c.l.b16 %v3552
    %v3589 = vunpack.c.l.b16 %v3553
    %v3590 = vunpack.c.l.b16 %v3554
    %v3591 = vunpack.c.l.b16 %v3555
    %v3592 = vunpack.c.l.b16 %v3556
    %v3593 = vpack.c.b16 %v3578, %v3577
    %v3594 = vpack.c.b16 %v3580, %v3579
    %v3595 = vpack.c.b16 %v3582, %v3581
    %v3596 = vpack.c.b16 %v3584, %v3583
    %v3597 = vpack.c.b16 %v3586, %v3585
    %v3598 = vpack.c.b16 %v3588, %v3587
    %v3599 = vpack.c.b16 %v3590, %v3589
    %v3600 = vpack.c.b16 %v3592, %v3591
    %3609 = vmatprep.subr.bf16.mxu0 0
    %3610 = vmatpush1.bf16.msra.mxu0 %v3600
    %3611 = vmatprep.subr.bf16.mxu0 0
    %3612 = vmatpush1.bf16.msra.mxu0 %v3599
    %3613 = vmatprep.subr.bf16.mxu0 0
    %3614 = vmatpush1.bf16.msra.mxu0 %v3598
    %3615 = vmatprep.subr.bf16.mxu0 0
    %3616 = vmatpush1.bf16.msra.mxu0 %v3597
    %3617 = vmatprep.subr.bf16.mxu0 0
    %3618 = vmatpush1.bf16.msra.mxu0 %v3596
    %3619 = vmatprep.subr.bf16.mxu0 0
    %3620 = vmatpush1.bf16.msra.mxu0 %v3595
    %3621 = vmatprep.subr.bf16.mxu0 0
    %3622 = vmatpush1.bf16.msra.mxu0 %v3594
    %3623 = vmatprep.subr.bf16.mxu0 0
    %3624 = vmatpush1.bf16.msra.mxu0 %v3593
    %3625 = vmatprep.subr.bf16.mxu0 0
    %3626 = vmatpush2.bf16.msra.mxu0 0
    %3627 = vmatprep.subr.bf16.mxu0 0
    %3628 = vmatpush2.bf16.msra.mxu0 0
    %3629 = vmatprep.subr.bf16.mxu0 0
    %3630 = vmatpush2.bf16.msra.mxu0 0
    %3631 = vmatprep.subr.bf16.mxu0 0
    %3632 = vmatpush2.bf16.msra.mxu0 0
    %3633 = vmatprep.subr.bf16.mxu0 0
    %3634 = vmatpush2.bf16.msra.mxu0 0
    %3635 = vmatprep.subr.bf16.mxu0 0
    %3636 = vmatpush2.bf16.msra.mxu0 0
    %3637 = vmatprep.subr.bf16.mxu0 0
    %3638 = vmatpush2.bf16.msra.mxu0 0
    %3639 = vmatprep.subr.bf16.mxu0 0
    %3640 = vmatpush2.bf16.msra.mxu0 0
    %3641 = vmatprep.mubr.bf16.mxu0 0
    %3642 = vmatmul.mubr.bf16.gmra.mxu0 %v3539
    %v3643 = vpop.f32.mrf.mxu0
    %v3644 = vadd.f32 %v3560, %v3643
    %v3645 = vpop.f32.mrf.mxu0
    %v3646 = vpop.f32.mrf.mxu0
    %v3647 = vadd.f32 %v3560, %v3646
    %v3648 = vpop.f32.mrf.mxu0
    %3649 = vdwg.mxu0
    %v3650 = vadd.f32 %v3644, %v3467
    %v3651 = vadd.f32 %v3647, %v3468
    %v3652 = vsel %vm99, %v3650, 0.0
    %3653 = vadd.xlane.f32.xlu0 %v3652
    %v3654 = vpop.xlane.xlu0 %3653
    %v3655 = vsel %vm99, %v3651, 0.0
    %3656 = vadd.xlane.f32.xlu0 %v3655
    %v3657 = vpop.xlane.xlu0 %3656
    %v3658 = vmul.f32 %v3654, %v1010
    %v3659 = vmul.f32 %v3657, %v1010
    %v3660 = vmul.f32 %v3650, %v3650
    %v3661 = vmul.f32 %v3651, %v3651
    %v3662 = vsel %vm99, %v3660, 0.0
    %3663 = vadd.xlane.f32.xlu0 %v3662
    %v3664 = vpop.xlane.xlu0 %3663
    %v3665 = vsel %vm99, %v3661, 0.0
    %3666 = vadd.xlane.f32.xlu0 %v3665
    %v3667 = vpop.xlane.xlu0 %3666
    %v3668 = vmul.f32 %v3664, %v1010
    %v3669 = vmul.f32 %v3667, %v1010
    %v3670 = vmul.f32 %v3658, %v3658
    %v3671 = vmul.f32 %v3659, %v3659
    %v3672 = vsub.f32 %v3668, %v3670
    %v3673 = vsub.f32 %v3669, %v3671
    %v3674 = vmax.f32 %v3672, 0.0
    %v3675 = vmax.f32 %v3673, 0.0
    %v3676 = vsub.f32 %v3650, %v3658
    %v3677 = vsub.f32 %v3651, %v3659
    %v3678 = vadd.f32 %v3674, 1e-05
    %v3679 = vadd.f32 %v3675, 1e-05
    %v3680 = vrsqrt.pop %v3678
    %v3681 = vrsqrt.pop %v3679
    %v3682 = vmul.f32 %v3676, %v3680
    %v3683 = vmul.f32 %v3677, %v3681
    %v3684 = vlaneseq
    %v3685 = vshrl.u32 %v3684, 7
    %v3686 = vsub.s32 3, %v3685
    %v3687 = vrot.slane %v2508, %v3686
    %v3688 = vmul.f32 %v3682, %v3687
    %v3689 = vmul.f32 %v3683, %v3687
    %v3690 = vlaneseq
    %v3691 = vshrl.u32 %v3690, 7
    %v3692 = vsub.s32 4, %v3691
    %v3693 = vrot.slane %v2508, %v3692
    %v3694 = vadd.f32 %v3688, %v3693
    %v3695 = vadd.f32 %v3689, %v3693
    %3696 = vst.msk [vmem:[#allocation2] sm:$0xff] %vm99, %v3694
    %3697 = vst.msk [vmem:[#allocation2 + $0x8] sm:$0xff] %vm99, %v3695
    // Predicated region
    $region34: #{tpu_custom_call.1} parent=1 // pred_check
      _
    $region35: #{tpu_custom_call.1} parent=1 // pred_check_branch
      %3699 = sbr.rel (0) target = $region37
    $region36: #{tpu_custom_call.1} parent=1 // pred_region
      %s3701 = ssub.s32 256, 256
      %3702 = vsyncadd [#allocation3], %s3701
      %s3703 = sshll.u32 [#allocation2], 4
      %s3704 = int_to_ptr.vmem [resolvable:$true] %s3703
      %3709 = dma.vmem_to_hbm [thread:$0]  %s3704, 256, %s8, [#allocation3], 128, 128, 8
    $region37: #{tpu_custom_call.1} parent=1 // pred_fallthru
      _
    // Predicated region
    $region38: #{tpu_custom_call.1} parent=1 // pred_check
      _
    $region39: #{tpu_custom_call.1} parent=1 // pred_check_branch
      %3711 = sbr.rel (0) target = $region41
    $region40: #{tpu_custom_call.1} parent=1 // pred_region
      %3712 = dma.done [#allocation3], 256
    $region41: #{tpu_custom_call.1} parent=1 // pred_fallthru
      _
    %3713 = vsyncpa [#allocation3], 1

</llo_original>
